<compile_context>
chip_gen: v6e
topology: v6e:2x2x1
jax: 0.10.0
libtpu: 0.0.40
codegen_flags: <defaults>
</compile_context>

<pallas_src>
import functools

import jax
import jax.numpy as jnp
from jax.experimental import pallas as pl
from jax.experimental.pallas import tpu as pltpu


# ----------------------------------------------------------------------------
# Pallas kernels (fused encoder + distance)
# ----------------------------------------------------------------------------

def matchnet_learnt_kernel(
    x1_ref, x2_ref,                 # (TB, F) bf16 flattened inputs
    enc_w_ref, enc_b_ref,           # encoder stand-in: (F, 512) bf16, (1, 512) f32
    w1a_ref, w1b_ref, b1_ref,       # Linear(1024, 512) split for concat; bf16 / f32
    w2_ref, b2_ref,                 # Linear(512, 128), BN1 folded in;   bf16 / f32
    w3_ref, b3_ref,                 # Linear(128, 4) padded to 128 cols, BN2 folded in
    w4v_ref,                        # (1, 128) f32: lanes 0..3 = BN3-folded W4, lane 4 = bias
    o_ref,                          # (TB, 128) f32 lane-dense output
):
    # Encoder stand-in (shared weights): e = x_flat @ enc_w + enc_b
    e1 = jnp.dot(x1_ref[...], enc_w_ref[...],
                 preferred_element_type=jnp.float32) + enc_b_ref[...]
    e2 = jnp.dot(x2_ref[...], enc_w_ref[...],
                 preferred_element_type=jnp.float32) + enc_b_ref[...]
    e1b = e1.astype(jnp.bfloat16)
    e2b = e2.astype(jnp.bfloat16)

    # cat([e1, e2], dim=1) @ W1 == e1 @ W1[:512] + e2 @ W1[512:]; then ReLU.
    h1 = (jnp.dot(e1b, w1a_ref[...], preferred_element_type=jnp.float32)
          + jnp.dot(e2b, w1b_ref[...], preferred_element_type=jnp.float32)
          + b1_ref[...])
    h1 = jnp.maximum(h1, 0.0)

    # Linear(512, 128) with BN1 folded into W2/b2; then ReLU.
    h2 = jnp.dot(h1.astype(jnp.bfloat16), w2_ref[...],
                 preferred_element_type=jnp.float32) + b2_ref[...]
    h2 = jnp.maximum(h2, 0.0)

    # Linear(128, 4) with BN2 folded, N padded to 128 (lane 4 carries a constant 1
    # via its bias so the final bias can ride along the lane-dense weight vector).
    h3 = jnp.dot(h2.astype(jnp.bfloat16), w3_ref[...],
                 preferred_element_type=jnp.float32) + b3_ref[...]
    h3 = jnp.maximum(h3, 0.0)

    # Final Linear(4, 1) + BN3 fold + bias: lane-dense VPU mul + cross-lane sum (XLU),
    # no narrow MXU op. logit = sum_lanes(h3 * w4v).
    logit = jnp.sum(h3 * w4v_ref[...], axis=-1, keepdims=True)
    prob = jax.nn.sigmoid(logit)

    # Lane-dense output block; wrapper slices column 0.
    o_ref[...] = jnp.broadcast_to(prob, o_ref.shape)


def matchnet_ssd_kernel(x1_ref, x2_ref, enc_w_ref, enc_b_ref, o_ref):
    e1 = jnp.dot(x1_ref[...], enc_w_ref[...],
                 preferred_element_type=jnp.float32) + enc_b_ref[...]
    e2 = jnp.dot(x2_ref[...], enc_w_ref[...],
                 preferred_element_type=jnp.float32) + enc_b_ref[...]
    d = e1 - e2
    sumsq = jnp.sum(d * d, axis=-1, keepdims=True)
    # ||d|| < 0.1  <=>  ||d||^2 < 0.01  (both sides non-negative; no sqrt needed)
    res = jnp.where(sumsq < 0.01, 0.0, 1.0).astype(jnp.float32)
    o_ref[...] = jnp.broadcast_to(res, o_ref.shape)


# ----------------------------------------------------------------------------
# pallas_call wrappers
# ----------------------------------------------------------------------------

def _round_up(x, m):
    return (x + m - 1) // m * m


def _const_spec(a):
    # Full-array block, constant index_map -> stays VMEM-resident across the grid.
    nd = a.ndim
    return pl.BlockSpec(a.shape, lambda i, nd=nd: (0,) * nd)


def _prep_inputs(x1, x2):
    B = x1.shape[0]
    x1f = x1.reshape(B, -1).astype(jnp.bfloat16)
    x2f = x2.reshape(B, -1).astype(jnp.bfloat16)
    F = x1f.shape[1]
    TB = 128 if B >= 128 else _round_up(B, 8)       # batch tile (sublane-aligned)
    B_pad = _round_up(B, TB)
    if B_pad != B:
        pad = ((0, B_pad - B), (0, 0))
        x1f = jnp.pad(x1f, pad)
        x2f = jnp.pad(x2f, pad)
    return x1f, x2f, B, B_pad, TB, F


_COMPILER_PARAMS = pltpu.CompilerParams(
    dimension_semantics=("parallel",),          # batch axis -> shards over v7x TCs
    vmem_limit_bytes=32 * 1024 * 1024,          # explicit (v5e default scoped is 16 MiB)
)


def matchnet_learnt(params, x1, x2):
    x1f, x2f, B, B_pad, TB, F = _prep_inputs(x1, x2)
    p = params
    out = pl.pallas_call(
        matchnet_learnt_kernel,
        out_shape=jax.ShapeDtypeStruct((B_pad, 128), jnp.float32),
        grid=(B_pad // TB,),
        in_specs=[
            pl.BlockSpec((TB, F), lambda i: (i, 0)),
            pl.BlockSpec((TB, F), lambda i: (i, 0)),
            _const_spec(p["enc_w"]), _const_spec(p["enc_b"]),
            _const_spec(p["w1a"]), _const_spec(p["w1b"]), _const_spec(p["b1"]),
            _const_spec(p["w2"]), _const_spec(p["b2"]),
            _const_spec(p["w3"]), _const_spec(p["b3"]),
            _const_spec(p["w4v"]),
        ],
        out_specs=pl.BlockSpec((TB, 128), lambda i: (i, 0)),
        compiler_params=_COMPILER_PARAMS,
    )(x1f, x2f,
      p["enc_w"], p["enc_b"],
      p["w1a"], p["w1b"], p["b1"],
      p["w2"], p["b2"],
      p["w3"], p["b3"],
      p["w4v"])
    return out[:B, :1]


def matchnet_ssd(params, x1, x2):
    x1f, x2f, B, B_pad, TB, F = _prep_inputs(x1, x2)
    p = params
    out = pl.pallas_call(
        matchnet_ssd_kernel,
        out_shape=jax.ShapeDtypeStruct((B_pad, 128), jnp.float32),
        grid=(B_pad // TB,),
        in_specs=[
            pl.BlockSpec((TB, F), lambda i: (i, 0)),
            pl.BlockSpec((TB, F), lambda i: (i, 0)),
            _const_spec(p["enc_w"]), _const_spec(p["enc_b"]),
        ],
        out_specs=pl.BlockSpec((TB, 128), lambda i: (i, 0)),
        compiler_params=_COMPILER_PARAMS,
    )(x1f, x2f, p["enc_w"], p["enc_b"])
    return out[:B, :1]


@functools.partial(jax.jit, static_argnames=("distance_method",))
def matchnet_forward(params, x1, x2, distance_method="learnt"):
    if distance_method == "learnt":
        return matchnet_learnt(params, x1, x2)
    elif distance_method == "ssd":
        return matchnet_ssd(params, x1, x2)
    else:
        raise ValueError(distance_method)


# ----------------------------------------------------------------------------
# Deterministic parameter initialization (+ host-side BN folding & padding)
# ----------------------------------------------------------------------------

def _linear_init(key, fan_in, fan_out):
    # PyTorch nn.Linear default: U(-1/sqrt(fan_in), 1/sqrt(fan_in))
    kw, kb = jax.random.split(key)
    bound = 1.0 / jnp.sqrt(float(fan_in))
    w = jax.random.uniform(kw, (fan_in, fan_out), jnp.float32, -bound, bound)
    b = jax.random.uniform(kb, (1, fan_out), jnp.float32, -bound, bound)
    return w, b


def init_params(key, in_features, indim=512):
    keys = jax.random.split(key, 5)
    eps = 1e-5

    enc_w, enc_b = _linear_init(keys[0], in_features, indim)   # encoder stand-in
    w1, b1 = _linear_init(keys[1], 2 * indim, 512)             # Linear(1024, 512)
    w2, b2 = _linear_init(keys[2], 512, 128)                   # Linear(512, 128)
    w3, b3 = _linear_init(keys[3], 128, 4)                     # Linear(128, 4)
    w4, b4 = _linear_init(keys[4], 4, 1)                       # Linear(4, 1)

    # Eval-mode BatchNorm1d with default stats: y = x / sqrt(1 + eps).
    bn_scale = 1.0 / jnp.sqrt(1.0 + eps)
    s1 = jnp.full((512,), bn_scale, jnp.float32); t1 = jnp.zeros((512,), jnp.float32)
    s2 = jnp.full((128,), bn_scale, jnp.float32); t2 = jnp.zeros((128,), jnp.float32)
    s3 = jnp.full((4,),   bn_scale, jnp.float32); t3 = jnp.zeros((4,),   jnp.float32)

    # Fold BN_k into the following Linear: (h*s + t) @ W + b == h @ (s[:,None]*W) + (t@W + b)
    w2f = s1[:, None] * w2
    b2f = b2 + t1 @ w2                     # (1, 128)
    w3f = s2[:, None] * w3
    b3f = b3 + t2 @ w3                     # (1, 4)
    w4f = s3[:, None] * w4                 # (4, 1)  (BN3 folded into W4)
    b4f = b4 + t3 @ w4                     # (1, 1)

    # Pad layer-3 N from 4 -> 128 lanes. Lane 4 gets bias 1.0 and zero weights so
    # relu(h3[:, 4]) == 1, which lets the final bias ride in the lane-dense w4 vector.
    w3p = jnp.zeros((128, 128), jnp.float32).at[:, :4].set(w3f)
    b3p = jnp.zeros((1, 128), jnp.float32).at[:, :4].set(b3f).at[:, 4].set(1.0)

    # Lane-dense final weight vector: lanes 0..3 = BN3-folded W4, lane 4 = folded bias.
    w4v = (jnp.zeros((1, 128), jnp.float32)
           .at[0, :4].set(w4f[:, 0])
           .at[0, 4].set(b4f[0, 0]))

    return {
        "enc_w": enc_w.astype(jnp.bfloat16), "enc_b": enc_b,
        "w1a": w1[:indim].astype(jnp.bfloat16),
        "w1b": w1[indim:].astype(jnp.bfloat16),
        "b1": b1,
        "w2": w2f.astype(jnp.bfloat16), "b2": b2f,
        "w3": w3p.astype(jnp.bfloat16), "b3": b3p,
        "w4v": w4v,                      # f32 (VPU path; v5e has no bf16 VPU)
    }


# ----------------------------------------------------------------------------
# Pure-JAX reference (same folded params) for correctness check
# ----------------------------------------------------------------------------

def matchnet_reference(params, x1, x2, distance_method):
    B = x1.shape[0]
    x1f = x1.reshape(B, -1).astype(jnp.float32)
    x2f = x2.reshape(B, -1).astype(jnp.float32)
    ew = params["enc_w"].astype(jnp.float32)
    e1 = x1f @ ew + params["enc_b"]
    e2 = x2f @ ew + params["enc_b"]
    if distance_method == "ssd":
        sumsq = jnp.sum((e1 - e2) ** 2, axis=1, keepdims=True)
        return jnp.where(sumsq < 0.01, 0.0, 1.0).astype(jnp.float32)
    h = jnp.maximum(e1 @ params["w1a"].astype(jnp.float32)
                    + e2 @ params["w1b"].astype(jnp.float32) + params["b1"], 0.0)
    h = jnp.maximum(h @ params["w2"].astype(jnp.float32) + params["b2"], 0.0)
    h = jnp.maximum(h @ params["w3"].astype(jnp.float32) + params["b3"], 0.0)
    logit = jnp.sum(h * params["w4v"], axis=-1, keepdims=True)
    return jax.nn.sigmoid(logit)


# ----------------------------------------------------------------------------
# Main
# ----------------------------------------------------------------------------

if __name__ == "__main__":
    key = jax.random.PRNGKey(0)
    B, C, H, W = 8, 3, 16, 16            # small NCHW inputs
    k1, k2, kp = jax.random.split(key, 3)
    x1 = jax.random.normal(k1, (B, C, H, W), jnp.float32)
    x2 = jax.random.normal(k2, (B, C, H, W), jnp.float32)

    params = init_params(kp, in_features=C * H * W, indim=512)

    out_learnt = matchnet_forward(params, x1, x2, distance_method="learnt")
    out_ssd = matchnet_forward(params, x1, x2, distance_method="ssd")
    jax.block_until_ready((out_learnt, out_ssd))

    assert out_learnt.shape == (B, 1) and out_learnt.dtype == jnp.float32
    assert out_ssd.shape == (B, 1) and out_ssd.dtype == jnp.float32

    ref_learnt = matchnet_reference(params, x1, x2, "learnt")
    ref_ssd = matchnet_reference(params, x1, x2, "ssd")
    assert bool(jnp.all(jnp.abs(out_learnt - ref_learnt) < 2e-2)), "learnt mismatch"
    assert bool(jnp.all(out_ssd == ref_ssd)), "ssd mismatch"
    assert bool(jnp.all((out_learnt >= 0.0) & (out_learnt <= 1.0)))
    assert bool(jnp.all((out_ssd == 0.0) | (out_ssd == 1.0)))

    print("KERNEL_OK")
</pallas_src>

<mosaic_0001>
module attributes {stable_mosaic.version = 11 : i64} {
  func.func @matchnet_learnt_kernel(%arg0: i32, %arg1: memref<8x768xbf16, #tpu.memory_space<vmem>>, %arg2: memref<8x768xbf16, #tpu.memory_space<vmem>>, %arg3: memref<768x512xbf16, #tpu.memory_space<vmem>>, %arg4: memref<1x512xf32, #tpu.memory_space<vmem>>, %arg5: memref<512x512xbf16, #tpu.memory_space<vmem>>, %arg6: memref<512x512xbf16, #tpu.memory_space<vmem>>, %arg7: memref<1x512xf32, #tpu.memory_space<vmem>>, %arg8: memref<512x128xbf16, #tpu.memory_space<vmem>>, %arg9: memref<1x128xf32, #tpu.memory_space<vmem>>, %arg10: memref<128x128xbf16, #tpu.memory_space<vmem>>, %arg11: memref<1x128xf32, #tpu.memory_space<vmem>>, %arg12: memref<1x128xf32, #tpu.memory_space<vmem>>, %arg13: memref<8x128xf32, #tpu.memory_space<vmem>>) attributes {dimension_semantics = [#tpu.dimension_semantics<parallel>], iteration_bounds = array<i64: 1>, scalar_prefetch = 0 : i64, scratch_operands = 0 : i64, tpu.core_type = #tpu.core_type<tc>, window_params = [{transform_indices = @transform_0, window_bounds = array<i64: 8, 768>}, {transform_indices = @transform_1, window_bounds = array<i64: 8, 768>}, {pipeline_mode = #tpu.pipeline_mode<synchronous>, transform_indices = @transform_2, window_bounds = array<i64: 768, 512>}, {pipeline_mode = #tpu.pipeline_mode<synchronous>, transform_indices = @transform_3, window_bounds = array<i64: 1, 512>}, {pipeline_mode = #tpu.pipeline_mode<synchronous>, transform_indices = @transform_4, window_bounds = array<i64: 512, 512>}, {pipeline_mode = #tpu.pipeline_mode<synchronous>, transform_indices = @transform_5, window_bounds = array<i64: 512, 512>}, {pipeline_mode = #tpu.pipeline_mode<synchronous>, transform_indices = @transform_6, window_bounds = array<i64: 1, 512>}, {pipeline_mode = #tpu.pipeline_mode<synchronous>, transform_indices = @transform_7, window_bounds = array<i64: 512, 128>}, {pipeline_mode = #tpu.pipeline_mode<synchronous>, transform_indices = @transform_8, window_bounds = array<i64: 1, 128>}, {pipeline_mode = #tpu.pipeline_mode<synchronous>, transform_indices = @transform_9, window_bounds = array<i64: 128, 128>}, {pipeline_mode = #tpu.pipeline_mode<synchronous>, transform_indices = @transform_10, window_bounds = array<i64: 1, 128>}, {pipeline_mode = #tpu.pipeline_mode<synchronous>, transform_indices = @transform_11, window_bounds = array<i64: 1, 128>}, {transform_indices = @transform_12, window_bounds = array<i64: 8, 128>}]} {
    %c0 = arith.constant 0 : index
    %c0_0 = arith.constant 0 : index
    %0 = vector.load %arg1[%c0, %c0_0] : memref<8x768xbf16, #tpu.memory_space<vmem>>, vector<8x768xbf16>
    %c0_1 = arith.constant 0 : index
    %c0_2 = arith.constant 0 : index
    %1 = vector.load %arg3[%c0_1, %c0_2] : memref<768x512xbf16, #tpu.memory_space<vmem>>, vector<768x512xbf16>
    %cst = arith.constant dense<0.000000e+00> : vector<8x512xf32>
    %2 = tpu.matmul %0, %1, %cst {dimension_numbers = #tpu.dot_dimension_numbers<[1], [0], [0], [1], [0, 0, 1, 1], [], []>} : vector<8x768xbf16>, vector<768x512xbf16>, vector<8x512xf32> -> vector<8x512xf32>
    %c0_3 = arith.constant 0 : index
    %c0_4 = arith.constant 0 : index
    %3 = vector.load %arg4[%c0_3, %c0_4] : memref<1x512xf32, #tpu.memory_space<vmem>>, vector<1x512xf32>
    %4 = vector.broadcast %3 : vector<1x512xf32> to vector<8x512xf32>
    %5 = arith.addf %2, %4 : vector<8x512xf32>
    %c0_5 = arith.constant 0 : index
    %c0_6 = arith.constant 0 : index
    %6 = vector.load %arg2[%c0_5, %c0_6] : memref<8x768xbf16, #tpu.memory_space<vmem>>, vector<8x768xbf16>
    %c0_7 = arith.constant 0 : index
    %c0_8 = arith.constant 0 : index
    %7 = vector.load %arg3[%c0_7, %c0_8] : memref<768x512xbf16, #tpu.memory_space<vmem>>, vector<768x512xbf16>
    %cst_9 = arith.constant dense<0.000000e+00> : vector<8x512xf32>
    %8 = tpu.matmul %6, %7, %cst_9 {dimension_numbers = #tpu.dot_dimension_numbers<[1], [0], [0], [1], [0, 0, 1, 1], [], []>} : vector<8x768xbf16>, vector<768x512xbf16>, vector<8x512xf32> -> vector<8x512xf32>
    %c0_10 = arith.constant 0 : index
    %c0_11 = arith.constant 0 : index
    %9 = vector.load %arg4[%c0_10, %c0_11] : memref<1x512xf32, #tpu.memory_space<vmem>>, vector<1x512xf32>
    %10 = vector.broadcast %9 : vector<1x512xf32> to vector<8x512xf32>
    %11 = arith.addf %8, %10 : vector<8x512xf32>
    %12 = arith.truncf %5 : vector<8x512xf32> to vector<8x512xbf16>
    %13 = arith.truncf %11 : vector<8x512xf32> to vector<8x512xbf16>
    %c0_12 = arith.constant 0 : index
    %c0_13 = arith.constant 0 : index
    %14 = vector.load %arg5[%c0_12, %c0_13] : memref<512x512xbf16, #tpu.memory_space<vmem>>, vector<512x512xbf16>
    %cst_14 = arith.constant dense<0.000000e+00> : vector<8x512xf32>
    %15 = tpu.matmul %12, %14, %cst_14 {dimension_numbers = #tpu.dot_dimension_numbers<[1], [0], [0], [1], [0, 0, 1, 1], [], []>} : vector<8x512xbf16>, vector<512x512xbf16>, vector<8x512xf32> -> vector<8x512xf32>
    %c0_15 = arith.constant 0 : index
    %c0_16 = arith.constant 0 : index
    %16 = vector.load %arg6[%c0_15, %c0_16] : memref<512x512xbf16, #tpu.memory_space<vmem>>, vector<512x512xbf16>
    %cst_17 = arith.constant dense<0.000000e+00> : vector<8x512xf32>
    %17 = tpu.matmul %13, %16, %cst_17 {dimension_numbers = #tpu.dot_dimension_numbers<[1], [0], [0], [1], [0, 0, 1, 1], [], []>} : vector<8x512xbf16>, vector<512x512xbf16>, vector<8x512xf32> -> vector<8x512xf32>
    %18 = arith.addf %15, %17 : vector<8x512xf32>
    %c0_18 = arith.constant 0 : index
    %c0_19 = arith.constant 0 : index
    %19 = vector.load %arg7[%c0_18, %c0_19] : memref<1x512xf32, #tpu.memory_space<vmem>>, vector<1x512xf32>
    %20 = vector.broadcast %19 : vector<1x512xf32> to vector<8x512xf32>
    %21 = arith.addf %18, %20 : vector<8x512xf32>
    %cst_20 = arith.constant 0.000000e+00 : f32
    %22 = vector.broadcast %cst_20 : f32 to vector<8x512xf32>
    %23 = arith.maximumf %21, %22 : vector<8x512xf32>
    %24 = arith.truncf %23 : vector<8x512xf32> to vector<8x512xbf16>
    %c0_21 = arith.constant 0 : index
    %c0_22 = arith.constant 0 : index
    %25 = vector.load %arg8[%c0_21, %c0_22] : memref<512x128xbf16, #tpu.memory_space<vmem>>, vector<512x128xbf16>
    %cst_23 = arith.constant dense<0.000000e+00> : vector<8x128xf32>
    %26 = tpu.matmul %24, %25, %cst_23 {dimension_numbers = #tpu.dot_dimension_numbers<[1], [0], [0], [1], [0, 0, 1, 1], [], []>} : vector<8x512xbf16>, vector<512x128xbf16>, vector<8x128xf32> -> vector<8x128xf32>
    %c0_24 = arith.constant 0 : index
    %c0_25 = arith.constant 0 : index
    %27 = vector.load %arg9[%c0_24, %c0_25] : memref<1x128xf32, #tpu.memory_space<vmem>>, vector<1x128xf32>
    %28 = vector.broadcast %27 : vector<1x128xf32> to vector<8x128xf32>
    %29 = arith.addf %26, %28 : vector<8x128xf32>
    %cst_26 = arith.constant 0.000000e+00 : f32
    %30 = vector.broadcast %cst_26 : f32 to vector<8x128xf32>
    %31 = arith.maximumf %29, %30 : vector<8x128xf32>
    %32 = arith.truncf %31 : vector<8x128xf32> to vector<8x128xbf16>
    %c0_27 = arith.constant 0 : index
    %c0_28 = arith.constant 0 : index
    %33 = vector.load %arg10[%c0_27, %c0_28] : memref<128x128xbf16, #tpu.memory_space<vmem>>, vector<128x128xbf16>
    %cst_29 = arith.constant dense<0.000000e+00> : vector<8x128xf32>
    %34 = tpu.matmul %32, %33, %cst_29 {dimension_numbers = #tpu.dot_dimension_numbers<[1], [0], [0], [1], [0, 0, 1, 1], [], []>} : vector<8x128xbf16>, vector<128x128xbf16>, vector<8x128xf32> -> vector<8x128xf32>
    %c0_30 = arith.constant 0 : index
    %c0_31 = arith.constant 0 : index
    %35 = vector.load %arg11[%c0_30, %c0_31] : memref<1x128xf32, #tpu.memory_space<vmem>>, vector<1x128xf32>
    %36 = vector.broadcast %35 : vector<1x128xf32> to vector<8x128xf32>
    %37 = arith.addf %34, %36 : vector<8x128xf32>
    %cst_32 = arith.constant 0.000000e+00 : f32
    %38 = vector.broadcast %cst_32 : f32 to vector<8x128xf32>
    %39 = arith.maximumf %37, %38 : vector<8x128xf32>
    %c0_33 = arith.constant 0 : index
    %c0_34 = arith.constant 0 : index
    %40 = vector.load %arg12[%c0_33, %c0_34] : memref<1x128xf32, #tpu.memory_space<vmem>>, vector<1x128xf32>
    %41 = vector.broadcast %40 : vector<1x128xf32> to vector<8x128xf32>
    %42 = arith.mulf %39, %41 : vector<8x128xf32>
    %cst_35 = arith.constant dense<0.000000e+00> : vector<8xf32>
    %43 = vector.multi_reduction <add>, %42, %cst_35 [1] : vector<8x128xf32> to vector<8xf32>
    %44 = vector.shape_cast %43 : vector<8xf32> to vector<8x1xf32>
    %45 = arith.negf %44 : vector<8x1xf32>
    %46 = math.exp %45 : vector<8x1xf32>
    %cst_36 = arith.constant 1.000000e+00 : f32
    %47 = vector.broadcast %cst_36 : f32 to vector<8x1xf32>
    %48 = arith.addf %47, %46 : vector<8x1xf32>
    %49 = arith.divf %47, %48 : vector<8x1xf32>
    %50 = vector.shape_cast %49 : vector<8x1xf32> to vector<8x1xf32>
    %51 = vector.broadcast %50 : vector<8x1xf32> to vector<8x128xf32>
    %c0_37 = arith.constant 0 : index
    %c0_38 = arith.constant 0 : index
    %52 = vector.load %arg13[%c0_37, %c0_38] : memref<8x128xf32, #tpu.memory_space<vmem>>, vector<8x128xf32>
    tpu.vector_store %arg13[%c0_37, %c0_38], %51 {strides = array<i32>} : memref<8x128xf32, #tpu.memory_space<vmem>>, vector<8x128xf32>,
    return
  }
  func.func @transform_0(%arg0: i32) -> (i32, i32) {
    %c0_i32 = arith.constant 0 : i32
    %c0_i32_0 = arith.constant 0 : i32
    return %arg0, %c0_i32 : i32, i32
  }
  func.func @transform_1(%arg0: i32) -> (i32, i32) {
    %c0_i32 = arith.constant 0 : i32
    %c0_i32_0 = arith.constant 0 : i32
    return %arg0, %c0_i32 : i32, i32
  }
  func.func @transform_2(%arg0: i32) -> (i32, i32) {
    %c0_i32 = arith.constant 0 : i32
    %c0_i32_0 = arith.constant 0 : i32
    %c0_i32_1 = arith.constant 0 : i32
    return %c0_i32, %c0_i32_0 : i32, i32
  }
  func.func @transform_3(%arg0: i32) -> (i32, i32) {
    %c0_i32 = arith.constant 0 : i32
    %c0_i32_0 = arith.constant 0 : i32
    %c0_i32_1 = arith.constant 0 : i32
    return %c0_i32, %c0_i32_0 : i32, i32
  }
  func.func @transform_4(%arg0: i32) -> (i32, i32) {
    %c0_i32 = arith.constant 0 : i32
    %c0_i32_0 = arith.constant 0 : i32
    %c0_i32_1 = arith.constant 0 : i32
    return %c0_i32, %c0_i32_0 : i32, i32
  }
  func.func @transform_5(%arg0: i32) -> (i32, i32) {
    %c0_i32 = arith.constant 0 : i32
    %c0_i32_0 = arith.constant 0 : i32
    %c0_i32_1 = arith.constant 0 : i32
    return %c0_i32, %c0_i32_0 : i32, i32
  }
  func.func @transform_6(%arg0: i32) -> (i32, i32) {
    %c0_i32 = arith.constant 0 : i32
    %c0_i32_0 = arith.constant 0 : i32
    %c0_i32_1 = arith.constant 0 : i32
    return %c0_i32, %c0_i32_0 : i32, i32
  }
  func.func @transform_7(%arg0: i32) -> (i32, i32) {
    %c0_i32 = arith.constant 0 : i32
    %c0_i32_0 = arith.constant 0 : i32
    %c0_i32_1 = arith.constant 0 : i32
    return %c0_i32, %c0_i32_0 : i32, i32
  }
  func.func @transform_8(%arg0: i32) -> (i32, i32) {
    %c0_i32 = arith.constant 0 : i32
    %c0_i32_0 = arith.constant 0 : i32
    %c0_i32_1 = arith.constant 0 : i32
    return %c0_i32, %c0_i32_0 : i32, i32
  }
  func.func @transform_9(%arg0: i32) -> (i32, i32) {
    %c0_i32 = arith.constant 0 : i32
    %c0_i32_0 = arith.constant 0 : i32
    %c0_i32_1 = arith.constant 0 : i32
    return %c0_i32, %c0_i32_0 : i32, i32
  }
  func.func @transform_10(%arg0: i32) -> (i32, i32) {
    %c0_i32 = arith.constant 0 : i32
    %c0_i32_0 = arith.constant 0 : i32
    %c0_i32_1 = arith.constant 0 : i32
    return %c0_i32, %c0_i32_0 : i32, i32
  }
  func.func @transform_11(%arg0: i32) -> (i32, i32) {
    %c0_i32 = arith.constant 0 : i32
    %c0_i32_0 = arith.constant 0 : i32
    %c0_i32_1 = arith.constant 0 : i32
    return %c0_i32, %c0_i32_0 : i32, i32
  }
  func.func @transform_12(%arg0: i32) -> (i32, i32) {
    %c0_i32 = arith.constant 0 : i32
    %c0_i32_0 = arith.constant 0 : i32
    return %arg0, %c0_i32 : i32, i32
  }
}

</mosaic_0001>

<llo_original>
// kernel: matchnet_forward.1
$region0: #{matchnet_forward.1}
  #allocation0 [shape = 'u32[]', space=smem, size = 0x4, offset = 0x4, fixed_abs, tag = 'smem constant byte address 0x4 - core index']
  #allocation1 [shape = 'u32[144,128]{1,0:T(1,128)}', space=vmem, size = 0x12000, scoped, tag = 'internal scratch']
  %s0 = inlined_call_operand.vmem [shape: bf16[8,768], index: 0, kind: input, shape index: {}]
  %s1 = inlined_call_operand.vmem [shape: bf16[8,768], index: 1, kind: input, shape index: {}]
  %s2 = inlined_call_operand.vmem [shape: bf16[768,512], index: 2, kind: input, shape index: {}]
  %s3 = inlined_call_operand.vmem [shape: f32[1,512], index: 3, kind: input, shape index: {}]
  %s4 = inlined_call_operand.hbm [shape: bf16[512,512], index: 4, kind: input, shape index: {}]
  %s5 = inlined_call_operand.hbm [shape: bf16[512,512], index: 5, kind: input, shape index: {}]
  %s6 = inlined_call_operand.vmem [shape: f32[1,512], index: 6, kind: input, shape index: {}]
  %s7 = inlined_call_operand.hbm [shape: bf16[512,128], index: 7, kind: input, shape index: {}]
  %s8 = inlined_call_operand.vmem [shape: f32[1,128], index: 8, kind: input, shape index: {}]
  %s9 = inlined_call_operand.hbm [shape: bf16[128,128], index: 9, kind: input, shape index: {}]
  %s10 = inlined_call_operand.vmem [shape: f32[1,128], index: 10, kind: input, shape index: {}]
  %s11 = inlined_call_operand.vmem [shape: f32[1,128], index: 11, kind: input, shape index: {}]
  %s12 = inlined_call_operand.vmem [shape: f32[8,128], index: 12, kind: output, shape index: {}]
  %s13 = sld [smem:[#allocation0]]
  $region74: #{matchnet_forward.1} parent=0
    _
  %s15 = ssub.s32 1, %s13
  %s16 = scalar_select 0, %s15, %s13
  $region1: #{matchnet_forward.1} parent=0
    #allocation2 [shape = 'u8[524288]{0}', space=vmem, size = 0x80000, scoped, tag = 'input window, operand 4, single buffered']
    #allocation3 [shape = 's32[1]{0}', space=sflag, size = 0x4, scoped, tag = 'scoped memory for matchnet_forward.1']
    #allocation4 [shape = 'u8[524288]{0}', space=vmem, size = 0x80000, scoped, tag = 'input window, operand 5, single buffered']
    #allocation5 [shape = 's32[1]{0}', space=sflag, size = 0x4, scoped, tag = 'scoped memory for matchnet_forward.1']
    #allocation6 [shape = 'u8[131072]{0}', space=vmem, size = 0x20000, scoped, tag = 'input window, operand 7, single buffered']
    #allocation7 [shape = 'u8[32768]{0}', space=vmem, size = 0x8000, scoped, tag = 'input window, operand 9, single buffered']
    #allocation8 [shape = 's32[1]{0}', space=sflag, size = 0x4, scoped, tag = 'scoped memory for matchnet_forward.1']
    %17 = vsyncpa [#allocation3], 0
    %18 = vsyncpa [#allocation5], 0
    %19 = vsyncpa [#allocation8], 0
    // Predicated region
    $region2: #{matchnet_forward.1} parent=1 // pred_check
      _
    $region3: #{matchnet_forward.1} parent=1 // pred_check_branch
      %21 = sbr.rel (0) target = $region5
    $region4: #{matchnet_forward.1} parent=1 // pred_region
      _
    $region5: #{matchnet_forward.1} parent=1 // pred_fallthru
      _
    // Predicated region
    $region6: #{matchnet_forward.1} parent=1 // pred_check
      _
    $region7: #{matchnet_forward.1} parent=1 // pred_check_branch
      %23 = sbr.rel (0) target = $region9
    $region8: #{matchnet_forward.1} parent=1 // pred_region
      _
    $region9: #{matchnet_forward.1} parent=1 // pred_fallthru
      _
    // Predicated region
    $region10: #{matchnet_forward.1} parent=1 // pred_check
      _
    $region11: #{matchnet_forward.1} parent=1 // pred_check_branch
      %25 = sbr.rel (0) target = $region13
    $region12: #{matchnet_forward.1} parent=1 // pred_region
      _
    $region13: #{matchnet_forward.1} parent=1 // pred_fallthru
      _
    // Predicated region
    $region14: #{matchnet_forward.1} parent=1 // pred_check
      _
    $region15: #{matchnet_forward.1} parent=1 // pred_check_branch
      %27 = sbr.rel (0) target = $region17
    $region16: #{matchnet_forward.1} parent=1 // pred_region
      _
    $region17: #{matchnet_forward.1} parent=1 // pred_fallthru
      _
    // Predicated region
    $region18: #{matchnet_forward.1} parent=1 // pred_check
      _
    $region19: #{matchnet_forward.1} parent=1 // pred_check_branch
      %29 = sbr.rel (0) target = $region21
    $region20: #{matchnet_forward.1} parent=1 // pred_region
      %s31 = ssub.s32 16384, 16384
      %32 = vsyncadd [#allocation3], %s31
      %s33 = sshll.u32 [#allocation2], 4
      %s34 = int_to_ptr.vmem [resolvable:$true] %s33
      %39 = dma.hbm_to_vmem [thread:$0]  %s4, 16384, %s34, [#allocation3], 256, 256, 16
    $region21: #{matchnet_forward.1} parent=1 // pred_fallthru
      _
    // Predicated region
    $region22: #{matchnet_forward.1} parent=1 // pred_check
      _
    $region23: #{matchnet_forward.1} parent=1 // pred_check_branch
      %41 = sbr.rel (0) target = $region25
    $region24: #{matchnet_forward.1} parent=1 // pred_region
      %s43 = ssub.s32 16384, 16384
      %44 = vsyncadd [#allocation5], %s43
      %s45 = sshll.u32 [#allocation4], 4
      %s46 = int_to_ptr.vmem [resolvable:$true] %s45
      %51 = dma.hbm_to_vmem [thread:$0]  %s5, 16384, %s46, [#allocation5], 256, 256, 16
    $region25: #{matchnet_forward.1} parent=1 // pred_fallthru
      _
    // Predicated region
    $region26: #{matchnet_forward.1} parent=1 // pred_check
      _
    $region27: #{matchnet_forward.1} parent=1 // pred_check_branch
      %53 = sbr.rel (0) target = $region29
    $region28: #{matchnet_forward.1} parent=1 // pred_region
      _
    $region29: #{matchnet_forward.1} parent=1 // pred_fallthru
      _
    // Predicated region
    $region30: #{matchnet_forward.1} parent=1 // pred_check
      _
    $region31: #{matchnet_forward.1} parent=1 // pred_check_branch
      %55 = sbr.rel (0) target = $region33
    $region32: #{matchnet_forward.1} parent=1 // pred_region
      %s57 = ssub.s32 4096, 4096
      %58 = vsyncadd [#allocation5], %s57
      %s59 = sshll.u32 [#allocation6], 4
      %s60 = int_to_ptr.vmem [resolvable:$true] %s59
      %65 = dma.hbm_to_vmem [thread:$0]  %s7, 4096, %s60, [#allocation5], 64, 64, 4
    $region33: #{matchnet_forward.1} parent=1 // pred_fallthru
      _
    // Predicated region
    $region34: #{matchnet_forward.1} parent=1 // pred_check
      _
    $region35: #{matchnet_forward.1} parent=1 // pred_check_branch
      %67 = sbr.rel (0) target = $region37
    $region36: #{matchnet_forward.1} parent=1 // pred_region
      _
    $region37: #{matchnet_forward.1} parent=1 // pred_fallthru
      _
    // Predicated region
    $region38: #{matchnet_forward.1} parent=1 // pred_check
      _
    $region39: #{matchnet_forward.1} parent=1 // pred_check_branch
      %69 = sbr.rel (0) target = $region41
    $region40: #{matchnet_forward.1} parent=1 // pred_region
      %s71 = ssub.s32 1024, 1024
      %72 = vsyncadd [#allocation8], %s71
      %s73 = sshll.u32 [#allocation7], 4
      %s74 = int_to_ptr.vmem [resolvable:$true] %s73
      %79 = dma.hbm_to_vmem [thread:$0]  %s9, 1024, %s74, [#allocation8], 64, 64, 4
    $region41: #{matchnet_forward.1} parent=1 // pred_fallthru
      _
    // Predicated region
    $region42: #{matchnet_forward.1} parent=1 // pred_check
      _
    $region43: #{matchnet_forward.1} parent=1 // pred_check_branch
      %81 = sbr.rel (0) target = $region45
    $region44: #{matchnet_forward.1} parent=1 // pred_region
      _
    $region45: #{matchnet_forward.1} parent=1 // pred_fallthru
      _
    // Predicated region
    $region46: #{matchnet_forward.1} parent=1 // pred_check
      _
    $region47: #{matchnet_forward.1} parent=1 // pred_check_branch
      %83 = sbr.rel (0) target = $region49
    $region48: #{matchnet_forward.1} parent=1 // pred_region
      _
    $region49: #{matchnet_forward.1} parent=1 // pred_fallthru
      _
    // Predicated region
    $region50: #{matchnet_forward.1} parent=1 // pred_check
      _
    $region51: #{matchnet_forward.1} parent=1 // pred_check_branch
      %85 = sbr.rel (0) target = $region53
    $region52: #{matchnet_forward.1} parent=1 // pred_region
      %86 = dma.done [#allocation3], 16384
    $region53: #{matchnet_forward.1} parent=1 // pred_fallthru
      _
    // Predicated region
    $region54: #{matchnet_forward.1} parent=1 // pred_check
      _
    $region55: #{matchnet_forward.1} parent=1 // pred_check_branch
      %88 = sbr.rel (0) target = $region57
    $region56: #{matchnet_forward.1} parent=1 // pred_region
      %89 = dma.done [#allocation5], 16384
    $region57: #{matchnet_forward.1} parent=1 // pred_fallthru
      _
    // Predicated region
    $region58: #{matchnet_forward.1} parent=1 // pred_check
      _
    $region59: #{matchnet_forward.1} parent=1 // pred_check_branch
      %91 = sbr.rel (0) target = $region61
    $region60: #{matchnet_forward.1} parent=1 // pred_region
      %92 = dma.done [#allocation5], 4096
    $region61: #{matchnet_forward.1} parent=1 // pred_fallthru
      _
    // Predicated region
    $region62: #{matchnet_forward.1} parent=1 // pred_check
      _
    $region63: #{matchnet_forward.1} parent=1 // pred_check_branch
      %94 = sbr.rel (0) target = $region65
    $region64: #{matchnet_forward.1} parent=1 // pred_region
      %95 = dma.done [#allocation8], 1024
    $region65: #{matchnet_forward.1} parent=1 // pred_fallthru
      _
    %v97 = vld [vmem:[%s0] sm:$0xff]
    %v98 = vld [vmem:[%s0 + $0x8] sm:$0xff]
    %v99 = vld [vmem:[%s0 + $0x10] sm:$0xff]
    %v100 = vld [vmem:[%s2] sm:$0xff]
    %v101 = vld [vmem:[%s2 + $0x8] sm:$0xff]
    %v102 = vld [vmem:[%s2 + $0x10] sm:$0xff]
    %v103 = vld [vmem:[%s2 + $0x18] sm:$0xff]
    %v104 = vld [vmem:[%s2 + $0x20] sm:$0xff]
    %v105 = vld [vmem:[%s2 + $0x28] sm:$0xff]
    %v106 = vld [vmem:[%s2 + $0x30] sm:$0xff]
    %v107 = vld [vmem:[%s2 + $0x38] sm:$0xff]
    %v108 = vld [vmem:[%s2 + $0x40] sm:$0xff]
    %v109 = vld [vmem:[%s2 + $0x48] sm:$0xff]
    %v110 = vld [vmem:[%s2 + $0x50] sm:$0xff]
    %v111 = vld [vmem:[%s2 + $0x58] sm:$0xff]
    %v112 = vld [vmem:[%s2 + $0x60] sm:$0xff]
    %v113 = vld [vmem:[%s2 + $0x68] sm:$0xff]
    %v114 = vld [vmem:[%s2 + $0x70] sm:$0xff]
    %v115 = vld [vmem:[%s2 + $0x78] sm:$0xff]
    %v116 = vld [vmem:[%s2 + $0x80] sm:$0xff]
    %v117 = vld [vmem:[%s2 + $0x88] sm:$0xff]
    %v118 = vld [vmem:[%s2 + $0x90] sm:$0xff]
    %v119 = vld [vmem:[%s2 + $0x98] sm:$0xff]
    %v120 = vld [vmem:[%s2 + $0xa0] sm:$0xff]
    %v121 = vld [vmem:[%s2 + $0xa8] sm:$0xff]
    %v122 = vld [vmem:[%s2 + $0xb0] sm:$0xff]
    %v123 = vld [vmem:[%s2 + $0xb8] sm:$0xff]
    %v124 = vld [vmem:[%s2 + $0xc0] sm:$0xff]
    %v125 = vld [vmem:[%s2 + $0xc8] sm:$0xff]
    %v126 = vld [vmem:[%s2 + $0xd0] sm:$0xff]
    %v127 = vld [vmem:[%s2 + $0xd8] sm:$0xff]
    %v128 = vld [vmem:[%s2 + $0xe0] sm:$0xff]
    %v129 = vld [vmem:[%s2 + $0xe8] sm:$0xff]
    %v130 = vld [vmem:[%s2 + $0xf0] sm:$0xff]
    %v131 = vld [vmem:[%s2 + $0xf8] sm:$0xff]
    %v132 = vld [vmem:[%s2 + $0x100] sm:$0xff]
    %v133 = vld [vmem:[%s2 + $0x108] sm:$0xff]
    %v134 = vld [vmem:[%s2 + $0x110] sm:$0xff]
    %v135 = vld [vmem:[%s2 + $0x118] sm:$0xff]
    %v136 = vld [vmem:[%s2 + $0x120] sm:$0xff]
    %v137 = vld [vmem:[%s2 + $0x128] sm:$0xff]
    %v138 = vld [vmem:[%s2 + $0x130] sm:$0xff]
    %v139 = vld [vmem:[%s2 + $0x138] sm:$0xff]
    %v140 = vld [vmem:[%s2 + $0x140] sm:$0xff]
    %v141 = vld [vmem:[%s2 + $0x148] sm:$0xff]
    %v142 = vld [vmem:[%s2 + $0x150] sm:$0xff]
    %v143 = vld [vmem:[%s2 + $0x158] sm:$0xff]
    %v144 = vld [vmem:[%s2 + $0x160] sm:$0xff]
    %v145 = vld [vmem:[%s2 + $0x168] sm:$0xff]
    %v146 = vld [vmem:[%s2 + $0x170] sm:$0xff]
    %v147 = vld [vmem:[%s2 + $0x178] sm:$0xff]
    %v148 = vld [vmem:[%s2 + $0x180] sm:$0xff]
    %v149 = vld [vmem:[%s2 + $0x188] sm:$0xff]
    %v150 = vld [vmem:[%s2 + $0x190] sm:$0xff]
    %v151 = vld [vmem:[%s2 + $0x198] sm:$0xff]
    %v152 = vld [vmem:[%s2 + $0x1a0] sm:$0xff]
    %v153 = vld [vmem:[%s2 + $0x1a8] sm:$0xff]
    %v154 = vld [vmem:[%s2 + $0x1b0] sm:$0xff]
    %v155 = vld [vmem:[%s2 + $0x1b8] sm:$0xff]
    %v156 = vld [vmem:[%s2 + $0x1c0] sm:$0xff]
    %v157 = vld [vmem:[%s2 + $0x1c8] sm:$0xff]
    %v158 = vld [vmem:[%s2 + $0x1d0] sm:$0xff]
    %v159 = vld [vmem:[%s2 + $0x1d8] sm:$0xff]
    %v160 = vld [vmem:[%s2 + $0x1e0] sm:$0xff]
    %v161 = vld [vmem:[%s2 + $0x1e8] sm:$0xff]
    %v162 = vld [vmem:[%s2 + $0x1f0] sm:$0xff]
    %v163 = vld [vmem:[%s2 + $0x1f8] sm:$0xff]
    %v164 = vld [vmem:[%s2 + $0x200] sm:$0xff]
    %v165 = vld [vmem:[%s2 + $0x208] sm:$0xff]
    %v166 = vld [vmem:[%s2 + $0x210] sm:$0xff]
    %v167 = vld [vmem:[%s2 + $0x218] sm:$0xff]
    %v168 = vld [vmem:[%s2 + $0x220] sm:$0xff]
    %v169 = vld [vmem:[%s2 + $0x228] sm:$0xff]
    %v170 = vld [vmem:[%s2 + $0x230] sm:$0xff]
    %v171 = vld [vmem:[%s2 + $0x238] sm:$0xff]
    %v172 = vld [vmem:[%s2 + $0x240] sm:$0xff]
    %v173 = vld [vmem:[%s2 + $0x248] sm:$0xff]
    %v174 = vld [vmem:[%s2 + $0x250] sm:$0xff]
    %v175 = vld [vmem:[%s2 + $0x258] sm:$0xff]
    %v176 = vld [vmem:[%s2 + $0x260] sm:$0xff]
    %v177 = vld [vmem:[%s2 + $0x268] sm:$0xff]
    %v178 = vld [vmem:[%s2 + $0x270] sm:$0xff]
    %v179 = vld [vmem:[%s2 + $0x278] sm:$0xff]
    %v180 = vld [vmem:[%s2 + $0x280] sm:$0xff]
    %v181 = vld [vmem:[%s2 + $0x288] sm:$0xff]
    %v182 = vld [vmem:[%s2 + $0x290] sm:$0xff]
    %v183 = vld [vmem:[%s2 + $0x298] sm:$0xff]
    %v184 = vld [vmem:[%s2 + $0x2a0] sm:$0xff]
    %v185 = vld [vmem:[%s2 + $0x2a8] sm:$0xff]
    %v186 = vld [vmem:[%s2 + $0x2b0] sm:$0xff]
    %v187 = vld [vmem:[%s2 + $0x2b8] sm:$0xff]
    %v188 = vld [vmem:[%s2 + $0x2c0] sm:$0xff]
    %v189 = vld [vmem:[%s2 + $0x2c8] sm:$0xff]
    %v190 = vld [vmem:[%s2 + $0x2d0] sm:$0xff]
    %v191 = vld [vmem:[%s2 + $0x2d8] sm:$0xff]
    %v192 = vld [vmem:[%s2 + $0x2e0] sm:$0xff]
    %v193 = vld [vmem:[%s2 + $0x2e8] sm:$0xff]
    %v194 = vld [vmem:[%s2 + $0x2f0] sm:$0xff]
    %v195 = vld [vmem:[%s2 + $0x2f8] sm:$0xff]
    %v196 = vld [vmem:[%s2 + $0x300] sm:$0xff]
    %v197 = vld [vmem:[%s2 + $0x308] sm:$0xff]
    %v198 = vld [vmem:[%s2 + $0x310] sm:$0xff]
    %v199 = vld [vmem:[%s2 + $0x318] sm:$0xff]
    %v200 = vld [vmem:[%s2 + $0x320] sm:$0xff]
    %v201 = vld [vmem:[%s2 + $0x328] sm:$0xff]
    %v202 = vld [vmem:[%s2 + $0x330] sm:$0xff]
    %v203 = vld [vmem:[%s2 + $0x338] sm:$0xff]
    %v204 = vld [vmem:[%s2 + $0x340] sm:$0xff]
    %v205 = vld [vmem:[%s2 + $0x348] sm:$0xff]
    %v206 = vld [vmem:[%s2 + $0x350] sm:$0xff]
    %v207 = vld [vmem:[%s2 + $0x358] sm:$0xff]
    %v208 = vld [vmem:[%s2 + $0x360] sm:$0xff]
    %v209 = vld [vmem:[%s2 + $0x368] sm:$0xff]
    %v210 = vld [vmem:[%s2 + $0x370] sm:$0xff]
    %v211 = vld [vmem:[%s2 + $0x378] sm:$0xff]
    %v212 = vld [vmem:[%s2 + $0x380] sm:$0xff]
    %v213 = vld [vmem:[%s2 + $0x388] sm:$0xff]
    %v214 = vld [vmem:[%s2 + $0x390] sm:$0xff]
    %v215 = vld [vmem:[%s2 + $0x398] sm:$0xff]
    %v216 = vld [vmem:[%s2 + $0x3a0] sm:$0xff]
    %v217 = vld [vmem:[%s2 + $0x3a8] sm:$0xff]
    %v218 = vld [vmem:[%s2 + $0x3b0] sm:$0xff]
    %v219 = vld [vmem:[%s2 + $0x3b8] sm:$0xff]
    %v220 = vld [vmem:[%s2 + $0x3c0] sm:$0xff]
    %v221 = vld [vmem:[%s2 + $0x3c8] sm:$0xff]
    %v222 = vld [vmem:[%s2 + $0x3d0] sm:$0xff]
    %v223 = vld [vmem:[%s2 + $0x3d8] sm:$0xff]
    %v224 = vld [vmem:[%s2 + $0x3e0] sm:$0xff]
    %v225 = vld [vmem:[%s2 + $0x3e8] sm:$0xff]
    %v226 = vld [vmem:[%s2 + $0x3f0] sm:$0xff]
    %v227 = vld [vmem:[%s2 + $0x3f8] sm:$0xff]
    %v228 = vld [vmem:[%s2 + $0x400] sm:$0xff]
    %v229 = vld [vmem:[%s2 + $0x408] sm:$0xff]
    %v230 = vld [vmem:[%s2 + $0x410] sm:$0xff]
    %v231 = vld [vmem:[%s2 + $0x418] sm:$0xff]
    %v232 = vld [vmem:[%s2 + $0x420] sm:$0xff]
    %v233 = vld [vmem:[%s2 + $0x428] sm:$0xff]
    %v234 = vld [vmem:[%s2 + $0x430] sm:$0xff]
    %v235 = vld [vmem:[%s2 + $0x438] sm:$0xff]
    %v236 = vld [vmem:[%s2 + $0x440] sm:$0xff]
    %v237 = vld [vmem:[%s2 + $0x448] sm:$0xff]
    %v238 = vld [vmem:[%s2 + $0x450] sm:$0xff]
    %v239 = vld [vmem:[%s2 + $0x458] sm:$0xff]
    %v240 = vld [vmem:[%s2 + $0x460] sm:$0xff]
    %v241 = vld [vmem:[%s2 + $0x468] sm:$0xff]
    %v242 = vld [vmem:[%s2 + $0x470] sm:$0xff]
    %v243 = vld [vmem:[%s2 + $0x478] sm:$0xff]
    %v244 = vld [vmem:[%s2 + $0x480] sm:$0xff]
    %v245 = vld [vmem:[%s2 + $0x488] sm:$0xff]
    %v246 = vld [vmem:[%s2 + $0x490] sm:$0xff]
    %v247 = vld [vmem:[%s2 + $0x498] sm:$0xff]
    %v248 = vld [vmem:[%s2 + $0x4a0] sm:$0xff]
    %v249 = vld [vmem:[%s2 + $0x4a8] sm:$0xff]
    %v250 = vld [vmem:[%s2 + $0x4b0] sm:$0xff]
    %v251 = vld [vmem:[%s2 + $0x4b8] sm:$0xff]
    %v252 = vld [vmem:[%s2 + $0x4c0] sm:$0xff]
    %v253 = vld [vmem:[%s2 + $0x4c8] sm:$0xff]
    %v254 = vld [vmem:[%s2 + $0x4d0] sm:$0xff]
    %v255 = vld [vmem:[%s2 + $0x4d8] sm:$0xff]
    %v256 = vld [vmem:[%s2 + $0x4e0] sm:$0xff]
    %v257 = vld [vmem:[%s2 + $0x4e8] sm:$0xff]
    %v258 = vld [vmem:[%s2 + $0x4f0] sm:$0xff]
    %v259 = vld [vmem:[%s2 + $0x4f8] sm:$0xff]
    %v260 = vld [vmem:[%s2 + $0x500] sm:$0xff]
    %v261 = vld [vmem:[%s2 + $0x508] sm:$0xff]
    %v262 = vld [vmem:[%s2 + $0x510] sm:$0xff]
    %v263 = vld [vmem:[%s2 + $0x518] sm:$0xff]
    %v264 = vld [vmem:[%s2 + $0x520] sm:$0xff]
    %v265 = vld [vmem:[%s2 + $0x528] sm:$0xff]
    %v266 = vld [vmem:[%s2 + $0x530] sm:$0xff]
    %v267 = vld [vmem:[%s2 + $0x538] sm:$0xff]
    %v268 = vld [vmem:[%s2 + $0x540] sm:$0xff]
    %v269 = vld [vmem:[%s2 + $0x548] sm:$0xff]
    %v270 = vld [vmem:[%s2 + $0x550] sm:$0xff]
    %v271 = vld [vmem:[%s2 + $0x558] sm:$0xff]
    %v272 = vld [vmem:[%s2 + $0x560] sm:$0xff]
    %v273 = vld [vmem:[%s2 + $0x568] sm:$0xff]
    %v274 = vld [vmem:[%s2 + $0x570] sm:$0xff]
    %v275 = vld [vmem:[%s2 + $0x578] sm:$0xff]
    %v276 = vld [vmem:[%s2 + $0x580] sm:$0xff]
    %v277 = vld [vmem:[%s2 + $0x588] sm:$0xff]
    %v278 = vld [vmem:[%s2 + $0x590] sm:$0xff]
    %v279 = vld [vmem:[%s2 + $0x598] sm:$0xff]
    %v280 = vld [vmem:[%s2 + $0x5a0] sm:$0xff]
    %v281 = vld [vmem:[%s2 + $0x5a8] sm:$0xff]
    %v282 = vld [vmem:[%s2 + $0x5b0] sm:$0xff]
    %v283 = vld [vmem:[%s2 + $0x5b8] sm:$0xff]
    %v284 = vld [vmem:[%s2 + $0x5c0] sm:$0xff]
    %v285 = vld [vmem:[%s2 + $0x5c8] sm:$0xff]
    %v286 = vld [vmem:[%s2 + $0x5d0] sm:$0xff]
    %v287 = vld [vmem:[%s2 + $0x5d8] sm:$0xff]
    %v288 = vld [vmem:[%s2 + $0x5e0] sm:$0xff]
    %v289 = vld [vmem:[%s2 + $0x5e8] sm:$0xff]
    %v290 = vld [vmem:[%s2 + $0x5f0] sm:$0xff]
    %v291 = vld [vmem:[%s2 + $0x5f8] sm:$0xff]
    %v292 = vld [vmem:[%s3] sm:$0xf]
    %v294 = vlaneseq
    %v295 = vshrl.u32 %v294, 7
    %v296 = vsub.s32 0, %v295
    %v297 = vrot.slane %v292, %v296
    %v298 = vlaneseq
    %v299 = vshrl.u32 %v298, 7
    %v300 = vsub.s32 1, %v299
    %v301 = vrot.slane %v292, %v300
    %v302 = vlaneseq
    %v303 = vshrl.u32 %v302, 7
    %v304 = vsub.s32 2, %v303
    %v305 = vrot.slane %v292, %v304
    %v306 = vlaneseq
    %v307 = vshrl.u32 %v306, 7
    %v308 = vsub.s32 3, %v307
    %v309 = vrot.slane %v292, %v308
    %v317 = vunpack.c.l.b16 %v97
    %v318 = vunpack.c.h.b16 %v97
    %v319 = vunpack.c.l.b16 %v98
    %v320 = vunpack.c.h.b16 %v98
    %v321 = vunpack.c.l.b16 %v99
    %v322 = vunpack.c.h.b16 %v99
    %v323 = vpack.c.b16 %v317, %v317
    %v324 = vpack.c.b16 %v318, %v318
    %v325 = vpack.c.b16 %v319, %v319
    %v326 = vpack.c.b16 %v320, %v320
    %v327 = vpack.c.b16 %v321, %v321
    %v328 = vpack.c.b16 %v322, %v322
    %v527 = vunpack.c.l.b16 %v100
    %v528 = vunpack.c.h.b16 %v100
    %v529 = vunpack.c.l.b16 %v101
    %v530 = vunpack.c.h.b16 %v101
    %v531 = vunpack.c.l.b16 %v102
    %v532 = vunpack.c.h.b16 %v102
    %v533 = vunpack.c.l.b16 %v103
    %v534 = vunpack.c.h.b16 %v103
    %v535 = vunpack.c.l.b16 %v104
    %v536 = vunpack.c.h.b16 %v104
    %v537 = vunpack.c.l.b16 %v105
    %v538 = vunpack.c.h.b16 %v105
    %v539 = vunpack.c.l.b16 %v106
    %v540 = vunpack.c.h.b16 %v106
    %v541 = vunpack.c.l.b16 %v107
    %v542 = vunpack.c.h.b16 %v107
    %v543 = vunpack.c.l.b16 %v108
    %v544 = vunpack.c.h.b16 %v108
    %v545 = vunpack.c.l.b16 %v109
    %v546 = vunpack.c.h.b16 %v109
    %v547 = vunpack.c.l.b16 %v110
    %v548 = vunpack.c.h.b16 %v110
    %v549 = vunpack.c.l.b16 %v111
    %v550 = vunpack.c.h.b16 %v111
    %v551 = vunpack.c.l.b16 %v112
    %v552 = vunpack.c.h.b16 %v112
    %v553 = vunpack.c.l.b16 %v113
    %v554 = vunpack.c.h.b16 %v113
    %v555 = vunpack.c.l.b16 %v114
    %v556 = vunpack.c.h.b16 %v114
    %v557 = vunpack.c.l.b16 %v115
    %v558 = vunpack.c.h.b16 %v115
    %v559 = vunpack.c.l.b16 %v116
    %v560 = vunpack.c.h.b16 %v116
    %v561 = vunpack.c.l.b16 %v117
    %v562 = vunpack.c.h.b16 %v117
    %v563 = vunpack.c.l.b16 %v118
    %v564 = vunpack.c.h.b16 %v118
    %v565 = vunpack.c.l.b16 %v119
    %v566 = vunpack.c.h.b16 %v119
    %v567 = vunpack.c.l.b16 %v120
    %v568 = vunpack.c.h.b16 %v120
    %v569 = vunpack.c.l.b16 %v121
    %v570 = vunpack.c.h.b16 %v121
    %v571 = vunpack.c.l.b16 %v122
    %v572 = vunpack.c.h.b16 %v122
    %v573 = vunpack.c.l.b16 %v123
    %v574 = vunpack.c.h.b16 %v123
    %v575 = vunpack.c.l.b16 %v124
    %v576 = vunpack.c.h.b16 %v124
    %v577 = vunpack.c.l.b16 %v125
    %v578 = vunpack.c.h.b16 %v125
    %v579 = vunpack.c.l.b16 %v126
    %v580 = vunpack.c.h.b16 %v126
    %v581 = vunpack.c.l.b16 %v127
    %v582 = vunpack.c.h.b16 %v127
    %v583 = vunpack.c.l.b16 %v128
    %v584 = vunpack.c.h.b16 %v128
    %v585 = vunpack.c.l.b16 %v129
    %v586 = vunpack.c.h.b16 %v129
    %v587 = vunpack.c.l.b16 %v130
    %v588 = vunpack.c.h.b16 %v130
    %v589 = vunpack.c.l.b16 %v131
    %v590 = vunpack.c.h.b16 %v131
    %v591 = vunpack.c.l.b16 %v132
    %v592 = vunpack.c.h.b16 %v132
    %v593 = vunpack.c.l.b16 %v133
    %v594 = vunpack.c.h.b16 %v133
    %v595 = vunpack.c.l.b16 %v134
    %v596 = vunpack.c.h.b16 %v134
    %v597 = vunpack.c.l.b16 %v135
    %v598 = vunpack.c.h.b16 %v135
    %v599 = vunpack.c.l.b16 %v136
    %v600 = vunpack.c.h.b16 %v136
    %v601 = vunpack.c.l.b16 %v137
    %v602 = vunpack.c.h.b16 %v137
    %v603 = vunpack.c.l.b16 %v138
    %v604 = vunpack.c.h.b16 %v138
    %v605 = vunpack.c.l.b16 %v139
    %v606 = vunpack.c.h.b16 %v139
    %v607 = vunpack.c.l.b16 %v140
    %v608 = vunpack.c.h.b16 %v140
    %v609 = vunpack.c.l.b16 %v141
    %v610 = vunpack.c.h.b16 %v141
    %v611 = vunpack.c.l.b16 %v142
    %v612 = vunpack.c.h.b16 %v142
    %v613 = vunpack.c.l.b16 %v143
    %v614 = vunpack.c.h.b16 %v143
    %v615 = vunpack.c.l.b16 %v144
    %v616 = vunpack.c.h.b16 %v144
    %v617 = vunpack.c.l.b16 %v145
    %v618 = vunpack.c.h.b16 %v145
    %v619 = vunpack.c.l.b16 %v146
    %v620 = vunpack.c.h.b16 %v146
    %v621 = vunpack.c.l.b16 %v147
    %v622 = vunpack.c.h.b16 %v147
    %v623 = vunpack.c.l.b16 %v148
    %v624 = vunpack.c.h.b16 %v148
    %v625 = vunpack.c.l.b16 %v149
    %v626 = vunpack.c.h.b16 %v149
    %v627 = vunpack.c.l.b16 %v150
    %v628 = vunpack.c.h.b16 %v150
    %v629 = vunpack.c.l.b16 %v151
    %v630 = vunpack.c.h.b16 %v151
    %v631 = vunpack.c.l.b16 %v152
    %v632 = vunpack.c.h.b16 %v152
    %v633 = vunpack.c.l.b16 %v153
    %v634 = vunpack.c.h.b16 %v153
    %v635 = vunpack.c.l.b16 %v154
    %v636 = vunpack.c.h.b16 %v154
    %v637 = vunpack.c.l.b16 %v155
    %v638 = vunpack.c.h.b16 %v155
    %v639 = vunpack.c.l.b16 %v156
    %v640 = vunpack.c.h.b16 %v156
    %v641 = vunpack.c.l.b16 %v157
    %v642 = vunpack.c.h.b16 %v157
    %v643 = vunpack.c.l.b16 %v158
    %v644 = vunpack.c.h.b16 %v158
    %v645 = vunpack.c.l.b16 %v159
    %v646 = vunpack.c.h.b16 %v159
    %v647 = vunpack.c.l.b16 %v160
    %v648 = vunpack.c.h.b16 %v160
    %v649 = vunpack.c.l.b16 %v161
    %v650 = vunpack.c.h.b16 %v161
    %v651 = vunpack.c.l.b16 %v162
    %v652 = vunpack.c.h.b16 %v162
    %v653 = vunpack.c.l.b16 %v163
    %v654 = vunpack.c.h.b16 %v163
    %v655 = vunpack.c.l.b16 %v164
    %v656 = vunpack.c.h.b16 %v164
    %v657 = vunpack.c.l.b16 %v165
    %v658 = vunpack.c.h.b16 %v165
    %v659 = vunpack.c.l.b16 %v166
    %v660 = vunpack.c.h.b16 %v166
    %v661 = vunpack.c.l.b16 %v167
    %v662 = vunpack.c.h.b16 %v167
    %v663 = vunpack.c.l.b16 %v168
    %v664 = vunpack.c.h.b16 %v168
    %v665 = vunpack.c.l.b16 %v169
    %v666 = vunpack.c.h.b16 %v169
    %v667 = vunpack.c.l.b16 %v170
    %v668 = vunpack.c.h.b16 %v170
    %v669 = vunpack.c.l.b16 %v171
    %v670 = vunpack.c.h.b16 %v171
    %v671 = vunpack.c.l.b16 %v172
    %v672 = vunpack.c.h.b16 %v172
    %v673 = vunpack.c.l.b16 %v173
    %v674 = vunpack.c.h.b16 %v173
    %v675 = vunpack.c.l.b16 %v174
    %v676 = vunpack.c.h.b16 %v174
    %v677 = vunpack.c.l.b16 %v175
    %v678 = vunpack.c.h.b16 %v175
    %v679 = vunpack.c.l.b16 %v176
    %v680 = vunpack.c.h.b16 %v176
    %v681 = vunpack.c.l.b16 %v177
    %v682 = vunpack.c.h.b16 %v177
    %v683 = vunpack.c.l.b16 %v178
    %v684 = vunpack.c.h.b16 %v178
    %v685 = vunpack.c.l.b16 %v179
    %v686 = vunpack.c.h.b16 %v179
    %v687 = vunpack.c.l.b16 %v180
    %v688 = vunpack.c.h.b16 %v180
    %v689 = vunpack.c.l.b16 %v181
    %v690 = vunpack.c.h.b16 %v181
    %v691 = vunpack.c.l.b16 %v182
    %v692 = vunpack.c.h.b16 %v182
    %v693 = vunpack.c.l.b16 %v183
    %v694 = vunpack.c.h.b16 %v183
    %v695 = vunpack.c.l.b16 %v184
    %v696 = vunpack.c.h.b16 %v184
    %v697 = vunpack.c.l.b16 %v185
    %v698 = vunpack.c.h.b16 %v185
    %v699 = vunpack.c.l.b16 %v186
    %v700 = vunpack.c.h.b16 %v186
    %v701 = vunpack.c.l.b16 %v187
    %v702 = vunpack.c.h.b16 %v187
    %v703 = vunpack.c.l.b16 %v188
    %v704 = vunpack.c.h.b16 %v188
    %v705 = vunpack.c.l.b16 %v189
    %v706 = vunpack.c.h.b16 %v189
    %v707 = vunpack.c.l.b16 %v190
    %v708 = vunpack.c.h.b16 %v190
    %v709 = vunpack.c.l.b16 %v191
    %v710 = vunpack.c.h.b16 %v191
    %v711 = vunpack.c.l.b16 %v192
    %v712 = vunpack.c.h.b16 %v192
    %v713 = vunpack.c.l.b16 %v193
    %v714 = vunpack.c.h.b16 %v193
    %v715 = vunpack.c.l.b16 %v194
    %v716 = vunpack.c.h.b16 %v194
    %v717 = vunpack.c.l.b16 %v195
    %v718 = vunpack.c.h.b16 %v195
    %v719 = vunpack.c.l.b16 %v196
    %v720 = vunpack.c.h.b16 %v196
    %v721 = vunpack.c.l.b16 %v197
    %v722 = vunpack.c.h.b16 %v197
    %v723 = vunpack.c.l.b16 %v198
    %v724 = vunpack.c.h.b16 %v198
    %v725 = vunpack.c.l.b16 %v199
    %v726 = vunpack.c.h.b16 %v199
    %v727 = vunpack.c.l.b16 %v200
    %v728 = vunpack.c.h.b16 %v200
    %v729 = vunpack.c.l.b16 %v201
    %v730 = vunpack.c.h.b16 %v201
    %v731 = vunpack.c.l.b16 %v202
    %v732 = vunpack.c.h.b16 %v202
    %v733 = vunpack.c.l.b16 %v203
    %v734 = vunpack.c.h.b16 %v203
    %v735 = vunpack.c.l.b16 %v204
    %v736 = vunpack.c.h.b16 %v204
    %v737 = vunpack.c.l.b16 %v205
    %v738 = vunpack.c.h.b16 %v205
    %v739 = vunpack.c.l.b16 %v206
    %v740 = vunpack.c.h.b16 %v206
    %v741 = vunpack.c.l.b16 %v207
    %v742 = vunpack.c.h.b16 %v207
    %v743 = vunpack.c.l.b16 %v208
    %v744 = vunpack.c.h.b16 %v208
    %v745 = vunpack.c.l.b16 %v209
    %v746 = vunpack.c.h.b16 %v209
    %v747 = vunpack.c.l.b16 %v210
    %v748 = vunpack.c.h.b16 %v210
    %v749 = vunpack.c.l.b16 %v211
    %v750 = vunpack.c.h.b16 %v211
    %v751 = vunpack.c.l.b16 %v212
    %v752 = vunpack.c.h.b16 %v212
    %v753 = vunpack.c.l.b16 %v213
    %v754 = vunpack.c.h.b16 %v213
    %v755 = vunpack.c.l.b16 %v214
    %v756 = vunpack.c.h.b16 %v214
    %v757 = vunpack.c.l.b16 %v215
    %v758 = vunpack.c.h.b16 %v215
    %v759 = vunpack.c.l.b16 %v216
    %v760 = vunpack.c.h.b16 %v216
    %v761 = vunpack.c.l.b16 %v217
    %v762 = vunpack.c.h.b16 %v217
    %v763 = vunpack.c.l.b16 %v218
    %v764 = vunpack.c.h.b16 %v218
    %v765 = vunpack.c.l.b16 %v219
    %v766 = vunpack.c.h.b16 %v219
    %v767 = vunpack.c.l.b16 %v220
    %v768 = vunpack.c.h.b16 %v220
    %v769 = vunpack.c.l.b16 %v221
    %v770 = vunpack.c.h.b16 %v221
    %v771 = vunpack.c.l.b16 %v222
    %v772 = vunpack.c.h.b16 %v222
    %v773 = vunpack.c.l.b16 %v223
    %v774 = vunpack.c.h.b16 %v223
    %v775 = vunpack.c.l.b16 %v224
    %v776 = vunpack.c.h.b16 %v224
    %v777 = vunpack.c.l.b16 %v225
    %v778 = vunpack.c.h.b16 %v225
    %v779 = vunpack.c.l.b16 %v226
    %v780 = vunpack.c.h.b16 %v226
    %v781 = vunpack.c.l.b16 %v227
    %v782 = vunpack.c.h.b16 %v227
    %v783 = vunpack.c.l.b16 %v228
    %v784 = vunpack.c.h.b16 %v228
    %v785 = vunpack.c.l.b16 %v229
    %v786 = vunpack.c.h.b16 %v229
    %v787 = vunpack.c.l.b16 %v230
    %v788 = vunpack.c.h.b16 %v230
    %v789 = vunpack.c.l.b16 %v231
    %v790 = vunpack.c.h.b16 %v231
    %v791 = vunpack.c.l.b16 %v232
    %v792 = vunpack.c.h.b16 %v232
    %v793 = vunpack.c.l.b16 %v233
    %v794 = vunpack.c.h.b16 %v233
    %v795 = vunpack.c.l.b16 %v234
    %v796 = vunpack.c.h.b16 %v234
    %v797 = vunpack.c.l.b16 %v235
    %v798 = vunpack.c.h.b16 %v235
    %v799 = vunpack.c.l.b16 %v236
    %v800 = vunpack.c.h.b16 %v236
    %v801 = vunpack.c.l.b16 %v237
    %v802 = vunpack.c.h.b16 %v237
    %v803 = vunpack.c.l.b16 %v238
    %v804 = vunpack.c.h.b16 %v238
    %v805 = vunpack.c.l.b16 %v239
    %v806 = vunpack.c.h.b16 %v239
    %v807 = vunpack.c.l.b16 %v240
    %v808 = vunpack.c.h.b16 %v240
    %v809 = vunpack.c.l.b16 %v241
    %v810 = vunpack.c.h.b16 %v241
    %v811 = vunpack.c.l.b16 %v242
    %v812 = vunpack.c.h.b16 %v242
    %v813 = vunpack.c.l.b16 %v243
    %v814 = vunpack.c.h.b16 %v243
    %v815 = vunpack.c.l.b16 %v244
    %v816 = vunpack.c.h.b16 %v244
    %v817 = vunpack.c.l.b16 %v245
    %v818 = vunpack.c.h.b16 %v245
    %v819 = vunpack.c.l.b16 %v246
    %v820 = vunpack.c.h.b16 %v246
    %v821 = vunpack.c.l.b16 %v247
    %v822 = vunpack.c.h.b16 %v247
    %v823 = vunpack.c.l.b16 %v248
    %v824 = vunpack.c.h.b16 %v248
    %v825 = vunpack.c.l.b16 %v249
    %v826 = vunpack.c.h.b16 %v249
    %v827 = vunpack.c.l.b16 %v250
    %v828 = vunpack.c.h.b16 %v250
    %v829 = vunpack.c.l.b16 %v251
    %v830 = vunpack.c.h.b16 %v251
    %v831 = vunpack.c.l.b16 %v252
    %v832 = vunpack.c.h.b16 %v252
    %v833 = vunpack.c.l.b16 %v253
    %v834 = vunpack.c.h.b16 %v253
    %v835 = vunpack.c.l.b16 %v254
    %v836 = vunpack.c.h.b16 %v254
    %v837 = vunpack.c.l.b16 %v255
    %v838 = vunpack.c.h.b16 %v255
    %v839 = vunpack.c.l.b16 %v256
    %v840 = vunpack.c.h.b16 %v256
    %v841 = vunpack.c.l.b16 %v257
    %v842 = vunpack.c.h.b16 %v257
    %v843 = vunpack.c.l.b16 %v258
    %v844 = vunpack.c.h.b16 %v258
    %v845 = vunpack.c.l.b16 %v259
    %v846 = vunpack.c.h.b16 %v259
    %v847 = vunpack.c.l.b16 %v260
    %v848 = vunpack.c.h.b16 %v260
    %v849 = vunpack.c.l.b16 %v261
    %v850 = vunpack.c.h.b16 %v261
    %v851 = vunpack.c.l.b16 %v262
    %v852 = vunpack.c.h.b16 %v262
    %v853 = vunpack.c.l.b16 %v263
    %v854 = vunpack.c.h.b16 %v263
    %v855 = vunpack.c.l.b16 %v264
    %v856 = vunpack.c.h.b16 %v264
    %v857 = vunpack.c.l.b16 %v265
    %v858 = vunpack.c.h.b16 %v265
    %v859 = vunpack.c.l.b16 %v266
    %v860 = vunpack.c.h.b16 %v266
    %v861 = vunpack.c.l.b16 %v267
    %v862 = vunpack.c.h.b16 %v267
    %v863 = vunpack.c.l.b16 %v268
    %v864 = vunpack.c.h.b16 %v268
    %v865 = vunpack.c.l.b16 %v269
    %v866 = vunpack.c.h.b16 %v269
    %v867 = vunpack.c.l.b16 %v270
    %v868 = vunpack.c.h.b16 %v270
    %v869 = vunpack.c.l.b16 %v271
    %v870 = vunpack.c.h.b16 %v271
    %v871 = vunpack.c.l.b16 %v272
    %v872 = vunpack.c.h.b16 %v272
    %v873 = vunpack.c.l.b16 %v273
    %v874 = vunpack.c.h.b16 %v273
    %v875 = vunpack.c.l.b16 %v274
    %v876 = vunpack.c.h.b16 %v274
    %v877 = vunpack.c.l.b16 %v275
    %v878 = vunpack.c.h.b16 %v275
    %v879 = vunpack.c.l.b16 %v276
    %v880 = vunpack.c.h.b16 %v276
    %v881 = vunpack.c.l.b16 %v277
    %v882 = vunpack.c.h.b16 %v277
    %v883 = vunpack.c.l.b16 %v278
    %v884 = vunpack.c.h.b16 %v278
    %v885 = vunpack.c.l.b16 %v279
    %v886 = vunpack.c.h.b16 %v279
    %v887 = vunpack.c.l.b16 %v280
    %v888 = vunpack.c.h.b16 %v280
    %v889 = vunpack.c.l.b16 %v281
    %v890 = vunpack.c.h.b16 %v281
    %v891 = vunpack.c.l.b16 %v282
    %v892 = vunpack.c.h.b16 %v282
    %v893 = vunpack.c.l.b16 %v283
    %v894 = vunpack.c.h.b16 %v283
    %v895 = vunpack.c.l.b16 %v284
    %v896 = vunpack.c.h.b16 %v284
    %v897 = vunpack.c.l.b16 %v285
    %v898 = vunpack.c.h.b16 %v285
    %v899 = vunpack.c.l.b16 %v286
    %v900 = vunpack.c.h.b16 %v286
    %v901 = vunpack.c.l.b16 %v287
    %v902 = vunpack.c.h.b16 %v287
    %v903 = vunpack.c.l.b16 %v288
    %v904 = vunpack.c.h.b16 %v288
    %v905 = vunpack.c.l.b16 %v289
    %v906 = vunpack.c.h.b16 %v289
    %v907 = vunpack.c.l.b16 %v290
    %v908 = vunpack.c.h.b16 %v290
    %v909 = vunpack.c.l.b16 %v291
    %v910 = vunpack.c.h.b16 %v291
    %v911 = vpack.c.b16 %v531, %v527
    %v912 = vpack.c.b16 %v532, %v528
    %v913 = vpack.c.b16 %v533, %v529
    %v914 = vpack.c.b16 %v534, %v530
    %v915 = vpack.c.b16 %v539, %v535
    %v916 = vpack.c.b16 %v540, %v536
    %v917 = vpack.c.b16 %v541, %v537
    %v918 = vpack.c.b16 %v542, %v538
    %v919 = vpack.c.b16 %v547, %v543
    %v920 = vpack.c.b16 %v548, %v544
    %v921 = vpack.c.b16 %v549, %v545
    %v922 = vpack.c.b16 %v550, %v546
    %v923 = vpack.c.b16 %v555, %v551
    %v924 = vpack.c.b16 %v556, %v552
    %v925 = vpack.c.b16 %v557, %v553
    %v926 = vpack.c.b16 %v558, %v554
    %v927 = vpack.c.b16 %v563, %v559
    %v928 = vpack.c.b16 %v564, %v560
    %v929 = vpack.c.b16 %v565, %v561
    %v930 = vpack.c.b16 %v566, %v562
    %v931 = vpack.c.b16 %v571, %v567
    %v932 = vpack.c.b16 %v572, %v568
    %v933 = vpack.c.b16 %v573, %v569
    %v934 = vpack.c.b16 %v574, %v570
    %v935 = vpack.c.b16 %v579, %v575
    %v936 = vpack.c.b16 %v580, %v576
    %v937 = vpack.c.b16 %v581, %v577
    %v938 = vpack.c.b16 %v582, %v578
    %v939 = vpack.c.b16 %v587, %v583
    %v940 = vpack.c.b16 %v588, %v584
    %v941 = vpack.c.b16 %v589, %v585
    %v942 = vpack.c.b16 %v590, %v586
    %v943 = vpack.c.b16 %v595, %v591
    %v944 = vpack.c.b16 %v596, %v592
    %v945 = vpack.c.b16 %v597, %v593
    %v946 = vpack.c.b16 %v598, %v594
    %v947 = vpack.c.b16 %v603, %v599
    %v948 = vpack.c.b16 %v604, %v600
    %v949 = vpack.c.b16 %v605, %v601
    %v950 = vpack.c.b16 %v606, %v602
    %v951 = vpack.c.b16 %v611, %v607
    %v952 = vpack.c.b16 %v612, %v608
    %v953 = vpack.c.b16 %v613, %v609
    %v954 = vpack.c.b16 %v614, %v610
    %v955 = vpack.c.b16 %v619, %v615
    %v956 = vpack.c.b16 %v620, %v616
    %v957 = vpack.c.b16 %v621, %v617
    %v958 = vpack.c.b16 %v622, %v618
    %v959 = vpack.c.b16 %v627, %v623
    %v960 = vpack.c.b16 %v628, %v624
    %v961 = vpack.c.b16 %v629, %v625
    %v962 = vpack.c.b16 %v630, %v626
    %v963 = vpack.c.b16 %v635, %v631
    %v964 = vpack.c.b16 %v636, %v632
    %v965 = vpack.c.b16 %v637, %v633
    %v966 = vpack.c.b16 %v638, %v634
    %v967 = vpack.c.b16 %v643, %v639
    %v968 = vpack.c.b16 %v644, %v640
    %v969 = vpack.c.b16 %v645, %v641
    %v970 = vpack.c.b16 %v646, %v642
    %v971 = vpack.c.b16 %v651, %v647
    %v972 = vpack.c.b16 %v652, %v648
    %v973 = vpack.c.b16 %v653, %v649
    %v974 = vpack.c.b16 %v654, %v650
    %v975 = vpack.c.b16 %v659, %v655
    %v976 = vpack.c.b16 %v660, %v656
    %v977 = vpack.c.b16 %v661, %v657
    %v978 = vpack.c.b16 %v662, %v658
    %v979 = vpack.c.b16 %v667, %v663
    %v980 = vpack.c.b16 %v668, %v664
    %v981 = vpack.c.b16 %v669, %v665
    %v982 = vpack.c.b16 %v670, %v666
    %v983 = vpack.c.b16 %v675, %v671
    %v984 = vpack.c.b16 %v676, %v672
    %v985 = vpack.c.b16 %v677, %v673
    %v986 = vpack.c.b16 %v678, %v674
    %v987 = vpack.c.b16 %v683, %v679
    %v988 = vpack.c.b16 %v684, %v680
    %v989 = vpack.c.b16 %v685, %v681
    %v990 = vpack.c.b16 %v686, %v682
    %v991 = vpack.c.b16 %v691, %v687
    %v992 = vpack.c.b16 %v692, %v688
    %v993 = vpack.c.b16 %v693, %v689
    %v994 = vpack.c.b16 %v694, %v690
    %v995 = vpack.c.b16 %v699, %v695
    %v996 = vpack.c.b16 %v700, %v696
    %v997 = vpack.c.b16 %v701, %v697
    %v998 = vpack.c.b16 %v702, %v698
    %v999 = vpack.c.b16 %v707, %v703
    %v1000 = vpack.c.b16 %v708, %v704
    %v1001 = vpack.c.b16 %v709, %v705
    %v1002 = vpack.c.b16 %v710, %v706
    %v1003 = vpack.c.b16 %v715, %v711
    %v1004 = vpack.c.b16 %v716, %v712
    %v1005 = vpack.c.b16 %v717, %v713
    %v1006 = vpack.c.b16 %v718, %v714
    %v1007 = vpack.c.b16 %v723, %v719
    %v1008 = vpack.c.b16 %v724, %v720
    %v1009 = vpack.c.b16 %v725, %v721
    %v1010 = vpack.c.b16 %v726, %v722
    %v1011 = vpack.c.b16 %v731, %v727
    %v1012 = vpack.c.b16 %v732, %v728
    %v1013 = vpack.c.b16 %v733, %v729
    %v1014 = vpack.c.b16 %v734, %v730
    %v1015 = vpack.c.b16 %v739, %v735
    %v1016 = vpack.c.b16 %v740, %v736
    %v1017 = vpack.c.b16 %v741, %v737
    %v1018 = vpack.c.b16 %v742, %v738
    %v1019 = vpack.c.b16 %v747, %v743
    %v1020 = vpack.c.b16 %v748, %v744
    %v1021 = vpack.c.b16 %v749, %v745
    %v1022 = vpack.c.b16 %v750, %v746
    %v1023 = vpack.c.b16 %v755, %v751
    %v1024 = vpack.c.b16 %v756, %v752
    %v1025 = vpack.c.b16 %v757, %v753
    %v1026 = vpack.c.b16 %v758, %v754
    %v1027 = vpack.c.b16 %v763, %v759
    %v1028 = vpack.c.b16 %v764, %v760
    %v1029 = vpack.c.b16 %v765, %v761
    %v1030 = vpack.c.b16 %v766, %v762
    %v1031 = vpack.c.b16 %v771, %v767
    %v1032 = vpack.c.b16 %v772, %v768
    %v1033 = vpack.c.b16 %v773, %v769
    %v1034 = vpack.c.b16 %v774, %v770
    %v1035 = vpack.c.b16 %v779, %v775
    %v1036 = vpack.c.b16 %v780, %v776
    %v1037 = vpack.c.b16 %v781, %v777
    %v1038 = vpack.c.b16 %v782, %v778
    %v1039 = vpack.c.b16 %v787, %v783
    %v1040 = vpack.c.b16 %v788, %v784
    %v1041 = vpack.c.b16 %v789, %v785
    %v1042 = vpack.c.b16 %v790, %v786
    %v1043 = vpack.c.b16 %v795, %v791
    %v1044 = vpack.c.b16 %v796, %v792
    %v1045 = vpack.c.b16 %v797, %v793
    %v1046 = vpack.c.b16 %v798, %v794
    %v1047 = vpack.c.b16 %v803, %v799
    %v1048 = vpack.c.b16 %v804, %v800
    %v1049 = vpack.c.b16 %v805, %v801
    %v1050 = vpack.c.b16 %v806, %v802
    %v1051 = vpack.c.b16 %v811, %v807
    %v1052 = vpack.c.b16 %v812, %v808
    %v1053 = vpack.c.b16 %v813, %v809
    %v1054 = vpack.c.b16 %v814, %v810
    %v1055 = vpack.c.b16 %v819, %v815
    %v1056 = vpack.c.b16 %v820, %v816
    %v1057 = vpack.c.b16 %v821, %v817
    %v1058 = vpack.c.b16 %v822, %v818
    %v1059 = vpack.c.b16 %v827, %v823
    %v1060 = vpack.c.b16 %v828, %v824
    %v1061 = vpack.c.b16 %v829, %v825
    %v1062 = vpack.c.b16 %v830, %v826
    %v1063 = vpack.c.b16 %v835, %v831
    %v1064 = vpack.c.b16 %v836, %v832
    %v1065 = vpack.c.b16 %v837, %v833
    %v1066 = vpack.c.b16 %v838, %v834
    %v1067 = vpack.c.b16 %v843, %v839
    %v1068 = vpack.c.b16 %v844, %v840
    %v1069 = vpack.c.b16 %v845, %v841
    %v1070 = vpack.c.b16 %v846, %v842
    %v1071 = vpack.c.b16 %v851, %v847
    %v1072 = vpack.c.b16 %v852, %v848
    %v1073 = vpack.c.b16 %v853, %v849
    %v1074 = vpack.c.b16 %v854, %v850
    %v1075 = vpack.c.b16 %v859, %v855
    %v1076 = vpack.c.b16 %v860, %v856
    %v1077 = vpack.c.b16 %v861, %v857
    %v1078 = vpack.c.b16 %v862, %v858
    %v1079 = vpack.c.b16 %v867, %v863
    %v1080 = vpack.c.b16 %v868, %v864
    %v1081 = vpack.c.b16 %v869, %v865
    %v1082 = vpack.c.b16 %v870, %v866
    %v1083 = vpack.c.b16 %v875, %v871
    %v1084 = vpack.c.b16 %v876, %v872
    %v1085 = vpack.c.b16 %v877, %v873
    %v1086 = vpack.c.b16 %v878, %v874
    %v1087 = vpack.c.b16 %v883, %v879
    %v1088 = vpack.c.b16 %v884, %v880
    %v1089 = vpack.c.b16 %v885, %v881
    %v1090 = vpack.c.b16 %v886, %v882
    %v1091 = vpack.c.b16 %v891, %v887
    %v1092 = vpack.c.b16 %v892, %v888
    %v1093 = vpack.c.b16 %v893, %v889
    %v1094 = vpack.c.b16 %v894, %v890
    %v1095 = vpack.c.b16 %v899, %v895
    %v1096 = vpack.c.b16 %v900, %v896
    %v1097 = vpack.c.b16 %v901, %v897
    %v1098 = vpack.c.b16 %v902, %v898
    %v1099 = vpack.c.b16 %v907, %v903
    %v1100 = vpack.c.b16 %v908, %v904
    %v1101 = vpack.c.b16 %v909, %v905
    %v1102 = vpack.c.b16 %v910, %v906
    %1295 = vmatprep.subr.bf16.mxu0 %v940
    %1296 = vmatpush1.bf16.msra.mxu0 %v939
    %1297 = vmatprep.subr.bf16.mxu0 %v936
    %1298 = vmatpush1.bf16.msra.mxu0 %v935
    %1299 = vmatprep.subr.bf16.mxu0 %v932
    %1300 = vmatpush1.bf16.msra.mxu0 %v931
    %1301 = vmatprep.subr.bf16.mxu0 %v928
    %1302 = vmatpush1.bf16.msra.mxu0 %v927
    %1303 = vmatprep.subr.bf16.mxu0 %v924
    %1304 = vmatpush1.bf16.msra.mxu0 %v923
    %1305 = vmatprep.subr.bf16.mxu0 %v920
    %1306 = vmatpush1.bf16.msra.mxu0 %v919
    %1307 = vmatprep.subr.bf16.mxu0 %v916
    %1308 = vmatpush1.bf16.msra.mxu0 %v915
    %1309 = vmatprep.subr.bf16.mxu0 %v912
    %1310 = vmatpush1.bf16.msra.mxu0 %v911
    %1311 = vmatprep.subr.bf16.mxu0 %v972
    %1312 = vmatpush2.bf16.msra.mxu0 %v971
    %1313 = vmatprep.subr.bf16.mxu0 %v968
    %1314 = vmatpush2.bf16.msra.mxu0 %v967
    %1315 = vmatprep.subr.bf16.mxu0 %v964
    %1316 = vmatpush2.bf16.msra.mxu0 %v963
    %1317 = vmatprep.subr.bf16.mxu0 %v960
    %1318 = vmatpush2.bf16.msra.mxu0 %v959
    %1319 = vmatprep.subr.bf16.mxu0 %v956
    %1320 = vmatpush2.bf16.msra.mxu0 %v955
    %1321 = vmatprep.subr.bf16.mxu0 %v952
    %1322 = vmatpush2.bf16.msra.mxu0 %v951
    %1323 = vmatprep.subr.bf16.mxu0 %v948
    %1324 = vmatpush2.bf16.msra.mxu0 %v947
    %1325 = vmatprep.subr.bf16.mxu0 %v944
    %1326 = vmatpush2.bf16.msra.mxu0 %v943
    %1327 = vmatprep.mubr.bf16.mxu0 %v324
    %1328 = vmatmul.mubr.bf16.gmra.mxu0 %v323
    %v1329 = vpop.f32.mrf.mxu0
    %v1330 = vadd.f32 %v297, %v1329
    %v1331 = vpop.f32.mrf.mxu0
    %v1332 = vadd.f32 %v301, %v1331
    %v1333 = vpop.f32.mrf.mxu0
    %v1334 = vpop.f32.mrf.mxu0
    %1335 = vdwg.mxu0
    %1336 = vmatprep.subr.bf16.mxu0 %v1004
    %1337 = vmatpush1.bf16.msra.mxu0 %v1003
    %1338 = vmatprep.subr.bf16.mxu0 %v1000
    %1339 = vmatpush1.bf16.msra.mxu0 %v999
    %1340 = vmatprep.subr.bf16.mxu0 %v996
    %1341 = vmatpush1.bf16.msra.mxu0 %v995
    %1342 = vmatprep.subr.bf16.mxu0 %v992
    %1343 = vmatpush1.bf16.msra.mxu0 %v991
    %1344 = vmatprep.subr.bf16.mxu0 %v988
    %1345 = vmatpush1.bf16.msra.mxu0 %v987
    %1346 = vmatprep.subr.bf16.mxu0 %v984
    %1347 = vmatpush1.bf16.msra.mxu0 %v983
    %1348 = vmatprep.subr.bf16.mxu0 %v980
    %1349 = vmatpush1.bf16.msra.mxu0 %v979
    %1350 = vmatprep.subr.bf16.mxu0 %v976
    %1351 = vmatpush1.bf16.msra.mxu0 %v975
    %1352 = vmatprep.subr.bf16.mxu0 %v1036
    %1353 = vmatpush2.bf16.msra.mxu0 %v1035
    %1354 = vmatprep.subr.bf16.mxu0 %v1032
    %1355 = vmatpush2.bf16.msra.mxu0 %v1031
    %1356 = vmatprep.subr.bf16.mxu0 %v1028
    %1357 = vmatpush2.bf16.msra.mxu0 %v1027
    %1358 = vmatprep.subr.bf16.mxu0 %v1024
    %1359 = vmatpush2.bf16.msra.mxu0 %v1023
    %1360 = vmatprep.subr.bf16.mxu0 %v1020
    %1361 = vmatpush2.bf16.msra.mxu0 %v1019
    %1362 = vmatprep.subr.bf16.mxu0 %v1016
    %1363 = vmatpush2.bf16.msra.mxu0 %v1015
    %1364 = vmatprep.subr.bf16.mxu0 %v1012
    %1365 = vmatpush2.bf16.msra.mxu0 %v1011
    %1366 = vmatprep.subr.bf16.mxu0 %v1008
    %1367 = vmatpush2.bf16.msra.mxu0 %v1007
    %1368 = vmatprep.mubr.bf16.mxu0 %v326
    %1369 = vmatmul.mubr.bf16.gmra.mxu0 %v325
    %v1370 = vpop.f32.mrf.mxu0
    %v1371 = vadd.f32 %v1330, %v1370
    %v1372 = vpop.f32.mrf.mxu0
    %v1373 = vadd.f32 %v1332, %v1372
    %v1374 = vpop.f32.mrf.mxu0
    %v1375 = vpop.f32.mrf.mxu0
    %1376 = vdwg.mxu0
    %1377 = vmatprep.subr.bf16.mxu0 %v1068
    %1378 = vmatpush1.bf16.msra.mxu0 %v1067
    %1379 = vmatprep.subr.bf16.mxu0 %v1064
    %1380 = vmatpush1.bf16.msra.mxu0 %v1063
    %1381 = vmatprep.subr.bf16.mxu0 %v1060
    %1382 = vmatpush1.bf16.msra.mxu0 %v1059
    %1383 = vmatprep.subr.bf16.mxu0 %v1056
    %1384 = vmatpush1.bf16.msra.mxu0 %v1055
    %1385 = vmatprep.subr.bf16.mxu0 %v1052
    %1386 = vmatpush1.bf16.msra.mxu0 %v1051
    %1387 = vmatprep.subr.bf16.mxu0 %v1048
    %1388 = vmatpush1.bf16.msra.mxu0 %v1047
    %1389 = vmatprep.subr.bf16.mxu0 %v1044
    %1390 = vmatpush1.bf16.msra.mxu0 %v1043
    %1391 = vmatprep.subr.bf16.mxu0 %v1040
    %1392 = vmatpush1.bf16.msra.mxu0 %v1039
    %1393 = vmatprep.subr.bf16.mxu0 %v1100
    %1394 = vmatpush2.bf16.msra.mxu0 %v1099
    %1395 = vmatprep.subr.bf16.mxu0 %v1096
    %1396 = vmatpush2.bf16.msra.mxu0 %v1095
    %1397 = vmatprep.subr.bf16.mxu0 %v1092
    %1398 = vmatpush2.bf16.msra.mxu0 %v1091
    %1399 = vmatprep.subr.bf16.mxu0 %v1088
    %1400 = vmatpush2.bf16.msra.mxu0 %v1087
    %1401 = vmatprep.subr.bf16.mxu0 %v1084
    %1402 = vmatpush2.bf16.msra.mxu0 %v1083
    %1403 = vmatprep.subr.bf16.mxu0 %v1080
    %1404 = vmatpush2.bf16.msra.mxu0 %v1079
    %1405 = vmatprep.subr.bf16.mxu0 %v1076
    %1406 = vmatpush2.bf16.msra.mxu0 %v1075
    %1407 = vmatprep.subr.bf16.mxu0 %v1072
    %1408 = vmatpush2.bf16.msra.mxu0 %v1071
    %1409 = vmatprep.mubr.bf16.mxu0 %v328
    %1410 = vmatmul.mubr.bf16.gmra.mxu0 %v327
    %v1411 = vpop.f32.mrf.mxu0
    %v1412 = vadd.f32 %v1371, %v1411
    %v1413 = vpop.f32.mrf.mxu0
    %v1414 = vadd.f32 %v1373, %v1413
    %v1415 = vpop.f32.mrf.mxu0
    %v1416 = vpop.f32.mrf.mxu0
    %1417 = vdwg.mxu0
    %1418 = vmatprep.subr.bf16.mxu0 %v942
    %1419 = vmatpush1.bf16.msra.mxu0 %v941
    %1420 = vmatprep.subr.bf16.mxu0 %v938
    %1421 = vmatpush1.bf16.msra.mxu0 %v937
    %1422 = vmatprep.subr.bf16.mxu0 %v934
    %1423 = vmatpush1.bf16.msra.mxu0 %v933
    %1424 = vmatprep.subr.bf16.mxu0 %v930
    %1425 = vmatpush1.bf16.msra.mxu0 %v929
    %1426 = vmatprep.subr.bf16.mxu0 %v926
    %1427 = vmatpush1.bf16.msra.mxu0 %v925
    %1428 = vmatprep.subr.bf16.mxu0 %v922
    %1429 = vmatpush1.bf16.msra.mxu0 %v921
    %1430 = vmatprep.subr.bf16.mxu0 %v918
    %1431 = vmatpush1.bf16.msra.mxu0 %v917
    %1432 = vmatprep.subr.bf16.mxu0 %v914
    %1433 = vmatpush1.bf16.msra.mxu0 %v913
    %1434 = vmatprep.subr.bf16.mxu0 %v974
    %1435 = vmatpush2.bf16.msra.mxu0 %v973
    %1436 = vmatprep.subr.bf16.mxu0 %v970
    %1437 = vmatpush2.bf16.msra.mxu0 %v969
    %1438 = vmatprep.subr.bf16.mxu0 %v966
    %1439 = vmatpush2.bf16.msra.mxu0 %v965
    %1440 = vmatprep.subr.bf16.mxu0 %v962
    %1441 = vmatpush2.bf16.msra.mxu0 %v961
    %1442 = vmatprep.subr.bf16.mxu0 %v958
    %1443 = vmatpush2.bf16.msra.mxu0 %v957
    %1444 = vmatprep.subr.bf16.mxu0 %v954
    %1445 = vmatpush2.bf16.msra.mxu0 %v953
    %1446 = vmatprep.subr.bf16.mxu0 %v950
    %1447 = vmatpush2.bf16.msra.mxu0 %v949
    %1448 = vmatprep.subr.bf16.mxu0 %v946
    %1449 = vmatpush2.bf16.msra.mxu0 %v945
    %1450 = vmatprep.mubr.bf16.mxu0 %v324
    %1451 = vmatmul.mubr.bf16.gmra.mxu0 %v323
    %v1452 = vpop.f32.mrf.mxu0
    %v1453 = vadd.f32 %v305, %v1452
    %v1454 = vpop.f32.mrf.mxu0
    %v1455 = vadd.f32 %v309, %v1454
    %v1456 = vpop.f32.mrf.mxu0
    %v1457 = vpop.f32.mrf.mxu0
    %1458 = vdwg.mxu0
    %1459 = vmatprep.subr.bf16.mxu0 %v1006
    %1460 = vmatpush1.bf16.msra.mxu0 %v1005
    %1461 = vmatprep.subr.bf16.mxu0 %v1002
    %1462 = vmatpush1.bf16.msra.mxu0 %v1001
    %1463 = vmatprep.subr.bf16.mxu0 %v998
    %1464 = vmatpush1.bf16.msra.mxu0 %v997
    %1465 = vmatprep.subr.bf16.mxu0 %v994
    %1466 = vmatpush1.bf16.msra.mxu0 %v993
    %1467 = vmatprep.subr.bf16.mxu0 %v990
    %1468 = vmatpush1.bf16.msra.mxu0 %v989
    %1469 = vmatprep.subr.bf16.mxu0 %v986
    %1470 = vmatpush1.bf16.msra.mxu0 %v985
    %1471 = vmatprep.subr.bf16.mxu0 %v982
    %1472 = vmatpush1.bf16.msra.mxu0 %v981
    %1473 = vmatprep.subr.bf16.mxu0 %v978
    %1474 = vmatpush1.bf16.msra.mxu0 %v977
    %1475 = vmatprep.subr.bf16.mxu0 %v1038
    %1476 = vmatpush2.bf16.msra.mxu0 %v1037
    %1477 = vmatprep.subr.bf16.mxu0 %v1034
    %1478 = vmatpush2.bf16.msra.mxu0 %v1033
    %1479 = vmatprep.subr.bf16.mxu0 %v1030
    %1480 = vmatpush2.bf16.msra.mxu0 %v1029
    %1481 = vmatprep.subr.bf16.mxu0 %v1026
    %1482 = vmatpush2.bf16.msra.mxu0 %v1025
    %1483 = vmatprep.subr.bf16.mxu0 %v1022
    %1484 = vmatpush2.bf16.msra.mxu0 %v1021
    %1485 = vmatprep.subr.bf16.mxu0 %v1018
    %1486 = vmatpush2.bf16.msra.mxu0 %v1017
    %1487 = vmatprep.subr.bf16.mxu0 %v1014
    %1488 = vmatpush2.bf16.msra.mxu0 %v1013
    %1489 = vmatprep.subr.bf16.mxu0 %v1010
    %1490 = vmatpush2.bf16.msra.mxu0 %v1009
    %1491 = vmatprep.mubr.bf16.mxu0 %v326
    %1492 = vmatmul.mubr.bf16.gmra.mxu0 %v325
    %v1493 = vpop.f32.mrf.mxu0
    %v1494 = vadd.f32 %v1453, %v1493
    %v1495 = vpop.f32.mrf.mxu0
    %v1496 = vadd.f32 %v1455, %v1495
    %v1497 = vpop.f32.mrf.mxu0
    %v1498 = vpop.f32.mrf.mxu0
    %1499 = vdwg.mxu0
    %1500 = vmatprep.subr.bf16.mxu0 %v1070
    %1501 = vmatpush1.bf16.msra.mxu0 %v1069
    %1502 = vmatprep.subr.bf16.mxu0 %v1066
    %1503 = vmatpush1.bf16.msra.mxu0 %v1065
    %1504 = vmatprep.subr.bf16.mxu0 %v1062
    %1505 = vmatpush1.bf16.msra.mxu0 %v1061
    %1506 = vmatprep.subr.bf16.mxu0 %v1058
    %1507 = vmatpush1.bf16.msra.mxu0 %v1057
    %1508 = vmatprep.subr.bf16.mxu0 %v1054
    %1509 = vmatpush1.bf16.msra.mxu0 %v1053
    %1510 = vmatprep.subr.bf16.mxu0 %v1050
    %1511 = vmatpush1.bf16.msra.mxu0 %v1049
    %1512 = vmatprep.subr.bf16.mxu0 %v1046
    %1513 = vmatpush1.bf16.msra.mxu0 %v1045
    %1514 = vmatprep.subr.bf16.mxu0 %v1042
    %1515 = vmatpush1.bf16.msra.mxu0 %v1041
    %1516 = vmatprep.subr.bf16.mxu0 %v1102
    %1517 = vmatpush2.bf16.msra.mxu0 %v1101
    %1518 = vmatprep.subr.bf16.mxu0 %v1098
    %1519 = vmatpush2.bf16.msra.mxu0 %v1097
    %1520 = vmatprep.subr.bf16.mxu0 %v1094
    %1521 = vmatpush2.bf16.msra.mxu0 %v1093
    %1522 = vmatprep.subr.bf16.mxu0 %v1090
    %1523 = vmatpush2.bf16.msra.mxu0 %v1089
    %1524 = vmatprep.subr.bf16.mxu0 %v1086
    %1525 = vmatpush2.bf16.msra.mxu0 %v1085
    %1526 = vmatprep.subr.bf16.mxu0 %v1082
    %1527 = vmatpush2.bf16.msra.mxu0 %v1081
    %1528 = vmatprep.subr.bf16.mxu0 %v1078
    %1529 = vmatpush2.bf16.msra.mxu0 %v1077
    %1530 = vmatprep.subr.bf16.mxu0 %v1074
    %1531 = vmatpush2.bf16.msra.mxu0 %v1073
    %1532 = vmatprep.mubr.bf16.mxu0 %v328
    %1533 = vmatmul.mubr.bf16.gmra.mxu0 %v327
    %v1534 = vpop.f32.mrf.mxu0
    %v1535 = vadd.f32 %v1494, %v1534
    %v1536 = vpop.f32.mrf.mxu0
    %v1537 = vadd.f32 %v1496, %v1536
    %v1538 = vpop.f32.mrf.mxu0
    %v1539 = vpop.f32.mrf.mxu0
    %1540 = vdwg.mxu0
    %v1541 = vld [vmem:[%s1] sm:$0xff]
    %v1542 = vld [vmem:[%s1 + $0x8] sm:$0xff]
    %v1543 = vld [vmem:[%s1 + $0x10] sm:$0xff]
    %v1547 = vunpack.c.l.b16 %v1541
    %v1548 = vunpack.c.h.b16 %v1541
    %v1549 = vunpack.c.l.b16 %v1542
    %v1550 = vunpack.c.h.b16 %v1542
    %v1551 = vunpack.c.l.b16 %v1543
    %v1552 = vunpack.c.h.b16 %v1543
    %v1553 = vpack.c.b16 %v1547, %v1547
    %v1554 = vpack.c.b16 %v1548, %v1548
    %v1555 = vpack.c.b16 %v1549, %v1549
    %v1556 = vpack.c.b16 %v1550, %v1550
    %v1557 = vpack.c.b16 %v1551, %v1551
    %v1558 = vpack.c.b16 %v1552, %v1552
    %1565 = vmatprep.subr.bf16.mxu0 %v940
    %1566 = vmatpush1.bf16.msra.mxu0 %v939
    %1567 = vmatprep.subr.bf16.mxu0 %v936
    %1568 = vmatpush1.bf16.msra.mxu0 %v935
    %1569 = vmatprep.subr.bf16.mxu0 %v932
    %1570 = vmatpush1.bf16.msra.mxu0 %v931
    %1571 = vmatprep.subr.bf16.mxu0 %v928
    %1572 = vmatpush1.bf16.msra.mxu0 %v927
    %1573 = vmatprep.subr.bf16.mxu0 %v924
    %1574 = vmatpush1.bf16.msra.mxu0 %v923
    %1575 = vmatprep.subr.bf16.mxu0 %v920
    %1576 = vmatpush1.bf16.msra.mxu0 %v919
    %1577 = vmatprep.subr.bf16.mxu0 %v916
    %1578 = vmatpush1.bf16.msra.mxu0 %v915
    %1579 = vmatprep.subr.bf16.mxu0 %v912
    %1580 = vmatpush1.bf16.msra.mxu0 %v911
    %1581 = vmatprep.subr.bf16.mxu0 %v972
    %1582 = vmatpush2.bf16.msra.mxu0 %v971
    %1583 = vmatprep.subr.bf16.mxu0 %v968
    %1584 = vmatpush2.bf16.msra.mxu0 %v967
    %1585 = vmatprep.subr.bf16.mxu0 %v964
    %1586 = vmatpush2.bf16.msra.mxu0 %v963
    %1587 = vmatprep.subr.bf16.mxu0 %v960
    %1588 = vmatpush2.bf16.msra.mxu0 %v959
    %1589 = vmatprep.subr.bf16.mxu0 %v956
    %1590 = vmatpush2.bf16.msra.mxu0 %v955
    %1591 = vmatprep.subr.bf16.mxu0 %v952
    %1592 = vmatpush2.bf16.msra.mxu0 %v951
    %1593 = vmatprep.subr.bf16.mxu0 %v948
    %1594 = vmatpush2.bf16.msra.mxu0 %v947
    %1595 = vmatprep.subr.bf16.mxu0 %v944
    %1596 = vmatpush2.bf16.msra.mxu0 %v943
    %1597 = vmatprep.mubr.bf16.mxu0 %v1554
    %1598 = vmatmul.mubr.bf16.gmra.mxu0 %v1553
    %v1599 = vpop.f32.mrf.mxu0
    %v1600 = vadd.f32 %v297, %v1599
    %v1601 = vpop.f32.mrf.mxu0
    %v1602 = vadd.f32 %v301, %v1601
    %v1603 = vpop.f32.mrf.mxu0
    %v1604 = vpop.f32.mrf.mxu0
    %1605 = vdwg.mxu0
    %1606 = vmatprep.subr.bf16.mxu0 %v1004
    %1607 = vmatpush1.bf16.msra.mxu0 %v1003
    %1608 = vmatprep.subr.bf16.mxu0 %v1000
    %1609 = vmatpush1.bf16.msra.mxu0 %v999
    %1610 = vmatprep.subr.bf16.mxu0 %v996
    %1611 = vmatpush1.bf16.msra.mxu0 %v995
    %1612 = vmatprep.subr.bf16.mxu0 %v992
    %1613 = vmatpush1.bf16.msra.mxu0 %v991
    %1614 = vmatprep.subr.bf16.mxu0 %v988
    %1615 = vmatpush1.bf16.msra.mxu0 %v987
    %1616 = vmatprep.subr.bf16.mxu0 %v984
    %1617 = vmatpush1.bf16.msra.mxu0 %v983
    %1618 = vmatprep.subr.bf16.mxu0 %v980
    %1619 = vmatpush1.bf16.msra.mxu0 %v979
    %1620 = vmatprep.subr.bf16.mxu0 %v976
    %1621 = vmatpush1.bf16.msra.mxu0 %v975
    %1622 = vmatprep.subr.bf16.mxu0 %v1036
    %1623 = vmatpush2.bf16.msra.mxu0 %v1035
    %1624 = vmatprep.subr.bf16.mxu0 %v1032
    %1625 = vmatpush2.bf16.msra.mxu0 %v1031
    %1626 = vmatprep.subr.bf16.mxu0 %v1028
    %1627 = vmatpush2.bf16.msra.mxu0 %v1027
    %1628 = vmatprep.subr.bf16.mxu0 %v1024
    %1629 = vmatpush2.bf16.msra.mxu0 %v1023
    %1630 = vmatprep.subr.bf16.mxu0 %v1020
    %1631 = vmatpush2.bf16.msra.mxu0 %v1019
    %1632 = vmatprep.subr.bf16.mxu0 %v1016
    %1633 = vmatpush2.bf16.msra.mxu0 %v1015
    %1634 = vmatprep.subr.bf16.mxu0 %v1012
    %1635 = vmatpush2.bf16.msra.mxu0 %v1011
    %1636 = vmatprep.subr.bf16.mxu0 %v1008
    %1637 = vmatpush2.bf16.msra.mxu0 %v1007
    %1638 = vmatprep.mubr.bf16.mxu0 %v1556
    %1639 = vmatmul.mubr.bf16.gmra.mxu0 %v1555
    %v1640 = vpop.f32.mrf.mxu0
    %v1641 = vadd.f32 %v1600, %v1640
    %v1642 = vpop.f32.mrf.mxu0
    %v1643 = vadd.f32 %v1602, %v1642
    %v1644 = vpop.f32.mrf.mxu0
    %v1645 = vpop.f32.mrf.mxu0
    %1646 = vdwg.mxu0
    %1647 = vmatprep.subr.bf16.mxu0 %v1068
    %1648 = vmatpush1.bf16.msra.mxu0 %v1067
    %1649 = vmatprep.subr.bf16.mxu0 %v1064
    %1650 = vmatpush1.bf16.msra.mxu0 %v1063
    %1651 = vmatprep.subr.bf16.mxu0 %v1060
    %1652 = vmatpush1.bf16.msra.mxu0 %v1059
    %1653 = vmatprep.subr.bf16.mxu0 %v1056
    %1654 = vmatpush1.bf16.msra.mxu0 %v1055
    %1655 = vmatprep.subr.bf16.mxu0 %v1052
    %1656 = vmatpush1.bf16.msra.mxu0 %v1051
    %1657 = vmatprep.subr.bf16.mxu0 %v1048
    %1658 = vmatpush1.bf16.msra.mxu0 %v1047
    %1659 = vmatprep.subr.bf16.mxu0 %v1044
    %1660 = vmatpush1.bf16.msra.mxu0 %v1043
    %1661 = vmatprep.subr.bf16.mxu0 %v1040
    %1662 = vmatpush1.bf16.msra.mxu0 %v1039
    %1663 = vmatprep.subr.bf16.mxu0 %v1100
    %1664 = vmatpush2.bf16.msra.mxu0 %v1099
    %1665 = vmatprep.subr.bf16.mxu0 %v1096
    %1666 = vmatpush2.bf16.msra.mxu0 %v1095
    %1667 = vmatprep.subr.bf16.mxu0 %v1092
    %1668 = vmatpush2.bf16.msra.mxu0 %v1091
    %1669 = vmatprep.subr.bf16.mxu0 %v1088
    %1670 = vmatpush2.bf16.msra.mxu0 %v1087
    %1671 = vmatprep.subr.bf16.mxu0 %v1084
    %1672 = vmatpush2.bf16.msra.mxu0 %v1083
    %1673 = vmatprep.subr.bf16.mxu0 %v1080
    %1674 = vmatpush2.bf16.msra.mxu0 %v1079
    %1675 = vmatprep.subr.bf16.mxu0 %v1076
    %1676 = vmatpush2.bf16.msra.mxu0 %v1075
    %1677 = vmatprep.subr.bf16.mxu0 %v1072
    %1678 = vmatpush2.bf16.msra.mxu0 %v1071
    %1679 = vmatprep.mubr.bf16.mxu0 %v1558
    %1680 = vmatmul.mubr.bf16.gmra.mxu0 %v1557
    %v1681 = vpop.f32.mrf.mxu0
    %v1682 = vadd.f32 %v1641, %v1681
    %v1683 = vpop.f32.mrf.mxu0
    %v1684 = vadd.f32 %v1643, %v1683
    %v1685 = vpop.f32.mrf.mxu0
    %v1686 = vpop.f32.mrf.mxu0
    %1687 = vdwg.mxu0
    %1688 = vmatprep.subr.bf16.mxu0 %v942
    %1689 = vmatpush1.bf16.msra.mxu0 %v941
    %1690 = vmatprep.subr.bf16.mxu0 %v938
    %1691 = vmatpush1.bf16.msra.mxu0 %v937
    %1692 = vmatprep.subr.bf16.mxu0 %v934
    %1693 = vmatpush1.bf16.msra.mxu0 %v933
    %1694 = vmatprep.subr.bf16.mxu0 %v930
    %1695 = vmatpush1.bf16.msra.mxu0 %v929
    %1696 = vmatprep.subr.bf16.mxu0 %v926
    %1697 = vmatpush1.bf16.msra.mxu0 %v925
    %1698 = vmatprep.subr.bf16.mxu0 %v922
    %1699 = vmatpush1.bf16.msra.mxu0 %v921
    %1700 = vmatprep.subr.bf16.mxu0 %v918
    %1701 = vmatpush1.bf16.msra.mxu0 %v917
    %1702 = vmatprep.subr.bf16.mxu0 %v914
    %1703 = vmatpush1.bf16.msra.mxu0 %v913
    %1704 = vmatprep.subr.bf16.mxu0 %v974
    %1705 = vmatpush2.bf16.msra.mxu0 %v973
    %1706 = vmatprep.subr.bf16.mxu0 %v970
    %1707 = vmatpush2.bf16.msra.mxu0 %v969
    %1708 = vmatprep.subr.bf16.mxu0 %v966
    %1709 = vmatpush2.bf16.msra.mxu0 %v965
    %1710 = vmatprep.subr.bf16.mxu0 %v962
    %1711 = vmatpush2.bf16.msra.mxu0 %v961
    %1712 = vmatprep.subr.bf16.mxu0 %v958
    %1713 = vmatpush2.bf16.msra.mxu0 %v957
    %1714 = vmatprep.subr.bf16.mxu0 %v954
    %1715 = vmatpush2.bf16.msra.mxu0 %v953
    %1716 = vmatprep.subr.bf16.mxu0 %v950
    %1717 = vmatpush2.bf16.msra.mxu0 %v949
    %1718 = vmatprep.subr.bf16.mxu0 %v946
    %1719 = vmatpush2.bf16.msra.mxu0 %v945
    %1720 = vmatprep.mubr.bf16.mxu0 %v1554
    %1721 = vmatmul.mubr.bf16.gmra.mxu0 %v1553
    %v1722 = vpop.f32.mrf.mxu0
    %v1723 = vadd.f32 %v305, %v1722
    %v1724 = vpop.f32.mrf.mxu0
    %v1725 = vadd.f32 %v309, %v1724
    %v1726 = vpop.f32.mrf.mxu0
    %v1727 = vpop.f32.mrf.mxu0
    %1728 = vdwg.mxu0
    %1729 = vmatprep.subr.bf16.mxu0 %v1006
    %1730 = vmatpush1.bf16.msra.mxu0 %v1005
    %1731 = vmatprep.subr.bf16.mxu0 %v1002
    %1732 = vmatpush1.bf16.msra.mxu0 %v1001
    %1733 = vmatprep.subr.bf16.mxu0 %v998
    %1734 = vmatpush1.bf16.msra.mxu0 %v997
    %1735 = vmatprep.subr.bf16.mxu0 %v994
    %1736 = vmatpush1.bf16.msra.mxu0 %v993
    %1737 = vmatprep.subr.bf16.mxu0 %v990
    %1738 = vmatpush1.bf16.msra.mxu0 %v989
    %1739 = vmatprep.subr.bf16.mxu0 %v986
    %1740 = vmatpush1.bf16.msra.mxu0 %v985
    %1741 = vmatprep.subr.bf16.mxu0 %v982
    %1742 = vmatpush1.bf16.msra.mxu0 %v981
    %1743 = vmatprep.subr.bf16.mxu0 %v978
    %1744 = vmatpush1.bf16.msra.mxu0 %v977
    %1745 = vmatprep.subr.bf16.mxu0 %v1038
    %1746 = vmatpush2.bf16.msra.mxu0 %v1037
    %1747 = vmatprep.subr.bf16.mxu0 %v1034
    %1748 = vmatpush2.bf16.msra.mxu0 %v1033
    %1749 = vmatprep.subr.bf16.mxu0 %v1030
    %1750 = vmatpush2.bf16.msra.mxu0 %v1029
    %1751 = vmatprep.subr.bf16.mxu0 %v1026
    %1752 = vmatpush2.bf16.msra.mxu0 %v1025
    %1753 = vmatprep.subr.bf16.mxu0 %v1022
    %1754 = vmatpush2.bf16.msra.mxu0 %v1021
    %1755 = vmatprep.subr.bf16.mxu0 %v1018
    %1756 = vmatpush2.bf16.msra.mxu0 %v1017
    %1757 = vmatprep.subr.bf16.mxu0 %v1014
    %1758 = vmatpush2.bf16.msra.mxu0 %v1013
    %1759 = vmatprep.subr.bf16.mxu0 %v1010
    %1760 = vmatpush2.bf16.msra.mxu0 %v1009
    %1761 = vmatprep.mubr.bf16.mxu0 %v1556
    %1762 = vmatmul.mubr.bf16.gmra.mxu0 %v1555
    %v1763 = vpop.f32.mrf.mxu0
    %v1764 = vadd.f32 %v1723, %v1763
    %v1765 = vpop.f32.mrf.mxu0
    %v1766 = vadd.f32 %v1725, %v1765
    %v1767 = vpop.f32.mrf.mxu0
    %v1768 = vpop.f32.mrf.mxu0
    %1769 = vdwg.mxu0
    %1770 = vmatprep.subr.bf16.mxu0 %v1070
    %1771 = vmatpush1.bf16.msra.mxu0 %v1069
    %1772 = vmatprep.subr.bf16.mxu0 %v1066
    %1773 = vmatpush1.bf16.msra.mxu0 %v1065
    %1774 = vmatprep.subr.bf16.mxu0 %v1062
    %1775 = vmatpush1.bf16.msra.mxu0 %v1061
    %1776 = vmatprep.subr.bf16.mxu0 %v1058
    %1777 = vmatpush1.bf16.msra.mxu0 %v1057
    %1778 = vmatprep.subr.bf16.mxu0 %v1054
    %1779 = vmatpush1.bf16.msra.mxu0 %v1053
    %1780 = vmatprep.subr.bf16.mxu0 %v1050
    %1781 = vmatpush1.bf16.msra.mxu0 %v1049
    %1782 = vmatprep.subr.bf16.mxu0 %v1046
    %1783 = vmatpush1.bf16.msra.mxu0 %v1045
    %1784 = vmatprep.subr.bf16.mxu0 %v1042
    %1785 = vmatpush1.bf16.msra.mxu0 %v1041
    %1786 = vmatprep.subr.bf16.mxu0 %v1102
    %1787 = vmatpush2.bf16.msra.mxu0 %v1101
    %1788 = vmatprep.subr.bf16.mxu0 %v1098
    %1789 = vmatpush2.bf16.msra.mxu0 %v1097
    %1790 = vmatprep.subr.bf16.mxu0 %v1094
    %1791 = vmatpush2.bf16.msra.mxu0 %v1093
    %1792 = vmatprep.subr.bf16.mxu0 %v1090
    %1793 = vmatpush2.bf16.msra.mxu0 %v1089
    %1794 = vmatprep.subr.bf16.mxu0 %v1086
    %1795 = vmatpush2.bf16.msra.mxu0 %v1085
    %1796 = vmatprep.subr.bf16.mxu0 %v1082
    %1797 = vmatpush2.bf16.msra.mxu0 %v1081
    %1798 = vmatprep.subr.bf16.mxu0 %v1078
    %1799 = vmatpush2.bf16.msra.mxu0 %v1077
    %1800 = vmatprep.subr.bf16.mxu0 %v1074
    %1801 = vmatpush2.bf16.msra.mxu0 %v1073
    %1802 = vmatprep.mubr.bf16.mxu0 %v1558
    %1803 = vmatmul.mubr.bf16.gmra.mxu0 %v1557
    %v1804 = vpop.f32.mrf.mxu0
    %v1805 = vadd.f32 %v1764, %v1804
    %v1806 = vpop.f32.mrf.mxu0
    %v1807 = vadd.f32 %v1766, %v1806
    %v1808 = vpop.f32.mrf.mxu0
    %v1809 = vpop.f32.mrf.mxu0
    %1810 = vdwg.mxu0
    %v1811 = vpack.c.bf16 %v1412, %v1412
    %v1812 = vpack.c.bf16 %v1414, %v1414
    %v1813 = vpack.c.bf16 %v1535, %v1535
    %v1814 = vpack.c.bf16 %v1537, %v1537
    %v1815 = vpack.c.bf16 %v1682, %v1682
    %v1816 = vpack.c.bf16 %v1684, %v1684
    %v1817 = vpack.c.bf16 %v1805, %v1805
    %v1818 = vpack.c.bf16 %v1807, %v1807
    %v1819 = vld [vmem:[#allocation2] sm:$0xff]
    %v1820 = vld [vmem:[#allocation2 + $0x8] sm:$0xff]
    %v1821 = vld [vmem:[#allocation2 + $0x10] sm:$0xff]
    %v1822 = vld [vmem:[#allocation2 + $0x18] sm:$0xff]
    %v1823 = vld [vmem:[#allocation2 + $0x20] sm:$0xff]
    %v1824 = vld [vmem:[#allocation2 + $0x28] sm:$0xff]
    %v1825 = vld [vmem:[#allocation2 + $0x30] sm:$0xff]
    %v1826 = vld [vmem:[#allocation2 + $0x38] sm:$0xff]
    %v1827 = vld [vmem:[#allocation2 + $0x40] sm:$0xff]
    %v1828 = vld [vmem:[#allocation2 + $0x48] sm:$0xff]
    %v1829 = vld [vmem:[#allocation2 + $0x50] sm:$0xff]
    %v1830 = vld [vmem:[#allocation2 + $0x58] sm:$0xff]
    %v1831 = vld [vmem:[#allocation2 + $0x60] sm:$0xff]
    %v1832 = vld [vmem:[#allocation2 + $0x68] sm:$0xff]
    %v1833 = vld [vmem:[#allocation2 + $0x70] sm:$0xff]
    %v1834 = vld [vmem:[#allocation2 + $0x78] sm:$0xff]
    %v1835 = vld [vmem:[#allocation2 + $0x80] sm:$0xff]
    %v1836 = vld [vmem:[#allocation2 + $0x88] sm:$0xff]
    %v1837 = vld [vmem:[#allocation2 + $0x90] sm:$0xff]
    %v1838 = vld [vmem:[#allocation2 + $0x98] sm:$0xff]
    %v1839 = vld [vmem:[#allocation2 + $0xa0] sm:$0xff]
    %v1840 = vld [vmem:[#allocation2 + $0xa8] sm:$0xff]
    %v1841 = vld [vmem:[#allocation2 + $0xb0] sm:$0xff]
    %v1842 = vld [vmem:[#allocation2 + $0xb8] sm:$0xff]
    %v1843 = vld [vmem:[#allocation2 + $0xc0] sm:$0xff]
    %v1844 = vld [vmem:[#allocation2 + $0xc8] sm:$0xff]
    %v1845 = vld [vmem:[#allocation2 + $0xd0] sm:$0xff]
    %v1846 = vld [vmem:[#allocation2 + $0xd8] sm:$0xff]
    %v1847 = vld [vmem:[#allocation2 + $0xe0] sm:$0xff]
    %v1848 = vld [vmem:[#allocation2 + $0xe8] sm:$0xff]
    %v1849 = vld [vmem:[#allocation2 + $0xf0] sm:$0xff]
    %v1850 = vld [vmem:[#allocation2 + $0xf8] sm:$0xff]
    %v1851 = vld [vmem:[#allocation2 + $0x100] sm:$0xff]
    %v1852 = vld [vmem:[#allocation2 + $0x108] sm:$0xff]
    %v1853 = vld [vmem:[#allocation2 + $0x110] sm:$0xff]
    %v1854 = vld [vmem:[#allocation2 + $0x118] sm:$0xff]
    %v1855 = vld [vmem:[#allocation2 + $0x120] sm:$0xff]
    %v1856 = vld [vmem:[#allocation2 + $0x128] sm:$0xff]
    %v1857 = vld [vmem:[#allocation2 + $0x130] sm:$0xff]
    %v1858 = vld [vmem:[#allocation2 + $0x138] sm:$0xff]
    %v1859 = vld [vmem:[#allocation2 + $0x140] sm:$0xff]
    %v1860 = vld [vmem:[#allocation2 + $0x148] sm:$0xff]
    %v1861 = vld [vmem:[#allocation2 + $0x150] sm:$0xff]
    %v1862 = vld [vmem:[#allocation2 + $0x158] sm:$0xff]
    %v1863 = vld [vmem:[#allocation2 + $0x160] sm:$0xff]
    %v1864 = vld [vmem:[#allocation2 + $0x168] sm:$0xff]
    %v1865 = vld [vmem:[#allocation2 + $0x170] sm:$0xff]
    %v1866 = vld [vmem:[#allocation2 + $0x178] sm:$0xff]
    %v1867 = vld [vmem:[#allocation2 + $0x180] sm:$0xff]
    %v1868 = vld [vmem:[#allocation2 + $0x188] sm:$0xff]
    %v1869 = vld [vmem:[#allocation2 + $0x190] sm:$0xff]
    %v1870 = vld [vmem:[#allocation2 + $0x198] sm:$0xff]
    %v1871 = vld [vmem:[#allocation2 + $0x1a0] sm:$0xff]
    %v1872 = vld [vmem:[#allocation2 + $0x1a8] sm:$0xff]
    %v1873 = vld [vmem:[#allocation2 + $0x1b0] sm:$0xff]
    %v1874 = vld [vmem:[#allocation2 + $0x1b8] sm:$0xff]
    %v1875 = vld [vmem:[#allocation2 + $0x1c0] sm:$0xff]
    %v1876 = vld [vmem:[#allocation2 + $0x1c8] sm:$0xff]
    %v1877 = vld [vmem:[#allocation2 + $0x1d0] sm:$0xff]
    %v1878 = vld [vmem:[#allocation2 + $0x1d8] sm:$0xff]
    %v1879 = vld [vmem:[#allocation2 + $0x1e0] sm:$0xff]
    %v1880 = vld [vmem:[#allocation2 + $0x1e8] sm:$0xff]
    %v1881 = vld [vmem:[#allocation2 + $0x1f0] sm:$0xff]
    %v1882 = vld [vmem:[#allocation2 + $0x1f8] sm:$0xff]
    %v1883 = vld [vmem:[#allocation2 + $0x200] sm:$0xff]
    %v1884 = vld [vmem:[#allocation2 + $0x208] sm:$0xff]
    %v1885 = vld [vmem:[#allocation2 + $0x210] sm:$0xff]
    %v1886 = vld [vmem:[#allocation2 + $0x218] sm:$0xff]
    %v1887 = vld [vmem:[#allocation2 + $0x220] sm:$0xff]
    %v1888 = vld [vmem:[#allocation2 + $0x228] sm:$0xff]
    %v1889 = vld [vmem:[#allocation2 + $0x230] sm:$0xff]
    %v1890 = vld [vmem:[#allocation2 + $0x238] sm:$0xff]
    %v1891 = vld [vmem:[#allocation2 + $0x240] sm:$0xff]
    %v1892 = vld [vmem:[#allocation2 + $0x248] sm:$0xff]
    %v1893 = vld [vmem:[#allocation2 + $0x250] sm:$0xff]
    %v1894 = vld [vmem:[#allocation2 + $0x258] sm:$0xff]
    %v1895 = vld [vmem:[#allocation2 + $0x260] sm:$0xff]
    %v1896 = vld [vmem:[#allocation2 + $0x268] sm:$0xff]
    %v1897 = vld [vmem:[#allocation2 + $0x270] sm:$0xff]
    %v1898 = vld [vmem:[#allocation2 + $0x278] sm:$0xff]
    %v1899 = vld [vmem:[#allocation2 + $0x280] sm:$0xff]
    %v1900 = vld [vmem:[#allocation2 + $0x288] sm:$0xff]
    %v1901 = vld [vmem:[#allocation2 + $0x290] sm:$0xff]
    %v1902 = vld [vmem:[#allocation2 + $0x298] sm:$0xff]
    %v1903 = vld [vmem:[#allocation2 + $0x2a0] sm:$0xff]
    %v1904 = vld [vmem:[#allocation2 + $0x2a8] sm:$0xff]
    %v1905 = vld [vmem:[#allocation2 + $0x2b0] sm:$0xff]
    %v1906 = vld [vmem:[#allocation2 + $0x2b8] sm:$0xff]
    %v1907 = vld [vmem:[#allocation2 + $0x2c0] sm:$0xff]
    %v1908 = vld [vmem:[#allocation2 + $0x2c8] sm:$0xff]
    %v1909 = vld [vmem:[#allocation2 + $0x2d0] sm:$0xff]
    %v1910 = vld [vmem:[#allocation2 + $0x2d8] sm:$0xff]
    %v1911 = vld [vmem:[#allocation2 + $0x2e0] sm:$0xff]
    %v1912 = vld [vmem:[#allocation2 + $0x2e8] sm:$0xff]
    %v1913 = vld [vmem:[#allocation2 + $0x2f0] sm:$0xff]
    %v1914 = vld [vmem:[#allocation2 + $0x2f8] sm:$0xff]
    %v1915 = vld [vmem:[#allocation2 + $0x300] sm:$0xff]
    %v1916 = vld [vmem:[#allocation2 + $0x308] sm:$0xff]
    %v1917 = vld [vmem:[#allocation2 + $0x310] sm:$0xff]
    %v1918 = vld [vmem:[#allocation2 + $0x318] sm:$0xff]
    %v1919 = vld [vmem:[#allocation2 + $0x320] sm:$0xff]
    %v1920 = vld [vmem:[#allocation2 + $0x328] sm:$0xff]
    %v1921 = vld [vmem:[#allocation2 + $0x330] sm:$0xff]
    %v1922 = vld [vmem:[#allocation2 + $0x338] sm:$0xff]
    %v1923 = vld [vmem:[#allocation2 + $0x340] sm:$0xff]
    %v1924 = vld [vmem:[#allocation2 + $0x348] sm:$0xff]
    %v1925 = vld [vmem:[#allocation2 + $0x350] sm:$0xff]
    %v1926 = vld [vmem:[#allocation2 + $0x358] sm:$0xff]
    %v1927 = vld [vmem:[#allocation2 + $0x360] sm:$0xff]
    %v1928 = vld [vmem:[#allocation2 + $0x368] sm:$0xff]
    %v1929 = vld [vmem:[#allocation2 + $0x370] sm:$0xff]
    %v1930 = vld [vmem:[#allocation2 + $0x378] sm:$0xff]
    %v1931 = vld [vmem:[#allocation2 + $0x380] sm:$0xff]
    %v1932 = vld [vmem:[#allocation2 + $0x388] sm:$0xff]
    %v1933 = vld [vmem:[#allocation2 + $0x390] sm:$0xff]
    %v1934 = vld [vmem:[#allocation2 + $0x398] sm:$0xff]
    %v1935 = vld [vmem:[#allocation2 + $0x3a0] sm:$0xff]
    %v1936 = vld [vmem:[#allocation2 + $0x3a8] sm:$0xff]
    %v1937 = vld [vmem:[#allocation2 + $0x3b0] sm:$0xff]
    %v1938 = vld [vmem:[#allocation2 + $0x3b8] sm:$0xff]
    %v1939 = vld [vmem:[#allocation2 + $0x3c0] sm:$0xff]
    %v1940 = vld [vmem:[#allocation2 + $0x3c8] sm:$0xff]
    %v1941 = vld [vmem:[#allocation2 + $0x3d0] sm:$0xff]
    %v1942 = vld [vmem:[#allocation2 + $0x3d8] sm:$0xff]
    %v1943 = vld [vmem:[#allocation2 + $0x3e0] sm:$0xff]
    %v1944 = vld [vmem:[#allocation2 + $0x3e8] sm:$0xff]
    %v1945 = vld [vmem:[#allocation2 + $0x3f0] sm:$0xff]
    %v1946 = vld [vmem:[#allocation2 + $0x3f8] sm:$0xff]
    %v1947 = vld [vmem:[#allocation4] sm:$0xff]
    %v1948 = vld [vmem:[#allocation4 + $0x8] sm:$0xff]
    %v1949 = vld [vmem:[#allocation4 + $0x10] sm:$0xff]
    %v1950 = vld [vmem:[#allocation4 + $0x18] sm:$0xff]
    %v1951 = vld [vmem:[#allocation4 + $0x20] sm:$0xff]
    %v1952 = vld [vmem:[#allocation4 + $0x28] sm:$0xff]
    %v1953 = vld [vmem:[#allocation4 + $0x30] sm:$0xff]
    %v1954 = vld [vmem:[#allocation4 + $0x38] sm:$0xff]
    %v1955 = vld [vmem:[#allocation4 + $0x40] sm:$0xff]
    %v1956 = vld [vmem:[#allocation4 + $0x48] sm:$0xff]
    %v1957 = vld [vmem:[#allocation4 + $0x50] sm:$0xff]
    %v1958 = vld [vmem:[#allocation4 + $0x58] sm:$0xff]
    %v1959 = vld [vmem:[#allocation4 + $0x60] sm:$0xff]
    %v1960 = vld [vmem:[#allocation4 + $0x68] sm:$0xff]
    %v1961 = vld [vmem:[#allocation4 + $0x70] sm:$0xff]
    %v1962 = vld [vmem:[#allocation4 + $0x78] sm:$0xff]
    %v1963 = vld [vmem:[#allocation4 + $0x80] sm:$0xff]
    %v1964 = vld [vmem:[#allocation4 + $0x88] sm:$0xff]
    %v1965 = vld [vmem:[#allocation4 + $0x90] sm:$0xff]
    %v1966 = vld [vmem:[#allocation4 + $0x98] sm:$0xff]
    %v1967 = vld [vmem:[#allocation4 + $0xa0] sm:$0xff]
    %v1968 = vld [vmem:[#allocation4 + $0xa8] sm:$0xff]
    %v1969 = vld [vmem:[#allocation4 + $0xb0] sm:$0xff]
    %v1970 = vld [vmem:[#allocation4 + $0xb8] sm:$0xff]
    %v1971 = vld [vmem:[#allocation4 + $0xc0] sm:$0xff]
    %v1972 = vld [vmem:[#allocation4 + $0xc8] sm:$0xff]
    %v1973 = vld [vmem:[#allocation4 + $0xd0] sm:$0xff]
    %v1974 = vld [vmem:[#allocation4 + $0xd8] sm:$0xff]
    %v1975 = vld [vmem:[#allocation4 + $0xe0] sm:$0xff]
    %v1976 = vld [vmem:[#allocation4 + $0xe8] sm:$0xff]
    %v1977 = vld [vmem:[#allocation4 + $0xf0] sm:$0xff]
    %v1978 = vld [vmem:[#allocation4 + $0xf8] sm:$0xff]
    %v1979 = vld [vmem:[#allocation4 + $0x100] sm:$0xff]
    %v1980 = vld [vmem:[#allocation4 + $0x108] sm:$0xff]
    %v1981 = vld [vmem:[#allocation4 + $0x110] sm:$0xff]
    %v1982 = vld [vmem:[#allocation4 + $0x118] sm:$0xff]
    %v1983 = vld [vmem:[#allocation4 + $0x120] sm:$0xff]
    %v1984 = vld [vmem:[#allocation4 + $0x128] sm:$0xff]
    %v1985 = vld [vmem:[#allocation4 + $0x130] sm:$0xff]
    %v1986 = vld [vmem:[#allocation4 + $0x138] sm:$0xff]
    %v1987 = vld [vmem:[#allocation4 + $0x140] sm:$0xff]
    %v1988 = vld [vmem:[#allocation4 + $0x148] sm:$0xff]
    %v1989 = vld [vmem:[#allocation4 + $0x150] sm:$0xff]
    %v1990 = vld [vmem:[#allocation4 + $0x158] sm:$0xff]
    %v1991 = vld [vmem:[#allocation4 + $0x160] sm:$0xff]
    %v1992 = vld [vmem:[#allocation4 + $0x168] sm:$0xff]
    %v1993 = vld [vmem:[#allocation4 + $0x170] sm:$0xff]
    %v1994 = vld [vmem:[#allocation4 + $0x178] sm:$0xff]
    %v1995 = vld [vmem:[#allocation4 + $0x180] sm:$0xff]
    %v1996 = vld [vmem:[#allocation4 + $0x188] sm:$0xff]
    %v1997 = vld [vmem:[#allocation4 + $0x190] sm:$0xff]
    %v1998 = vld [vmem:[#allocation4 + $0x198] sm:$0xff]
    %v1999 = vld [vmem:[#allocation4 + $0x1a0] sm:$0xff]
    %v2000 = vld [vmem:[#allocation4 + $0x1a8] sm:$0xff]
    %v2001 = vld [vmem:[#allocation4 + $0x1b0] sm:$0xff]
    %v2002 = vld [vmem:[#allocation4 + $0x1b8] sm:$0xff]
    %v2003 = vld [vmem:[#allocation4 + $0x1c0] sm:$0xff]
    %v2004 = vld [vmem:[#allocation4 + $0x1c8] sm:$0xff]
    %v2005 = vld [vmem:[#allocation4 + $0x1d0] sm:$0xff]
    %v2006 = vld [vmem:[#allocation4 + $0x1d8] sm:$0xff]
    %v2007 = vld [vmem:[#allocation4 + $0x1e0] sm:$0xff]
    %v2008 = vld [vmem:[#allocation4 + $0x1e8] sm:$0xff]
    %v2009 = vld [vmem:[#allocation4 + $0x1f0] sm:$0xff]
    %v2010 = vld [vmem:[#allocation4 + $0x1f8] sm:$0xff]
    %v2011 = vld [vmem:[#allocation4 + $0x200] sm:$0xff]
    %v2012 = vld [vmem:[#allocation4 + $0x208] sm:$0xff]
    %v2013 = vld [vmem:[#allocation4 + $0x210] sm:$0xff]
    %v2014 = vld [vmem:[#allocation4 + $0x218] sm:$0xff]
    %v2015 = vld [vmem:[#allocation4 + $0x220] sm:$0xff]
    %v2016 = vld [vmem:[#allocation4 + $0x228] sm:$0xff]
    %v2017 = vld [vmem:[#allocation4 + $0x230] sm:$0xff]
    %v2018 = vld [vmem:[#allocation4 + $0x238] sm:$0xff]
    %v2019 = vld [vmem:[#allocation4 + $0x240] sm:$0xff]
    %v2020 = vld [vmem:[#allocation4 + $0x248] sm:$0xff]
    %v2021 = vld [vmem:[#allocation4 + $0x250] sm:$0xff]
    %v2022 = vld [vmem:[#allocation4 + $0x258] sm:$0xff]
    %v2023 = vld [vmem:[#allocation4 + $0x260] sm:$0xff]
    %v2024 = vld [vmem:[#allocation4 + $0x268] sm:$0xff]
    %v2025 = vld [vmem:[#allocation4 + $0x270] sm:$0xff]
    %v2026 = vld [vmem:[#allocation4 + $0x278] sm:$0xff]
    %v2027 = vld [vmem:[#allocation4 + $0x280] sm:$0xff]
    %v2028 = vld [vmem:[#allocation4 + $0x288] sm:$0xff]
    %v2029 = vld [vmem:[#allocation4 + $0x290] sm:$0xff]
    %v2030 = vld [vmem:[#allocation4 + $0x298] sm:$0xff]
    %v2031 = vld [vmem:[#allocation4 + $0x2a0] sm:$0xff]
    %v2032 = vld [vmem:[#allocation4 + $0x2a8] sm:$0xff]
    %v2033 = vld [vmem:[#allocation4 + $0x2b0] sm:$0xff]
    %v2034 = vld [vmem:[#allocation4 + $0x2b8] sm:$0xff]
    %v2035 = vld [vmem:[#allocation4 + $0x2c0] sm:$0xff]
    %v2036 = vld [vmem:[#allocation4 + $0x2c8] sm:$0xff]
    %v2037 = vld [vmem:[#allocation4 + $0x2d0] sm:$0xff]
    %v2038 = vld [vmem:[#allocation4 + $0x2d8] sm:$0xff]
    %v2039 = vld [vmem:[#allocation4 + $0x2e0] sm:$0xff]
    %v2040 = vld [vmem:[#allocation4 + $0x2e8] sm:$0xff]
    %v2041 = vld [vmem:[#allocation4 + $0x2f0] sm:$0xff]
    %v2042 = vld [vmem:[#allocation4 + $0x2f8] sm:$0xff]
    %v2043 = vld [vmem:[#allocation4 + $0x300] sm:$0xff]
    %v2044 = vld [vmem:[#allocation4 + $0x308] sm:$0xff]
    %v2045 = vld [vmem:[#allocation4 + $0x310] sm:$0xff]
    %v2046 = vld [vmem:[#allocation4 + $0x318] sm:$0xff]
    %v2047 = vld [vmem:[#allocation4 + $0x320] sm:$0xff]
    %v2048 = vld [vmem:[#allocation4 + $0x328] sm:$0xff]
    %v2049 = vld [vmem:[#allocation4 + $0x330] sm:$0xff]
    %v2050 = vld [vmem:[#allocation4 + $0x338] sm:$0xff]
    %v2051 = vld [vmem:[#allocation4 + $0x340] sm:$0xff]
    %v2052 = vld [vmem:[#allocation4 + $0x348] sm:$0xff]
    %v2053 = vld [vmem:[#allocation4 + $0x350] sm:$0xff]
    %v2054 = vld [vmem:[#allocation4 + $0x358] sm:$0xff]
    %v2055 = vld [vmem:[#allocation4 + $0x360] sm:$0xff]
    %v2056 = vld [vmem:[#allocation4 + $0x368] sm:$0xff]
    %v2057 = vld [vmem:[#allocation4 + $0x370] sm:$0xff]
    %v2058 = vld [vmem:[#allocation4 + $0x378] sm:$0xff]
    %v2059 = vld [vmem:[#allocation4 + $0x380] sm:$0xff]
    %v2060 = vld [vmem:[#allocation4 + $0x388] sm:$0xff]
    %v2061 = vld [vmem:[#allocation4 + $0x390] sm:$0xff]
    %v2062 = vld [vmem:[#allocation4 + $0x398] sm:$0xff]
    %v2063 = vld [vmem:[#allocation4 + $0x3a0] sm:$0xff]
    %v2064 = vld [vmem:[#allocation4 + $0x3a8] sm:$0xff]
    %v2065 = vld [vmem:[#allocation4 + $0x3b0] sm:$0xff]
    %v2066 = vld [vmem:[#allocation4 + $0x3b8] sm:$0xff]
    %v2067 = vld [vmem:[#allocation4 + $0x3c0] sm:$0xff]
    %v2068 = vld [vmem:[#allocation4 + $0x3c8] sm:$0xff]
    %v2069 = vld [vmem:[#allocation4 + $0x3d0] sm:$0xff]
    %v2070 = vld [vmem:[#allocation4 + $0x3d8] sm:$0xff]
    %v2071 = vld [vmem:[#allocation4 + $0x3e0] sm:$0xff]
    %v2072 = vld [vmem:[#allocation4 + $0x3e8] sm:$0xff]
    %v2073 = vld [vmem:[#allocation4 + $0x3f0] sm:$0xff]
    %v2074 = vld [vmem:[#allocation4 + $0x3f8] sm:$0xff]
    %v2203 = vunpack.c.l.b16 %v1947
    %v2204 = vunpack.c.h.b16 %v1947
    %v2205 = vunpack.c.l.b16 %v1948
    %v2206 = vunpack.c.h.b16 %v1948
    %v2207 = vunpack.c.l.b16 %v1949
    %v2208 = vunpack.c.h.b16 %v1949
    %v2209 = vunpack.c.l.b16 %v1950
    %v2210 = vunpack.c.h.b16 %v1950
    %v2211 = vunpack.c.l.b16 %v1951
    %v2212 = vunpack.c.h.b16 %v1951
    %v2213 = vunpack.c.l.b16 %v1952
    %v2214 = vunpack.c.h.b16 %v1952
    %v2215 = vunpack.c.l.b16 %v1953
    %v2216 = vunpack.c.h.b16 %v1953
    %v2217 = vunpack.c.l.b16 %v1954
    %v2218 = vunpack.c.h.b16 %v1954
    %v2219 = vunpack.c.l.b16 %v1955
    %v2220 = vunpack.c.h.b16 %v1955
    %v2221 = vunpack.c.l.b16 %v1956
    %v2222 = vunpack.c.h.b16 %v1956
    %v2223 = vunpack.c.l.b16 %v1957
    %v2224 = vunpack.c.h.b16 %v1957
    %v2225 = vunpack.c.l.b16 %v1958
    %v2226 = vunpack.c.h.b16 %v1958
    %v2227 = vunpack.c.l.b16 %v1959
    %v2228 = vunpack.c.h.b16 %v1959
    %v2229 = vunpack.c.l.b16 %v1960
    %v2230 = vunpack.c.h.b16 %v1960
    %v2231 = vunpack.c.l.b16 %v1961
    %v2232 = vunpack.c.h.b16 %v1961
    %v2233 = vunpack.c.l.b16 %v1962
    %v2234 = vunpack.c.h.b16 %v1962
    %v2235 = vunpack.c.l.b16 %v1963
    %v2236 = vunpack.c.h.b16 %v1963
    %v2237 = vunpack.c.l.b16 %v1964
    %v2238 = vunpack.c.h.b16 %v1964
    %v2239 = vunpack.c.l.b16 %v1965
    %v2240 = vunpack.c.h.b16 %v1965
    %v2241 = vunpack.c.l.b16 %v1966
    %v2242 = vunpack.c.h.b16 %v1966
    %v2243 = vunpack.c.l.b16 %v1967
    %v2244 = vunpack.c.h.b16 %v1967
    %v2245 = vunpack.c.l.b16 %v1968
    %v2246 = vunpack.c.h.b16 %v1968
    %v2247 = vunpack.c.l.b16 %v1969
    %v2248 = vunpack.c.h.b16 %v1969
    %v2249 = vunpack.c.l.b16 %v1970
    %v2250 = vunpack.c.h.b16 %v1970
    %v2251 = vunpack.c.l.b16 %v1971
    %v2252 = vunpack.c.h.b16 %v1971
    %v2253 = vunpack.c.l.b16 %v1972
    %v2254 = vunpack.c.h.b16 %v1972
    %v2255 = vunpack.c.l.b16 %v1973
    %v2256 = vunpack.c.h.b16 %v1973
    %v2257 = vunpack.c.l.b16 %v1974
    %v2258 = vunpack.c.h.b16 %v1974
    %v2259 = vunpack.c.l.b16 %v1975
    %v2260 = vunpack.c.h.b16 %v1975
    %v2261 = vunpack.c.l.b16 %v1976
    %v2262 = vunpack.c.h.b16 %v1976
    %v2263 = vunpack.c.l.b16 %v1977
    %v2264 = vunpack.c.h.b16 %v1977
    %v2265 = vunpack.c.l.b16 %v1978
    %v2266 = vunpack.c.h.b16 %v1978
    %v2267 = vunpack.c.l.b16 %v1979
    %v2268 = vunpack.c.h.b16 %v1979
    %v2269 = vunpack.c.l.b16 %v1980
    %v2270 = vunpack.c.h.b16 %v1980
    %v2271 = vunpack.c.l.b16 %v1981
    %v2272 = vunpack.c.h.b16 %v1981
    %v2273 = vunpack.c.l.b16 %v1982
    %v2274 = vunpack.c.h.b16 %v1982
    %v2275 = vunpack.c.l.b16 %v1983
    %v2276 = vunpack.c.h.b16 %v1983
    %v2277 = vunpack.c.l.b16 %v1984
    %v2278 = vunpack.c.h.b16 %v1984
    %v2279 = vunpack.c.l.b16 %v1985
    %v2280 = vunpack.c.h.b16 %v1985
    %v2281 = vunpack.c.l.b16 %v1986
    %v2282 = vunpack.c.h.b16 %v1986
    %v2283 = vunpack.c.l.b16 %v1987
    %v2284 = vunpack.c.h.b16 %v1987
    %v2285 = vunpack.c.l.b16 %v1988
    %v2286 = vunpack.c.h.b16 %v1988
    %v2287 = vunpack.c.l.b16 %v1989
    %v2288 = vunpack.c.h.b16 %v1989
    %v2289 = vunpack.c.l.b16 %v1990
    %v2290 = vunpack.c.h.b16 %v1990
    %v2291 = vunpack.c.l.b16 %v1991
    %v2292 = vunpack.c.h.b16 %v1991
    %v2293 = vunpack.c.l.b16 %v1992
    %v2294 = vunpack.c.h.b16 %v1992
    %v2295 = vunpack.c.l.b16 %v1993
    %v2296 = vunpack.c.h.b16 %v1993
    %v2297 = vunpack.c.l.b16 %v1994
    %v2298 = vunpack.c.h.b16 %v1994
    %v2299 = vunpack.c.l.b16 %v1995
    %v2300 = vunpack.c.h.b16 %v1995
    %v2301 = vunpack.c.l.b16 %v1996
    %v2302 = vunpack.c.h.b16 %v1996
    %v2303 = vunpack.c.l.b16 %v1997
    %v2304 = vunpack.c.h.b16 %v1997
    %v2305 = vunpack.c.l.b16 %v1998
    %v2306 = vunpack.c.h.b16 %v1998
    %v2307 = vunpack.c.l.b16 %v1999
    %v2308 = vunpack.c.h.b16 %v1999
    %v2309 = vunpack.c.l.b16 %v2000
    %v2310 = vunpack.c.h.b16 %v2000
    %v2311 = vunpack.c.l.b16 %v2001
    %v2312 = vunpack.c.h.b16 %v2001
    %v2313 = vunpack.c.l.b16 %v2002
    %v2314 = vunpack.c.h.b16 %v2002
    %v2315 = vunpack.c.l.b16 %v2003
    %v2316 = vunpack.c.h.b16 %v2003
    %v2317 = vunpack.c.l.b16 %v2004
    %v2318 = vunpack.c.h.b16 %v2004
    %v2319 = vunpack.c.l.b16 %v2005
    %v2320 = vunpack.c.h.b16 %v2005
    %v2321 = vunpack.c.l.b16 %v2006
    %v2322 = vunpack.c.h.b16 %v2006
    %v2323 = vunpack.c.l.b16 %v2007
    %v2324 = vunpack.c.h.b16 %v2007
    %v2325 = vunpack.c.l.b16 %v2008
    %v2326 = vunpack.c.h.b16 %v2008
    %v2327 = vunpack.c.l.b16 %v2009
    %v2328 = vunpack.c.h.b16 %v2009
    %v2329 = vunpack.c.l.b16 %v2010
    %v2330 = vunpack.c.h.b16 %v2010
    %v2331 = vunpack.c.l.b16 %v2011
    %v2332 = vunpack.c.h.b16 %v2011
    %v2333 = vunpack.c.l.b16 %v2012
    %v2334 = vunpack.c.h.b16 %v2012
    %v2335 = vunpack.c.l.b16 %v2013
    %v2336 = vunpack.c.h.b16 %v2013
    %v2337 = vunpack.c.l.b16 %v2014
    %v2338 = vunpack.c.h.b16 %v2014
    %v2339 = vunpack.c.l.b16 %v2015
    %v2340 = vunpack.c.h.b16 %v2015
    %v2341 = vunpack.c.l.b16 %v2016
    %v2342 = vunpack.c.h.b16 %v2016
    %v2343 = vunpack.c.l.b16 %v2017
    %v2344 = vunpack.c.h.b16 %v2017
    %v2345 = vunpack.c.l.b16 %v2018
    %v2346 = vunpack.c.h.b16 %v2018
    %v2347 = vunpack.c.l.b16 %v2019
    %v2348 = vunpack.c.h.b16 %v2019
    %v2349 = vunpack.c.l.b16 %v2020
    %v2350 = vunpack.c.h.b16 %v2020
    %v2351 = vunpack.c.l.b16 %v2021
    %v2352 = vunpack.c.h.b16 %v2021
    %v2353 = vunpack.c.l.b16 %v2022
    %v2354 = vunpack.c.h.b16 %v2022
    %v2355 = vunpack.c.l.b16 %v2023
    %v2356 = vunpack.c.h.b16 %v2023
    %v2357 = vunpack.c.l.b16 %v2024
    %v2358 = vunpack.c.h.b16 %v2024
    %v2359 = vunpack.c.l.b16 %v2025
    %v2360 = vunpack.c.h.b16 %v2025
    %v2361 = vunpack.c.l.b16 %v2026
    %v2362 = vunpack.c.h.b16 %v2026
    %v2363 = vunpack.c.l.b16 %v2027
    %v2364 = vunpack.c.h.b16 %v2027
    %v2365 = vunpack.c.l.b16 %v2028
    %v2366 = vunpack.c.h.b16 %v2028
    %v2367 = vunpack.c.l.b16 %v2029
    %v2368 = vunpack.c.h.b16 %v2029
    %v2369 = vunpack.c.l.b16 %v2030
    %v2370 = vunpack.c.h.b16 %v2030
    %v2371 = vunpack.c.l.b16 %v2031
    %v2372 = vunpack.c.h.b16 %v2031
    %v2373 = vunpack.c.l.b16 %v2032
    %v2374 = vunpack.c.h.b16 %v2032
    %v2375 = vunpack.c.l.b16 %v2033
    %v2376 = vunpack.c.h.b16 %v2033
    %v2377 = vunpack.c.l.b16 %v2034
    %v2378 = vunpack.c.h.b16 %v2034
    %v2379 = vunpack.c.l.b16 %v2035
    %v2380 = vunpack.c.h.b16 %v2035
    %v2381 = vunpack.c.l.b16 %v2036
    %v2382 = vunpack.c.h.b16 %v2036
    %v2383 = vunpack.c.l.b16 %v2037
    %v2384 = vunpack.c.h.b16 %v2037
    %v2385 = vunpack.c.l.b16 %v2038
    %v2386 = vunpack.c.h.b16 %v2038
    %v2387 = vunpack.c.l.b16 %v2039
    %v2388 = vunpack.c.h.b16 %v2039
    %v2389 = vunpack.c.l.b16 %v2040
    %v2390 = vunpack.c.h.b16 %v2040
    %v2391 = vunpack.c.l.b16 %v2041
    %v2392 = vunpack.c.h.b16 %v2041
    %v2393 = vunpack.c.l.b16 %v2042
    %v2394 = vunpack.c.h.b16 %v2042
    %v2395 = vunpack.c.l.b16 %v2043
    %v2396 = vunpack.c.h.b16 %v2043
    %v2397 = vunpack.c.l.b16 %v2044
    %v2398 = vunpack.c.h.b16 %v2044
    %v2399 = vunpack.c.l.b16 %v2045
    %v2400 = vunpack.c.h.b16 %v2045
    %v2401 = vunpack.c.l.b16 %v2046
    %v2402 = vunpack.c.h.b16 %v2046
    %v2403 = vunpack.c.l.b16 %v2047
    %v2404 = vunpack.c.h.b16 %v2047
    %v2405 = vunpack.c.l.b16 %v2048
    %v2406 = vunpack.c.h.b16 %v2048
    %v2407 = vunpack.c.l.b16 %v2049
    %v2408 = vunpack.c.h.b16 %v2049
    %v2409 = vunpack.c.l.b16 %v2050
    %v2410 = vunpack.c.h.b16 %v2050
    %v2411 = vunpack.c.l.b16 %v2051
    %v2412 = vunpack.c.h.b16 %v2051
    %v2413 = vunpack.c.l.b16 %v2052
    %v2414 = vunpack.c.h.b16 %v2052
    %v2415 = vunpack.c.l.b16 %v2053
    %v2416 = vunpack.c.h.b16 %v2053
    %v2417 = vunpack.c.l.b16 %v2054
    %v2418 = vunpack.c.h.b16 %v2054
    %v2419 = vunpack.c.l.b16 %v2055
    %v2420 = vunpack.c.h.b16 %v2055
    %v2421 = vunpack.c.l.b16 %v2056
    %v2422 = vunpack.c.h.b16 %v2056
    %v2423 = vunpack.c.l.b16 %v2057
    %v2424 = vunpack.c.h.b16 %v2057
    %v2425 = vunpack.c.l.b16 %v2058
    %v2426 = vunpack.c.h.b16 %v2058
    %v2427 = vunpack.c.l.b16 %v2059
    %v2428 = vunpack.c.h.b16 %v2059
    %v2429 = vunpack.c.l.b16 %v2060
    %v2430 = vunpack.c.h.b16 %v2060
    %v2431 = vunpack.c.l.b16 %v2061
    %v2432 = vunpack.c.h.b16 %v2061
    %v2433 = vunpack.c.l.b16 %v2062
    %v2434 = vunpack.c.h.b16 %v2062
    %v2435 = vunpack.c.l.b16 %v2063
    %v2436 = vunpack.c.h.b16 %v2063
    %v2437 = vunpack.c.l.b16 %v2064
    %v2438 = vunpack.c.h.b16 %v2064
    %v2439 = vunpack.c.l.b16 %v2065
    %v2440 = vunpack.c.h.b16 %v2065
    %v2441 = vunpack.c.l.b16 %v2066
    %v2442 = vunpack.c.h.b16 %v2066
    %v2443 = vunpack.c.l.b16 %v2067
    %v2444 = vunpack.c.h.b16 %v2067
    %v2445 = vunpack.c.l.b16 %v2068
    %v2446 = vunpack.c.h.b16 %v2068
    %v2447 = vunpack.c.l.b16 %v2069
    %v2448 = vunpack.c.h.b16 %v2069
    %v2449 = vunpack.c.l.b16 %v2070
    %v2450 = vunpack.c.h.b16 %v2070
    %v2451 = vunpack.c.l.b16 %v2071
    %v2452 = vunpack.c.h.b16 %v2071
    %v2453 = vunpack.c.l.b16 %v2072
    %v2454 = vunpack.c.h.b16 %v2072
    %v2455 = vunpack.c.l.b16 %v2073
    %v2456 = vunpack.c.h.b16 %v2073
    %v2457 = vunpack.c.l.b16 %v2074
    %v2458 = vunpack.c.h.b16 %v2074
    %v2459 = vpack.c.b16 %v2207, %v2203
    %v2460 = vpack.c.b16 %v2208, %v2204
    %v2461 = vpack.c.b16 %v2209, %v2205
    %v2462 = vpack.c.b16 %v2210, %v2206
    %v2463 = vpack.c.b16 %v2215, %v2211
    %v2464 = vpack.c.b16 %v2216, %v2212
    %v2465 = vpack.c.b16 %v2217, %v2213
    %v2466 = vpack.c.b16 %v2218, %v2214
    %v2467 = vpack.c.b16 %v2223, %v2219
    %v2468 = vpack.c.b16 %v2224, %v2220
    %v2469 = vpack.c.b16 %v2225, %v2221
    %v2470 = vpack.c.b16 %v2226, %v2222
    %v2471 = vpack.c.b16 %v2231, %v2227
    %v2472 = vpack.c.b16 %v2232, %v2228
    %v2473 = vpack.c.b16 %v2233, %v2229
    %v2474 = vpack.c.b16 %v2234, %v2230
    %v2475 = vpack.c.b16 %v2239, %v2235
    %v2476 = vpack.c.b16 %v2240, %v2236
    %v2477 = vpack.c.b16 %v2241, %v2237
    %v2478 = vpack.c.b16 %v2242, %v2238
    %v2479 = vpack.c.b16 %v2247, %v2243
    %v2480 = vpack.c.b16 %v2248, %v2244
    %v2481 = vpack.c.b16 %v2249, %v2245
    %v2482 = vpack.c.b16 %v2250, %v2246
    %v2483 = vpack.c.b16 %v2255, %v2251
    %v2484 = vpack.c.b16 %v2256, %v2252
    %v2485 = vpack.c.b16 %v2257, %v2253
    %v2486 = vpack.c.b16 %v2258, %v2254
    %v2487 = vpack.c.b16 %v2263, %v2259
    %v2488 = vpack.c.b16 %v2264, %v2260
    %v2489 = vpack.c.b16 %v2265, %v2261
    %v2490 = vpack.c.b16 %v2266, %v2262
    %v2491 = vpack.c.b16 %v2271, %v2267
    %v2492 = vpack.c.b16 %v2272, %v2268
    %v2493 = vpack.c.b16 %v2273, %v2269
    %v2494 = vpack.c.b16 %v2274, %v2270
    %v2495 = vpack.c.b16 %v2279, %v2275
    %v2496 = vpack.c.b16 %v2280, %v2276
    %v2497 = vpack.c.b16 %v2281, %v2277
    %v2498 = vpack.c.b16 %v2282, %v2278
    %v2499 = vpack.c.b16 %v2287, %v2283
    %v2500 = vpack.c.b16 %v2288, %v2284
    %v2501 = vpack.c.b16 %v2289, %v2285
    %v2502 = vpack.c.b16 %v2290, %v2286
    %v2503 = vpack.c.b16 %v2295, %v2291
    %v2504 = vpack.c.b16 %v2296, %v2292
    %v2505 = vpack.c.b16 %v2297, %v2293
    %v2506 = vpack.c.b16 %v2298, %v2294
    %v2507 = vpack.c.b16 %v2303, %v2299
    %v2508 = vpack.c.b16 %v2304, %v2300
    %v2509 = vpack.c.b16 %v2305, %v2301
    %v2510 = vpack.c.b16 %v2306, %v2302
    %v2511 = vpack.c.b16 %v2311, %v2307
    %v2512 = vpack.c.b16 %v2312, %v2308
    %v2513 = vpack.c.b16 %v2313, %v2309
    %v2514 = vpack.c.b16 %v2314, %v2310
    %v2515 = vpack.c.b16 %v2319, %v2315
    %v2516 = vpack.c.b16 %v2320, %v2316
    %v2517 = vpack.c.b16 %v2321, %v2317
    %v2518 = vpack.c.b16 %v2322, %v2318
    %v2519 = vpack.c.b16 %v2327, %v2323
    %v2520 = vpack.c.b16 %v2328, %v2324
    %v2521 = vpack.c.b16 %v2329, %v2325
    %v2522 = vpack.c.b16 %v2330, %v2326
    %v2523 = vpack.c.b16 %v2335, %v2331
    %v2524 = vpack.c.b16 %v2336, %v2332
    %v2525 = vpack.c.b16 %v2337, %v2333
    %v2526 = vpack.c.b16 %v2338, %v2334
    %v2527 = vpack.c.b16 %v2343, %v2339
    %v2528 = vpack.c.b16 %v2344, %v2340
    %v2529 = vpack.c.b16 %v2345, %v2341
    %v2530 = vpack.c.b16 %v2346, %v2342
    %v2531 = vpack.c.b16 %v2351, %v2347
    %v2532 = vpack.c.b16 %v2352, %v2348
    %v2533 = vpack.c.b16 %v2353, %v2349
    %v2534 = vpack.c.b16 %v2354, %v2350
    %v2535 = vpack.c.b16 %v2359, %v2355
    %v2536 = vpack.c.b16 %v2360, %v2356
    %v2537 = vpack.c.b16 %v2361, %v2357
    %v2538 = vpack.c.b16 %v2362, %v2358
    %v2539 = vpack.c.b16 %v2367, %v2363
    %v2540 = vpack.c.b16 %v2368, %v2364
    %v2541 = vpack.c.b16 %v2369, %v2365
    %v2542 = vpack.c.b16 %v2370, %v2366
    %v2543 = vpack.c.b16 %v2375, %v2371
    %v2544 = vpack.c.b16 %v2376, %v2372
    %v2545 = vpack.c.b16 %v2377, %v2373
    %v2546 = vpack.c.b16 %v2378, %v2374
    %v2547 = vpack.c.b16 %v2383, %v2379
    %v2548 = vpack.c.b16 %v2384, %v2380
    %v2549 = vpack.c.b16 %v2385, %v2381
    %v2550 = vpack.c.b16 %v2386, %v2382
    %v2551 = vpack.c.b16 %v2391, %v2387
    %v2552 = vpack.c.b16 %v2392, %v2388
    %v2553 = vpack.c.b16 %v2393, %v2389
    %v2554 = vpack.c.b16 %v2394, %v2390
    %v2555 = vpack.c.b16 %v2399, %v2395
    %v2556 = vpack.c.b16 %v2400, %v2396
    %v2557 = vpack.c.b16 %v2401, %v2397
    %v2558 = vpack.c.b16 %v2402, %v2398
    %v2559 = vpack.c.b16 %v2407, %v2403
    %v2560 = vpack.c.b16 %v2408, %v2404
    %v2561 = vpack.c.b16 %v2409, %v2405
    %v2562 = vpack.c.b16 %v2410, %v2406
    %v2563 = vpack.c.b16 %v2415, %v2411
    %v2564 = vpack.c.b16 %v2416, %v2412
    %v2565 = vpack.c.b16 %v2417, %v2413
    %v2566 = vpack.c.b16 %v2418, %v2414
    %v2567 = vpack.c.b16 %v2423, %v2419
    %v2568 = vpack.c.b16 %v2424, %v2420
    %v2569 = vpack.c.b16 %v2425, %v2421
    %v2570 = vpack.c.b16 %v2426, %v2422
    %v2571 = vpack.c.b16 %v2431, %v2427
    %v2572 = vpack.c.b16 %v2432, %v2428
    %v2573 = vpack.c.b16 %v2433, %v2429
    %v2574 = vpack.c.b16 %v2434, %v2430
    %v2575 = vpack.c.b16 %v2439, %v2435
    %v2576 = vpack.c.b16 %v2440, %v2436
    %v2577 = vpack.c.b16 %v2441, %v2437
    %v2578 = vpack.c.b16 %v2442, %v2438
    %v2579 = vpack.c.b16 %v2447, %v2443
    %v2580 = vpack.c.b16 %v2448, %v2444
    %v2581 = vpack.c.b16 %v2449, %v2445
    %v2582 = vpack.c.b16 %v2450, %v2446
    %v2583 = vpack.c.b16 %v2455, %v2451
    %v2584 = vpack.c.b16 %v2456, %v2452
    %v2585 = vpack.c.b16 %v2457, %v2453
    %v2586 = vpack.c.b16 %v2458, %v2454
    %2715 = vmatprep.subr.bf16.mxu0 %v2488
    %2716 = vmatpush1.bf16.msra.mxu0 %v2487
    %2717 = vmatprep.subr.bf16.mxu0 %v2484
    %2718 = vmatpush1.bf16.msra.mxu0 %v2483
    %2719 = vmatprep.subr.bf16.mxu0 %v2480
    %2720 = vmatpush1.bf16.msra.mxu0 %v2479
    %2721 = vmatprep.subr.bf16.mxu0 %v2476
    %2722 = vmatpush1.bf16.msra.mxu0 %v2475
    %2723 = vmatprep.subr.bf16.mxu0 %v2472
    %2724 = vmatpush1.bf16.msra.mxu0 %v2471
    %2725 = vmatprep.subr.bf16.mxu0 %v2468
    %2726 = vmatpush1.bf16.msra.mxu0 %v2467
    %2727 = vmatprep.subr.bf16.mxu0 %v2464
    %2728 = vmatpush1.bf16.msra.mxu0 %v2463
    %2729 = vmatprep.subr.bf16.mxu0 %v2460
    %2730 = vmatpush1.bf16.msra.mxu0 %v2459
    %2731 = vmatprep.subr.bf16.mxu0 %v2520
    %2732 = vmatpush2.bf16.msra.mxu0 %v2519
    %2733 = vmatprep.subr.bf16.mxu0 %v2516
    %2734 = vmatpush2.bf16.msra.mxu0 %v2515
    %2735 = vmatprep.subr.bf16.mxu0 %v2512
    %2736 = vmatpush2.bf16.msra.mxu0 %v2511
    %2737 = vmatprep.subr.bf16.mxu0 %v2508
    %2738 = vmatpush2.bf16.msra.mxu0 %v2507
    %2739 = vmatprep.subr.bf16.mxu0 %v2504
    %2740 = vmatpush2.bf16.msra.mxu0 %v2503
    %2741 = vmatprep.subr.bf16.mxu0 %v2500
    %2742 = vmatpush2.bf16.msra.mxu0 %v2499
    %2743 = vmatprep.subr.bf16.mxu0 %v2496
    %2744 = vmatpush2.bf16.msra.mxu0 %v2495
    %2745 = vmatprep.subr.bf16.mxu0 %v2492
    %2746 = vmatpush2.bf16.msra.mxu0 %v2491
    %2747 = vmatprep.mubr.bf16.mxu0 %v1816
    %2748 = vmatmul.mubr.bf16.gmra.mxu0 %v1815
    %v2749 = vpop.f32.mrf.mxu0
    %v2750 = vadd.f32 0.0, %v2749
    %v2751 = vpop.f32.mrf.mxu0
    %v2752 = vadd.f32 0.0, %v2751
    %v2753 = vpop.f32.mrf.mxu0
    %v2754 = vpop.f32.mrf.mxu0
    %2755 = vdwg.mxu0
    %2756 = vmatprep.subr.bf16.mxu0 %v2552
    %2757 = vmatpush1.bf16.msra.mxu0 %v2551
    %2758 = vmatprep.subr.bf16.mxu0 %v2548
    %2759 = vmatpush1.bf16.msra.mxu0 %v2547
    %2760 = vmatprep.subr.bf16.mxu0 %v2544
    %2761 = vmatpush1.bf16.msra.mxu0 %v2543
    %2762 = vmatprep.subr.bf16.mxu0 %v2540
    %2763 = vmatpush1.bf16.msra.mxu0 %v2539
    %2764 = vmatprep.subr.bf16.mxu0 %v2536
    %2765 = vmatpush1.bf16.msra.mxu0 %v2535
    %2766 = vmatprep.subr.bf16.mxu0 %v2532
    %2767 = vmatpush1.bf16.msra.mxu0 %v2531
    %2768 = vmatprep.subr.bf16.mxu0 %v2528
    %2769 = vmatpush1.bf16.msra.mxu0 %v2527
    %2770 = vmatprep.subr.bf16.mxu0 %v2524
    %2771 = vmatpush1.bf16.msra.mxu0 %v2523
    %2772 = vmatprep.subr.bf16.mxu0 %v2584
    %2773 = vmatpush2.bf16.msra.mxu0 %v2583
    %2774 = vmatprep.subr.bf16.mxu0 %v2580
    %2775 = vmatpush2.bf16.msra.mxu0 %v2579
    %2776 = vmatprep.subr.bf16.mxu0 %v2576
    %2777 = vmatpush2.bf16.msra.mxu0 %v2575
    %2778 = vmatprep.subr.bf16.mxu0 %v2572
    %2779 = vmatpush2.bf16.msra.mxu0 %v2571
    %2780 = vmatprep.subr.bf16.mxu0 %v2568
    %2781 = vmatpush2.bf16.msra.mxu0 %v2567
    %2782 = vmatprep.subr.bf16.mxu0 %v2564
    %2783 = vmatpush2.bf16.msra.mxu0 %v2563
    %2784 = vmatprep.subr.bf16.mxu0 %v2560
    %2785 = vmatpush2.bf16.msra.mxu0 %v2559
    %2786 = vmatprep.subr.bf16.mxu0 %v2556
    %2787 = vmatpush2.bf16.msra.mxu0 %v2555
    %2788 = vmatprep.mubr.bf16.mxu0 %v1818
    %2789 = vmatmul.mubr.bf16.gmra.mxu0 %v1817
    %v2790 = vpop.f32.mrf.mxu0
    %v2791 = vadd.f32 %v2750, %v2790
    %v2792 = vpop.f32.mrf.mxu0
    %v2793 = vadd.f32 %v2752, %v2792
    %v2794 = vpop.f32.mrf.mxu0
    %v2795 = vpop.f32.mrf.mxu0
    %2796 = vdwg.mxu0
    %2797 = vmatprep.subr.bf16.mxu0 %v2490
    %2798 = vmatpush1.bf16.msra.mxu0 %v2489
    %2799 = vmatprep.subr.bf16.mxu0 %v2486
    %2800 = vmatpush1.bf16.msra.mxu0 %v2485
    %2801 = vmatprep.subr.bf16.mxu0 %v2482
    %2802 = vmatpush1.bf16.msra.mxu0 %v2481
    %2803 = vmatprep.subr.bf16.mxu0 %v2478
    %2804 = vmatpush1.bf16.msra.mxu0 %v2477
    %2805 = vmatprep.subr.bf16.mxu0 %v2474
    %2806 = vmatpush1.bf16.msra.mxu0 %v2473
    %2807 = vmatprep.subr.bf16.mxu0 %v2470
    %2808 = vmatpush1.bf16.msra.mxu0 %v2469
    %2809 = vmatprep.subr.bf16.mxu0 %v2466
    %2810 = vmatpush1.bf16.msra.mxu0 %v2465
    %2811 = vmatprep.subr.bf16.mxu0 %v2462
    %2812 = vmatpush1.bf16.msra.mxu0 %v2461
    %2813 = vmatprep.subr.bf16.mxu0 %v2522
    %2814 = vmatpush2.bf16.msra.mxu0 %v2521
    %2815 = vmatprep.subr.bf16.mxu0 %v2518
    %2816 = vmatpush2.bf16.msra.mxu0 %v2517
    %2817 = vmatprep.subr.bf16.mxu0 %v2514
    %2818 = vmatpush2.bf16.msra.mxu0 %v2513
    %2819 = vmatprep.subr.bf16.mxu0 %v2510
    %2820 = vmatpush2.bf16.msra.mxu0 %v2509
    %2821 = vmatprep.subr.bf16.mxu0 %v2506
    %2822 = vmatpush2.bf16.msra.mxu0 %v2505
    %2823 = vmatprep.subr.bf16.mxu0 %v2502
    %2824 = vmatpush2.bf16.msra.mxu0 %v2501
    %2825 = vmatprep.subr.bf16.mxu0 %v2498
    %2826 = vmatpush2.bf16.msra.mxu0 %v2497
    %2827 = vmatprep.subr.bf16.mxu0 %v2494
    %2828 = vmatpush2.bf16.msra.mxu0 %v2493
    %2829 = vmatprep.mubr.bf16.mxu0 %v1816
    %2830 = vmatmul.mubr.bf16.gmra.mxu0 %v1815
    %v2831 = vpop.f32.mrf.mxu0
    %v2832 = vadd.f32 0.0, %v2831
    %v2833 = vpop.f32.mrf.mxu0
    %v2834 = vadd.f32 0.0, %v2833
    %v2835 = vpop.f32.mrf.mxu0
    %v2836 = vpop.f32.mrf.mxu0
    %2837 = vdwg.mxu0
    %2838 = vmatprep.subr.bf16.mxu0 %v2554
    %2839 = vmatpush1.bf16.msra.mxu0 %v2553
    %2840 = vmatprep.subr.bf16.mxu0 %v2550
    %2841 = vmatpush1.bf16.msra.mxu0 %v2549
    %2842 = vmatprep.subr.bf16.mxu0 %v2546
    %2843 = vmatpush1.bf16.msra.mxu0 %v2545
    %2844 = vmatprep.subr.bf16.mxu0 %v2542
    %2845 = vmatpush1.bf16.msra.mxu0 %v2541
    %2846 = vmatprep.subr.bf16.mxu0 %v2538
    %2847 = vmatpush1.bf16.msra.mxu0 %v2537
    %2848 = vmatprep.subr.bf16.mxu0 %v2534
    %2849 = vmatpush1.bf16.msra.mxu0 %v2533
    %2850 = vmatprep.subr.bf16.mxu0 %v2530
    %2851 = vmatpush1.bf16.msra.mxu0 %v2529
    %2852 = vmatprep.subr.bf16.mxu0 %v2526
    %2853 = vmatpush1.bf16.msra.mxu0 %v2525
    %2854 = vmatprep.subr.bf16.mxu0 %v2586
    %2855 = vmatpush2.bf16.msra.mxu0 %v2585
    %2856 = vmatprep.subr.bf16.mxu0 %v2582
    %2857 = vmatpush2.bf16.msra.mxu0 %v2581
    %2858 = vmatprep.subr.bf16.mxu0 %v2578
    %2859 = vmatpush2.bf16.msra.mxu0 %v2577
    %2860 = vmatprep.subr.bf16.mxu0 %v2574
    %2861 = vmatpush2.bf16.msra.mxu0 %v2573
    %2862 = vmatprep.subr.bf16.mxu0 %v2570
    %2863 = vmatpush2.bf16.msra.mxu0 %v2569
    %2864 = vmatprep.subr.bf16.mxu0 %v2566
    %2865 = vmatpush2.bf16.msra.mxu0 %v2565
    %2866 = vmatprep.subr.bf16.mxu0 %v2562
    %2867 = vmatpush2.bf16.msra.mxu0 %v2561
    %2868 = vmatprep.subr.bf16.mxu0 %v2558
    %2869 = vmatpush2.bf16.msra.mxu0 %v2557
    %2870 = vmatprep.mubr.bf16.mxu0 %v1818
    %2871 = vmatmul.mubr.bf16.gmra.mxu0 %v1817
    %v2872 = vpop.f32.mrf.mxu0
    %v2873 = vadd.f32 %v2832, %v2872
    %v2874 = vpop.f32.mrf.mxu0
    %v2875 = vadd.f32 %v2834, %v2874
    %v2876 = vpop.f32.mrf.mxu0
    %v2877 = vpop.f32.mrf.mxu0
    %2878 = vdwg.mxu0
    %v3007 = vunpack.c.l.b16 %v1819
    %v3008 = vunpack.c.h.b16 %v1819
    %v3009 = vunpack.c.l.b16 %v1820
    %v3010 = vunpack.c.h.b16 %v1820
    %v3011 = vunpack.c.l.b16 %v1821
    %v3012 = vunpack.c.h.b16 %v1821
    %v3013 = vunpack.c.l.b16 %v1822
    %v3014 = vunpack.c.h.b16 %v1822
    %v3015 = vunpack.c.l.b16 %v1823
    %v3016 = vunpack.c.h.b16 %v1823
    %v3017 = vunpack.c.l.b16 %v1824
    %v3018 = vunpack.c.h.b16 %v1824
    %v3019 = vunpack.c.l.b16 %v1825
    %v3020 = vunpack.c.h.b16 %v1825
    %v3021 = vunpack.c.l.b16 %v1826
    %v3022 = vunpack.c.h.b16 %v1826
    %v3023 = vunpack.c.l.b16 %v1827
    %v3024 = vunpack.c.h.b16 %v1827
    %v3025 = vunpack.c.l.b16 %v1828
    %v3026 = vunpack.c.h.b16 %v1828
    %v3027 = vunpack.c.l.b16 %v1829
    %v3028 = vunpack.c.h.b16 %v1829
    %v3029 = vunpack.c.l.b16 %v1830
    %v3030 = vunpack.c.h.b16 %v1830
    %v3031 = vunpack.c.l.b16 %v1831
    %v3032 = vunpack.c.h.b16 %v1831
    %v3033 = vunpack.c.l.b16 %v1832
    %v3034 = vunpack.c.h.b16 %v1832
    %v3035 = vunpack.c.l.b16 %v1833
    %v3036 = vunpack.c.h.b16 %v1833
    %v3037 = vunpack.c.l.b16 %v1834
    %v3038 = vunpack.c.h.b16 %v1834
    %v3039 = vunpack.c.l.b16 %v1835
    %v3040 = vunpack.c.h.b16 %v1835
    %v3041 = vunpack.c.l.b16 %v1836
    %v3042 = vunpack.c.h.b16 %v1836
    %v3043 = vunpack.c.l.b16 %v1837
    %v3044 = vunpack.c.h.b16 %v1837
    %v3045 = vunpack.c.l.b16 %v1838
    %v3046 = vunpack.c.h.b16 %v1838
    %v3047 = vunpack.c.l.b16 %v1839
    %v3048 = vunpack.c.h.b16 %v1839
    %v3049 = vunpack.c.l.b16 %v1840
    %v3050 = vunpack.c.h.b16 %v1840
    %v3051 = vunpack.c.l.b16 %v1841
    %v3052 = vunpack.c.h.b16 %v1841
    %v3053 = vunpack.c.l.b16 %v1842
    %v3054 = vunpack.c.h.b16 %v1842
    %v3055 = vunpack.c.l.b16 %v1843
    %v3056 = vunpack.c.h.b16 %v1843
    %v3057 = vunpack.c.l.b16 %v1844
    %v3058 = vunpack.c.h.b16 %v1844
    %v3059 = vunpack.c.l.b16 %v1845
    %v3060 = vunpack.c.h.b16 %v1845
    %v3061 = vunpack.c.l.b16 %v1846
    %v3062 = vunpack.c.h.b16 %v1846
    %v3063 = vunpack.c.l.b16 %v1847
    %v3064 = vunpack.c.h.b16 %v1847
    %v3065 = vunpack.c.l.b16 %v1848
    %v3066 = vunpack.c.h.b16 %v1848
    %v3067 = vunpack.c.l.b16 %v1849
    %v3068 = vunpack.c.h.b16 %v1849
    %v3069 = vunpack.c.l.b16 %v1850
    %v3070 = vunpack.c.h.b16 %v1850
    %v3071 = vunpack.c.l.b16 %v1851
    %v3072 = vunpack.c.h.b16 %v1851
    %v3073 = vunpack.c.l.b16 %v1852
    %v3074 = vunpack.c.h.b16 %v1852
    %v3075 = vunpack.c.l.b16 %v1853
    %v3076 = vunpack.c.h.b16 %v1853
    %v3077 = vunpack.c.l.b16 %v1854
    %v3078 = vunpack.c.h.b16 %v1854
    %v3079 = vunpack.c.l.b16 %v1855
    %v3080 = vunpack.c.h.b16 %v1855
    %v3081 = vunpack.c.l.b16 %v1856
    %v3082 = vunpack.c.h.b16 %v1856
    %v3083 = vunpack.c.l.b16 %v1857
    %v3084 = vunpack.c.h.b16 %v1857
    %v3085 = vunpack.c.l.b16 %v1858
    %v3086 = vunpack.c.h.b16 %v1858
    %v3087 = vunpack.c.l.b16 %v1859
    %v3088 = vunpack.c.h.b16 %v1859
    %v3089 = vunpack.c.l.b16 %v1860
    %v3090 = vunpack.c.h.b16 %v1860
    %v3091 = vunpack.c.l.b16 %v1861
    %v3092 = vunpack.c.h.b16 %v1861
    %v3093 = vunpack.c.l.b16 %v1862
    %v3094 = vunpack.c.h.b16 %v1862
    %v3095 = vunpack.c.l.b16 %v1863
    %v3096 = vunpack.c.h.b16 %v1863
    %v3097 = vunpack.c.l.b16 %v1864
    %v3098 = vunpack.c.h.b16 %v1864
    %v3099 = vunpack.c.l.b16 %v1865
    %v3100 = vunpack.c.h.b16 %v1865
    %v3101 = vunpack.c.l.b16 %v1866
    %v3102 = vunpack.c.h.b16 %v1866
    %v3103 = vunpack.c.l.b16 %v1867
    %v3104 = vunpack.c.h.b16 %v1867
    %v3105 = vunpack.c.l.b16 %v1868
    %v3106 = vunpack.c.h.b16 %v1868
    %v3107 = vunpack.c.l.b16 %v1869
    %v3108 = vunpack.c.h.b16 %v1869
    %v3109 = vunpack.c.l.b16 %v1870
    %v3110 = vunpack.c.h.b16 %v1870
    %v3111 = vunpack.c.l.b16 %v1871
    %v3112 = vunpack.c.h.b16 %v1871
    %v3113 = vunpack.c.l.b16 %v1872
    %v3114 = vunpack.c.h.b16 %v1872
    %v3115 = vunpack.c.l.b16 %v1873
    %v3116 = vunpack.c.h.b16 %v1873
    %v3117 = vunpack.c.l.b16 %v1874
    %v3118 = vunpack.c.h.b16 %v1874
    %v3119 = vunpack.c.l.b16 %v1875
    %v3120 = vunpack.c.h.b16 %v1875
    %v3121 = vunpack.c.l.b16 %v1876
    %v3122 = vunpack.c.h.b16 %v1876
    %v3123 = vunpack.c.l.b16 %v1877
    %v3124 = vunpack.c.h.b16 %v1877
    %v3125 = vunpack.c.l.b16 %v1878
    %v3126 = vunpack.c.h.b16 %v1878
    %v3127 = vunpack.c.l.b16 %v1879
    %v3128 = vunpack.c.h.b16 %v1879
    %v3129 = vunpack.c.l.b16 %v1880
    %v3130 = vunpack.c.h.b16 %v1880
    %v3131 = vunpack.c.l.b16 %v1881
    %v3132 = vunpack.c.h.b16 %v1881
    %v3133 = vunpack.c.l.b16 %v1882
    %v3134 = vunpack.c.h.b16 %v1882
    %v3135 = vunpack.c.l.b16 %v1883
    %v3136 = vunpack.c.h.b16 %v1883
    %v3137 = vunpack.c.l.b16 %v1884
    %v3138 = vunpack.c.h.b16 %v1884
    %v3139 = vunpack.c.l.b16 %v1885
    %v3140 = vunpack.c.h.b16 %v1885
    %v3141 = vunpack.c.l.b16 %v1886
    %v3142 = vunpack.c.h.b16 %v1886
    %v3143 = vunpack.c.l.b16 %v1887
    %v3144 = vunpack.c.h.b16 %v1887
    %v3145 = vunpack.c.l.b16 %v1888
    %v3146 = vunpack.c.h.b16 %v1888
    %v3147 = vunpack.c.l.b16 %v1889
    %v3148 = vunpack.c.h.b16 %v1889
    %v3149 = vunpack.c.l.b16 %v1890
    %v3150 = vunpack.c.h.b16 %v1890
    %v3151 = vunpack.c.l.b16 %v1891
    %v3152 = vunpack.c.h.b16 %v1891
    %v3153 = vunpack.c.l.b16 %v1892
    %v3154 = vunpack.c.h.b16 %v1892
    %v3155 = vunpack.c.l.b16 %v1893
    %v3156 = vunpack.c.h.b16 %v1893
    %v3157 = vunpack.c.l.b16 %v1894
    %v3158 = vunpack.c.h.b16 %v1894
    %v3159 = vunpack.c.l.b16 %v1895
    %v3160 = vunpack.c.h.b16 %v1895
    %v3161 = vunpack.c.l.b16 %v1896
    %v3162 = vunpack.c.h.b16 %v1896
    %v3163 = vunpack.c.l.b16 %v1897
    %v3164 = vunpack.c.h.b16 %v1897
    %v3165 = vunpack.c.l.b16 %v1898
    %v3166 = vunpack.c.h.b16 %v1898
    %v3167 = vunpack.c.l.b16 %v1899
    %v3168 = vunpack.c.h.b16 %v1899
    %v3169 = vunpack.c.l.b16 %v1900
    %v3170 = vunpack.c.h.b16 %v1900
    %v3171 = vunpack.c.l.b16 %v1901
    %v3172 = vunpack.c.h.b16 %v1901
    %v3173 = vunpack.c.l.b16 %v1902
    %v3174 = vunpack.c.h.b16 %v1902
    %v3175 = vunpack.c.l.b16 %v1903
    %v3176 = vunpack.c.h.b16 %v1903
    %v3177 = vunpack.c.l.b16 %v1904
    %v3178 = vunpack.c.h.b16 %v1904
    %v3179 = vunpack.c.l.b16 %v1905
    %v3180 = vunpack.c.h.b16 %v1905
    %v3181 = vunpack.c.l.b16 %v1906
    %v3182 = vunpack.c.h.b16 %v1906
    %v3183 = vunpack.c.l.b16 %v1907
    %v3184 = vunpack.c.h.b16 %v1907
    %v3185 = vunpack.c.l.b16 %v1908
    %v3186 = vunpack.c.h.b16 %v1908
    %v3187 = vunpack.c.l.b16 %v1909
    %v3188 = vunpack.c.h.b16 %v1909
    %v3189 = vunpack.c.l.b16 %v1910
    %v3190 = vunpack.c.h.b16 %v1910
    %v3191 = vunpack.c.l.b16 %v1911
    %v3192 = vunpack.c.h.b16 %v1911
    %v3193 = vunpack.c.l.b16 %v1912
    %v3194 = vunpack.c.h.b16 %v1912
    %v3195 = vunpack.c.l.b16 %v1913
    %v3196 = vunpack.c.h.b16 %v1913
    %v3197 = vunpack.c.l.b16 %v1914
    %v3198 = vunpack.c.h.b16 %v1914
    %v3199 = vunpack.c.l.b16 %v1915
    %v3200 = vunpack.c.h.b16 %v1915
    %v3201 = vunpack.c.l.b16 %v1916
    %v3202 = vunpack.c.h.b16 %v1916
    %v3203 = vunpack.c.l.b16 %v1917
    %v3204 = vunpack.c.h.b16 %v1917
    %v3205 = vunpack.c.l.b16 %v1918
    %v3206 = vunpack.c.h.b16 %v1918
    %v3207 = vunpack.c.l.b16 %v1919
    %v3208 = vunpack.c.h.b16 %v1919
    %v3209 = vunpack.c.l.b16 %v1920
    %v3210 = vunpack.c.h.b16 %v1920
    %v3211 = vunpack.c.l.b16 %v1921
    %v3212 = vunpack.c.h.b16 %v1921
    %v3213 = vunpack.c.l.b16 %v1922
    %v3214 = vunpack.c.h.b16 %v1922
    %v3215 = vunpack.c.l.b16 %v1923
    %v3216 = vunpack.c.h.b16 %v1923
    %v3217 = vunpack.c.l.b16 %v1924
    %v3218 = vunpack.c.h.b16 %v1924
    %v3219 = vunpack.c.l.b16 %v1925
    %v3220 = vunpack.c.h.b16 %v1925
    %v3221 = vunpack.c.l.b16 %v1926
    %v3222 = vunpack.c.h.b16 %v1926
    %v3223 = vunpack.c.l.b16 %v1927
    %v3224 = vunpack.c.h.b16 %v1927
    %v3225 = vunpack.c.l.b16 %v1928
    %v3226 = vunpack.c.h.b16 %v1928
    %v3227 = vunpack.c.l.b16 %v1929
    %v3228 = vunpack.c.h.b16 %v1929
    %v3229 = vunpack.c.l.b16 %v1930
    %v3230 = vunpack.c.h.b16 %v1930
    %v3231 = vunpack.c.l.b16 %v1931
    %v3232 = vunpack.c.h.b16 %v1931
    %v3233 = vunpack.c.l.b16 %v1932
    %v3234 = vunpack.c.h.b16 %v1932
    %v3235 = vunpack.c.l.b16 %v1933
    %v3236 = vunpack.c.h.b16 %v1933
    %v3237 = vunpack.c.l.b16 %v1934
    %v3238 = vunpack.c.h.b16 %v1934
    %v3239 = vunpack.c.l.b16 %v1935
    %v3240 = vunpack.c.h.b16 %v1935
    %v3241 = vunpack.c.l.b16 %v1936
    %v3242 = vunpack.c.h.b16 %v1936
    %v3243 = vunpack.c.l.b16 %v1937
    %v3244 = vunpack.c.h.b16 %v1937
    %v3245 = vunpack.c.l.b16 %v1938
    %v3246 = vunpack.c.h.b16 %v1938
    %v3247 = vunpack.c.l.b16 %v1939
    %v3248 = vunpack.c.h.b16 %v1939
    %v3249 = vunpack.c.l.b16 %v1940
    %v3250 = vunpack.c.h.b16 %v1940
    %v3251 = vunpack.c.l.b16 %v1941
    %v3252 = vunpack.c.h.b16 %v1941
    %v3253 = vunpack.c.l.b16 %v1942
    %v3254 = vunpack.c.h.b16 %v1942
    %v3255 = vunpack.c.l.b16 %v1943
    %v3256 = vunpack.c.h.b16 %v1943
    %v3257 = vunpack.c.l.b16 %v1944
    %v3258 = vunpack.c.h.b16 %v1944
    %v3259 = vunpack.c.l.b16 %v1945
    %v3260 = vunpack.c.h.b16 %v1945
    %v3261 = vunpack.c.l.b16 %v1946
    %v3262 = vunpack.c.h.b16 %v1946
    %v3263 = vpack.c.b16 %v3011, %v3007
    %v3264 = vpack.c.b16 %v3012, %v3008
    %v3265 = vpack.c.b16 %v3013, %v3009
    %v3266 = vpack.c.b16 %v3014, %v3010
    %v3267 = vpack.c.b16 %v3019, %v3015
    %v3268 = vpack.c.b16 %v3020, %v3016
    %v3269 = vpack.c.b16 %v3021, %v3017
    %v3270 = vpack.c.b16 %v3022, %v3018
    %v3271 = vpack.c.b16 %v3027, %v3023
    %v3272 = vpack.c.b16 %v3028, %v3024
    %v3273 = vpack.c.b16 %v3029, %v3025
    %v3274 = vpack.c.b16 %v3030, %v3026
    %v3275 = vpack.c.b16 %v3035, %v3031
    %v3276 = vpack.c.b16 %v3036, %v3032
    %v3277 = vpack.c.b16 %v3037, %v3033
    %v3278 = vpack.c.b16 %v3038, %v3034
    %v3279 = vpack.c.b16 %v3043, %v3039
    %v3280 = vpack.c.b16 %v3044, %v3040
    %v3281 = vpack.c.b16 %v3045, %v3041
    %v3282 = vpack.c.b16 %v3046, %v3042
    %v3283 = vpack.c.b16 %v3051, %v3047
    %v3284 = vpack.c.b16 %v3052, %v3048
    %v3285 = vpack.c.b16 %v3053, %v3049
    %v3286 = vpack.c.b16 %v3054, %v3050
    %v3287 = vpack.c.b16 %v3059, %v3055
    %v3288 = vpack.c.b16 %v3060, %v3056
    %v3289 = vpack.c.b16 %v3061, %v3057
    %v3290 = vpack.c.b16 %v3062, %v3058
    %v3291 = vpack.c.b16 %v3067, %v3063
    %v3292 = vpack.c.b16 %v3068, %v3064
    %v3293 = vpack.c.b16 %v3069, %v3065
    %v3294 = vpack.c.b16 %v3070, %v3066
    %v3295 = vpack.c.b16 %v3075, %v3071
    %v3296 = vpack.c.b16 %v3076, %v3072
    %v3297 = vpack.c.b16 %v3077, %v3073
    %v3298 = vpack.c.b16 %v3078, %v3074
    %v3299 = vpack.c.b16 %v3083, %v3079
    %v3300 = vpack.c.b16 %v3084, %v3080
    %v3301 = vpack.c.b16 %v3085, %v3081
    %v3302 = vpack.c.b16 %v3086, %v3082
    %v3303 = vpack.c.b16 %v3091, %v3087
    %v3304 = vpack.c.b16 %v3092, %v3088
    %v3305 = vpack.c.b16 %v3093, %v3089
    %v3306 = vpack.c.b16 %v3094, %v3090
    %v3307 = vpack.c.b16 %v3099, %v3095
    %v3308 = vpack.c.b16 %v3100, %v3096
    %v3309 = vpack.c.b16 %v3101, %v3097
    %v3310 = vpack.c.b16 %v3102, %v3098
    %v3311 = vpack.c.b16 %v3107, %v3103
    %v3312 = vpack.c.b16 %v3108, %v3104
    %v3313 = vpack.c.b16 %v3109, %v3105
    %v3314 = vpack.c.b16 %v3110, %v3106
    %v3315 = vpack.c.b16 %v3115, %v3111
    %v3316 = vpack.c.b16 %v3116, %v3112
    %v3317 = vpack.c.b16 %v3117, %v3113
    %v3318 = vpack.c.b16 %v3118, %v3114
    %v3319 = vpack.c.b16 %v3123, %v3119
    %v3320 = vpack.c.b16 %v3124, %v3120
    %v3321 = vpack.c.b16 %v3125, %v3121
    %v3322 = vpack.c.b16 %v3126, %v3122
    %v3323 = vpack.c.b16 %v3131, %v3127
    %v3324 = vpack.c.b16 %v3132, %v3128
    %v3325 = vpack.c.b16 %v3133, %v3129
    %v3326 = vpack.c.b16 %v3134, %v3130
    %v3327 = vpack.c.b16 %v3139, %v3135
    %v3328 = vpack.c.b16 %v3140, %v3136
    %v3329 = vpack.c.b16 %v3141, %v3137
    %v3330 = vpack.c.b16 %v3142, %v3138
    %v3331 = vpack.c.b16 %v3147, %v3143
    %v3332 = vpack.c.b16 %v3148, %v3144
    %v3333 = vpack.c.b16 %v3149, %v3145
    %v3334 = vpack.c.b16 %v3150, %v3146
    %v3335 = vpack.c.b16 %v3155, %v3151
    %v3336 = vpack.c.b16 %v3156, %v3152
    %v3337 = vpack.c.b16 %v3157, %v3153
    %v3338 = vpack.c.b16 %v3158, %v3154
    %v3339 = vpack.c.b16 %v3163, %v3159
    %v3340 = vpack.c.b16 %v3164, %v3160
    %v3341 = vpack.c.b16 %v3165, %v3161
    %v3342 = vpack.c.b16 %v3166, %v3162
    %v3343 = vpack.c.b16 %v3171, %v3167
    %v3344 = vpack.c.b16 %v3172, %v3168
    %v3345 = vpack.c.b16 %v3173, %v3169
    %v3346 = vpack.c.b16 %v3174, %v3170
    %v3347 = vpack.c.b16 %v3179, %v3175
    %v3348 = vpack.c.b16 %v3180, %v3176
    %v3349 = vpack.c.b16 %v3181, %v3177
    %v3350 = vpack.c.b16 %v3182, %v3178
    %v3351 = vpack.c.b16 %v3187, %v3183
    %v3352 = vpack.c.b16 %v3188, %v3184
    %v3353 = vpack.c.b16 %v3189, %v3185
    %v3354 = vpack.c.b16 %v3190, %v3186
    %v3355 = vpack.c.b16 %v3195, %v3191
    %v3356 = vpack.c.b16 %v3196, %v3192
    %v3357 = vpack.c.b16 %v3197, %v3193
    %v3358 = vpack.c.b16 %v3198, %v3194
    %v3359 = vpack.c.b16 %v3203, %v3199
    %v3360 = vpack.c.b16 %v3204, %v3200
    %v3361 = vpack.c.b16 %v3205, %v3201
    %v3362 = vpack.c.b16 %v3206, %v3202
    %v3363 = vpack.c.b16 %v3211, %v3207
    %v3364 = vpack.c.b16 %v3212, %v3208
    %v3365 = vpack.c.b16 %v3213, %v3209
    %v3366 = vpack.c.b16 %v3214, %v3210
    %v3367 = vpack.c.b16 %v3219, %v3215
    %v3368 = vpack.c.b16 %v3220, %v3216
    %v3369 = vpack.c.b16 %v3221, %v3217
    %v3370 = vpack.c.b16 %v3222, %v3218
    %v3371 = vpack.c.b16 %v3227, %v3223
    %v3372 = vpack.c.b16 %v3228, %v3224
    %v3373 = vpack.c.b16 %v3229, %v3225
    %v3374 = vpack.c.b16 %v3230, %v3226
    %v3375 = vpack.c.b16 %v3235, %v3231
    %v3376 = vpack.c.b16 %v3236, %v3232
    %v3377 = vpack.c.b16 %v3237, %v3233
    %v3378 = vpack.c.b16 %v3238, %v3234
    %v3379 = vpack.c.b16 %v3243, %v3239
    %v3380 = vpack.c.b16 %v3244, %v3240
    %v3381 = vpack.c.b16 %v3245, %v3241
    %v3382 = vpack.c.b16 %v3246, %v3242
    %v3383 = vpack.c.b16 %v3251, %v3247
    %v3384 = vpack.c.b16 %v3252, %v3248
    %v3385 = vpack.c.b16 %v3253, %v3249
    %v3386 = vpack.c.b16 %v3254, %v3250
    %v3387 = vpack.c.b16 %v3259, %v3255
    %v3388 = vpack.c.b16 %v3260, %v3256
    %v3389 = vpack.c.b16 %v3261, %v3257
    %v3390 = vpack.c.b16 %v3262, %v3258
    %3519 = vmatprep.subr.bf16.mxu0 %v3292
    %3520 = vmatpush1.bf16.msra.mxu0 %v3291
    %3521 = vmatprep.subr.bf16.mxu0 %v3288
    %3522 = vmatpush1.bf16.msra.mxu0 %v3287
    %3523 = vmatprep.subr.bf16.mxu0 %v3284
    %3524 = vmatpush1.bf16.msra.mxu0 %v3283
    %3525 = vmatprep.subr.bf16.mxu0 %v3280
    %3526 = vmatpush1.bf16.msra.mxu0 %v3279
    %3527 = vmatprep.subr.bf16.mxu0 %v3276
    %3528 = vmatpush1.bf16.msra.mxu0 %v3275
    %3529 = vmatprep.subr.bf16.mxu0 %v3272
    %3530 = vmatpush1.bf16.msra.mxu0 %v3271
    %3531 = vmatprep.subr.bf16.mxu0 %v3268
    %3532 = vmatpush1.bf16.msra.mxu0 %v3267
    %3533 = vmatprep.subr.bf16.mxu0 %v3264
    %3534 = vmatpush1.bf16.msra.mxu0 %v3263
    %3535 = vmatprep.subr.bf16.mxu0 %v3324
    %3536 = vmatpush2.bf16.msra.mxu0 %v3323
    %3537 = vmatprep.subr.bf16.mxu0 %v3320
    %3538 = vmatpush2.bf16.msra.mxu0 %v3319
    %3539 = vmatprep.subr.bf16.mxu0 %v3316
    %3540 = vmatpush2.bf16.msra.mxu0 %v3315
    %3541 = vmatprep.subr.bf16.mxu0 %v3312
    %3542 = vmatpush2.bf16.msra.mxu0 %v3311
    %3543 = vmatprep.subr.bf16.mxu0 %v3308
    %3544 = vmatpush2.bf16.msra.mxu0 %v3307
    %3545 = vmatprep.subr.bf16.mxu0 %v3304
    %3546 = vmatpush2.bf16.msra.mxu0 %v3303
    %3547 = vmatprep.subr.bf16.mxu0 %v3300
    %3548 = vmatpush2.bf16.msra.mxu0 %v3299
    %3549 = vmatprep.subr.bf16.mxu0 %v3296
    %3550 = vmatpush2.bf16.msra.mxu0 %v3295
    %3551 = vmatprep.mubr.bf16.mxu0 %v1812
    %3552 = vmatmul.mubr.bf16.gmra.mxu0 %v1811
    %v3553 = vpop.f32.mrf.mxu0
    %v3554 = vadd.f32 %v2791, %v3553
    %v3555 = vpop.f32.mrf.mxu0
    %v3556 = vadd.f32 %v2793, %v3555
    %v3557 = vpop.f32.mrf.mxu0
    %v3558 = vpop.f32.mrf.mxu0
    %3559 = vdwg.mxu0
    %3560 = vmatprep.subr.bf16.mxu0 %v3356
    %3561 = vmatpush1.bf16.msra.mxu0 %v3355
    %3562 = vmatprep.subr.bf16.mxu0 %v3352
    %3563 = vmatpush1.bf16.msra.mxu0 %v3351
    %3564 = vmatprep.subr.bf16.mxu0 %v3348
    %3565 = vmatpush1.bf16.msra.mxu0 %v3347
    %3566 = vmatprep.subr.bf16.mxu0 %v3344
    %3567 = vmatpush1.bf16.msra.mxu0 %v3343
    %3568 = vmatprep.subr.bf16.mxu0 %v3340
    %3569 = vmatpush1.bf16.msra.mxu0 %v3339
    %3570 = vmatprep.subr.bf16.mxu0 %v3336
    %3571 = vmatpush1.bf16.msra.mxu0 %v3335
    %3572 = vmatprep.subr.bf16.mxu0 %v3332
    %3573 = vmatpush1.bf16.msra.mxu0 %v3331
    %3574 = vmatprep.subr.bf16.mxu0 %v3328
    %3575 = vmatpush1.bf16.msra.mxu0 %v3327
    %3576 = vmatprep.subr.bf16.mxu0 %v3388
    %3577 = vmatpush2.bf16.msra.mxu0 %v3387
    %3578 = vmatprep.subr.bf16.mxu0 %v3384
    %3579 = vmatpush2.bf16.msra.mxu0 %v3383
    %3580 = vmatprep.subr.bf16.mxu0 %v3380
    %3581 = vmatpush2.bf16.msra.mxu0 %v3379
    %3582 = vmatprep.subr.bf16.mxu0 %v3376
    %3583 = vmatpush2.bf16.msra.mxu0 %v3375
    %3584 = vmatprep.subr.bf16.mxu0 %v3372
    %3585 = vmatpush2.bf16.msra.mxu0 %v3371
    %3586 = vmatprep.subr.bf16.mxu0 %v3368
    %3587 = vmatpush2.bf16.msra.mxu0 %v3367
    %3588 = vmatprep.subr.bf16.mxu0 %v3364
    %3589 = vmatpush2.bf16.msra.mxu0 %v3363
    %3590 = vmatprep.subr.bf16.mxu0 %v3360
    %3591 = vmatpush2.bf16.msra.mxu0 %v3359
    %3592 = vmatprep.mubr.bf16.mxu0 %v1814
    %3593 = vmatmul.mubr.bf16.gmra.mxu0 %v1813
    %v3594 = vpop.f32.mrf.mxu0
    %v3595 = vadd.f32 %v3554, %v3594
    %v3596 = vpop.f32.mrf.mxu0
    %v3597 = vadd.f32 %v3556, %v3596
    %v3598 = vpop.f32.mrf.mxu0
    %v3599 = vpop.f32.mrf.mxu0
    %3600 = vdwg.mxu0
    %3601 = vmatprep.subr.bf16.mxu0 %v3294
    %3602 = vmatpush1.bf16.msra.mxu0 %v3293
    %3603 = vmatprep.subr.bf16.mxu0 %v3290
    %3604 = vmatpush1.bf16.msra.mxu0 %v3289
    %3605 = vmatprep.subr.bf16.mxu0 %v3286
    %3606 = vmatpush1.bf16.msra.mxu0 %v3285
    %3607 = vmatprep.subr.bf16.mxu0 %v3282
    %3608 = vmatpush1.bf16.msra.mxu0 %v3281
    %3609 = vmatprep.subr.bf16.mxu0 %v3278
    %3610 = vmatpush1.bf16.msra.mxu0 %v3277
    %3611 = vmatprep.subr.bf16.mxu0 %v3274
    %3612 = vmatpush1.bf16.msra.mxu0 %v3273
    %3613 = vmatprep.subr.bf16.mxu0 %v3270
    %3614 = vmatpush1.bf16.msra.mxu0 %v3269
    %3615 = vmatprep.subr.bf16.mxu0 %v3266
    %3616 = vmatpush1.bf16.msra.mxu0 %v3265
    %3617 = vmatprep.subr.bf16.mxu0 %v3326
    %3618 = vmatpush2.bf16.msra.mxu0 %v3325
    %3619 = vmatprep.subr.bf16.mxu0 %v3322
    %3620 = vmatpush2.bf16.msra.mxu0 %v3321
    %3621 = vmatprep.subr.bf16.mxu0 %v3318
    %3622 = vmatpush2.bf16.msra.mxu0 %v3317
    %3623 = vmatprep.subr.bf16.mxu0 %v3314
    %3624 = vmatpush2.bf16.msra.mxu0 %v3313
    %3625 = vmatprep.subr.bf16.mxu0 %v3310
    %3626 = vmatpush2.bf16.msra.mxu0 %v3309
    %3627 = vmatprep.subr.bf16.mxu0 %v3306
    %3628 = vmatpush2.bf16.msra.mxu0 %v3305
    %3629 = vmatprep.subr.bf16.mxu0 %v3302
    %3630 = vmatpush2.bf16.msra.mxu0 %v3301
    %3631 = vmatprep.subr.bf16.mxu0 %v3298
    %3632 = vmatpush2.bf16.msra.mxu0 %v3297
    %3633 = vmatprep.mubr.bf16.mxu0 %v1812
    %3634 = vmatmul.mubr.bf16.gmra.mxu0 %v1811
    %v3635 = vpop.f32.mrf.mxu0
    %v3636 = vadd.f32 %v2873, %v3635
    %v3637 = vpop.f32.mrf.mxu0
    %v3638 = vadd.f32 %v2875, %v3637
    %v3639 = vpop.f32.mrf.mxu0
    %v3640 = vpop.f32.mrf.mxu0
    %3641 = vdwg.mxu0
    %3642 = vmatprep.subr.bf16.mxu0 %v3358
    %3643 = vmatpush1.bf16.msra.mxu0 %v3357
    %3644 = vmatprep.subr.bf16.mxu0 %v3354
    %3645 = vmatpush1.bf16.msra.mxu0 %v3353
    %3646 = vmatprep.subr.bf16.mxu0 %v3350
    %3647 = vmatpush1.bf16.msra.mxu0 %v3349
    %3648 = vmatprep.subr.bf16.mxu0 %v3346
    %3649 = vmatpush1.bf16.msra.mxu0 %v3345
    %3650 = vmatprep.subr.bf16.mxu0 %v3342
    %3651 = vmatpush1.bf16.msra.mxu0 %v3341
    %3652 = vmatprep.subr.bf16.mxu0 %v3338
    %3653 = vmatpush1.bf16.msra.mxu0 %v3337
    %3654 = vmatprep.subr.bf16.mxu0 %v3334
    %3655 = vmatpush1.bf16.msra.mxu0 %v3333
    %3656 = vmatprep.subr.bf16.mxu0 %v3330
    %3657 = vmatpush1.bf16.msra.mxu0 %v3329
    %3658 = vmatprep.subr.bf16.mxu0 %v3390
    %3659 = vmatpush2.bf16.msra.mxu0 %v3389
    %3660 = vmatprep.subr.bf16.mxu0 %v3386
    %3661 = vmatpush2.bf16.msra.mxu0 %v3385
    %3662 = vmatprep.subr.bf16.mxu0 %v3382
    %3663 = vmatpush2.bf16.msra.mxu0 %v3381
    %3664 = vmatprep.subr.bf16.mxu0 %v3378
    %3665 = vmatpush2.bf16.msra.mxu0 %v3377
    %3666 = vmatprep.subr.bf16.mxu0 %v3374
    %3667 = vmatpush2.bf16.msra.mxu0 %v3373
    %3668 = vmatprep.subr.bf16.mxu0 %v3370
    %3669 = vmatpush2.bf16.msra.mxu0 %v3369
    %3670 = vmatprep.subr.bf16.mxu0 %v3366
    %3671 = vmatpush2.bf16.msra.mxu0 %v3365
    %3672 = vmatprep.subr.bf16.mxu0 %v3362
    %3673 = vmatpush2.bf16.msra.mxu0 %v3361
    %3674 = vmatprep.mubr.bf16.mxu0 %v1814
    %3675 = vmatmul.mubr.bf16.gmra.mxu0 %v1813
    %v3676 = vpop.f32.mrf.mxu0
    %v3677 = vadd.f32 %v3636, %v3676
    %v3678 = vpop.f32.mrf.mxu0
    %v3679 = vadd.f32 %v3638, %v3678
    %v3680 = vpop.f32.mrf.mxu0
    %v3681 = vpop.f32.mrf.mxu0
    %3682 = vdwg.mxu0
    %v3683 = vld [vmem:[%s6] sm:$0xf]
    %v3685 = vlaneseq
    %v3686 = vshrl.u32 %v3685, 7
    %v3687 = vsub.s32 0, %v3686
    %v3688 = vrot.slane %v3683, %v3687
    %v3689 = vlaneseq
    %v3690 = vshrl.u32 %v3689, 7
    %v3691 = vsub.s32 1, %v3690
    %v3692 = vrot.slane %v3683, %v3691
    %v3693 = vlaneseq
    %v3694 = vshrl.u32 %v3693, 7
    %v3695 = vsub.s32 2, %v3694
    %v3696 = vrot.slane %v3683, %v3695
    %v3697 = vlaneseq
    %v3698 = vshrl.u32 %v3697, 7
    %v3699 = vsub.s32 3, %v3698
    %v3700 = vrot.slane %v3683, %v3699
    %v3705 = vadd.f32 %v3595, %v3688
    %v3706 = vadd.f32 %v3597, %v3692
    %v3707 = vadd.f32 %v3677, %v3696
    %v3708 = vadd.f32 %v3679, %v3700
    %v3709 = vmax.f32 %v3705, 0.0
    %v3710 = vmax.f32 %v3706, 0.0
    %v3711 = vmax.f32 %v3707, 0.0
    %v3712 = vmax.f32 %v3708, 0.0
    %v3713 = vpack.c.bf16 %v3709, %v3709
    %v3714 = vpack.c.bf16 %v3710, %v3710
    %v3715 = vpack.c.bf16 %v3711, %v3711
    %v3716 = vpack.c.bf16 %v3712, %v3712
    %v3717 = vld [vmem:[#allocation6] sm:$0xf]
    %v3718 = vld [vmem:[#allocation6 + $0x4] sm:$0xf]
    %v3719 = vld [vmem:[#allocation6 + $0x8] sm:$0xf]
    %v3720 = vld [vmem:[#allocation6 + $0xc] sm:$0xf]
    %v3721 = vld [vmem:[#allocation6 + $0x10] sm:$0xf]
    %v3722 = vld [vmem:[#allocation6 + $0x14] sm:$0xf]
    %v3723 = vld [vmem:[#allocation6 + $0x18] sm:$0xf]
    %v3724 = vld [vmem:[#allocation6 + $0x1c] sm:$0xf]
    %v3725 = vld [vmem:[#allocation6 + $0x20] sm:$0xf]
    %v3726 = vld [vmem:[#allocation6 + $0x24] sm:$0xf]
    %v3727 = vld [vmem:[#allocation6 + $0x28] sm:$0xf]
    %v3728 = vld [vmem:[#allocation6 + $0x2c] sm:$0xf]
    %v3729 = vld [vmem:[#allocation6 + $0x30] sm:$0xf]
    %v3730 = vld [vmem:[#allocation6 + $0x34] sm:$0xf]
    %v3731 = vld [vmem:[#allocation6 + $0x38] sm:$0xf]
    %v3732 = vld [vmem:[#allocation6 + $0x3c] sm:$0xf]
    %v3733 = vld [vmem:[#allocation6 + $0x40] sm:$0xf]
    %v3734 = vld [vmem:[#allocation6 + $0x44] sm:$0xf]
    %v3735 = vld [vmem:[#allocation6 + $0x48] sm:$0xf]
    %v3736 = vld [vmem:[#allocation6 + $0x4c] sm:$0xf]
    %v3737 = vld [vmem:[#allocation6 + $0x50] sm:$0xf]
    %v3738 = vld [vmem:[#allocation6 + $0x54] sm:$0xf]
    %v3739 = vld [vmem:[#allocation6 + $0x58] sm:$0xf]
    %v3740 = vld [vmem:[#allocation6 + $0x5c] sm:$0xf]
    %v3741 = vld [vmem:[#allocation6 + $0x60] sm:$0xf]
    %v3742 = vld [vmem:[#allocation6 + $0x64] sm:$0xf]
    %v3743 = vld [vmem:[#allocation6 + $0x68] sm:$0xf]
    %v3744 = vld [vmem:[#allocation6 + $0x6c] sm:$0xf]
    %v3745 = vld [vmem:[#allocation6 + $0x70] sm:$0xf]
    %v3746 = vld [vmem:[#allocation6 + $0x74] sm:$0xf]
    %v3747 = vld [vmem:[#allocation6 + $0x78] sm:$0xf]
    %v3748 = vld [vmem:[#allocation6 + $0x7c] sm:$0xf]
    %v3749 = vld [vmem:[#allocation6 + $0x80] sm:$0xf]
    %v3750 = vld [vmem:[#allocation6 + $0x84] sm:$0xf]
    %v3751 = vld [vmem:[#allocation6 + $0x88] sm:$0xf]
    %v3752 = vld [vmem:[#allocation6 + $0x8c] sm:$0xf]
    %v3753 = vld [vmem:[#allocation6 + $0x90] sm:$0xf]
    %v3754 = vld [vmem:[#allocation6 + $0x94] sm:$0xf]
    %v3755 = vld [vmem:[#allocation6 + $0x98] sm:$0xf]
    %v3756 = vld [vmem:[#allocation6 + $0x9c] sm:$0xf]
    %v3757 = vld [vmem:[#allocation6 + $0xa0] sm:$0xf]
    %v3758 = vld [vmem:[#allocation6 + $0xa4] sm:$0xf]
    %v3759 = vld [vmem:[#allocation6 + $0xa8] sm:$0xf]
    %v3760 = vld [vmem:[#allocation6 + $0xac] sm:$0xf]
    %v3761 = vld [vmem:[#allocation6 + $0xb0] sm:$0xf]
    %v3762 = vld [vmem:[#allocation6 + $0xb4] sm:$0xf]
    %v3763 = vld [vmem:[#allocation6 + $0xb8] sm:$0xf]
    %v3764 = vld [vmem:[#allocation6 + $0xbc] sm:$0xf]
    %v3765 = vld [vmem:[#allocation6 + $0xc0] sm:$0xf]
    %v3766 = vld [vmem:[#allocation6 + $0xc4] sm:$0xf]
    %v3767 = vld [vmem:[#allocation6 + $0xc8] sm:$0xf]
    %v3768 = vld [vmem:[#allocation6 + $0xcc] sm:$0xf]
    %v3769 = vld [vmem:[#allocation6 + $0xd0] sm:$0xf]
    %v3770 = vld [vmem:[#allocation6 + $0xd4] sm:$0xf]
    %v3771 = vld [vmem:[#allocation6 + $0xd8] sm:$0xf]
    %v3772 = vld [vmem:[#allocation6 + $0xdc] sm:$0xf]
    %v3773 = vld [vmem:[#allocation6 + $0xe0] sm:$0xf]
    %v3774 = vld [vmem:[#allocation6 + $0xe4] sm:$0xf]
    %v3775 = vld [vmem:[#allocation6 + $0xe8] sm:$0xf]
    %v3776 = vld [vmem:[#allocation6 + $0xec] sm:$0xf]
    %v3777 = vld [vmem:[#allocation6 + $0xf0] sm:$0xf]
    %v3778 = vld [vmem:[#allocation6 + $0xf4] sm:$0xf]
    %v3779 = vld [vmem:[#allocation6 + $0xf8] sm:$0xf]
    %v3780 = vld [vmem:[#allocation6 + $0xfc] sm:$0xf]
    %v3781 = vld [vmem:[%s8] sm:$0x1]
    %v3783 = vlaneseq
    %v3784 = vshrl.u32 %v3783, 7
    %v3785 = vsub.s32 0, %v3784
    %v3786 = vrot.slane %v3781, %v3785
    %v3852 = vunpack.c.l.b16 %v3717
    %v3853 = vunpack.c.l.b16 %v3718
    %v3854 = vunpack.c.l.b16 %v3719
    %v3855 = vunpack.c.l.b16 %v3720
    %v3856 = vunpack.c.l.b16 %v3721
    %v3857 = vunpack.c.l.b16 %v3722
    %v3858 = vunpack.c.l.b16 %v3723
    %v3859 = vunpack.c.l.b16 %v3724
    %v3860 = vunpack.c.l.b16 %v3725
    %v3861 = vunpack.c.l.b16 %v3726
    %v3862 = vunpack.c.l.b16 %v3727
    %v3863 = vunpack.c.l.b16 %v3728
    %v3864 = vunpack.c.l.b16 %v3729
    %v3865 = vunpack.c.l.b16 %v3730
    %v3866 = vunpack.c.l.b16 %v3731
    %v3867 = vunpack.c.l.b16 %v3732
    %v3868 = vunpack.c.l.b16 %v3733
    %v3869 = vunpack.c.l.b16 %v3734
    %v3870 = vunpack.c.l.b16 %v3735
    %v3871 = vunpack.c.l.b16 %v3736
    %v3872 = vunpack.c.l.b16 %v3737
    %v3873 = vunpack.c.l.b16 %v3738
    %v3874 = vunpack.c.l.b16 %v3739
    %v3875 = vunpack.c.l.b16 %v3740
    %v3876 = vunpack.c.l.b16 %v3741
    %v3877 = vunpack.c.l.b16 %v3742
    %v3878 = vunpack.c.l.b16 %v3743
    %v3879 = vunpack.c.l.b16 %v3744
    %v3880 = vunpack.c.l.b16 %v3745
    %v3881 = vunpack.c.l.b16 %v3746
    %v3882 = vunpack.c.l.b16 %v3747
    %v3883 = vunpack.c.l.b16 %v3748
    %v3884 = vunpack.c.l.b16 %v3749
    %v3885 = vunpack.c.l.b16 %v3750
    %v3886 = vunpack.c.l.b16 %v3751
    %v3887 = vunpack.c.l.b16 %v3752
    %v3888 = vunpack.c.l.b16 %v3753
    %v3889 = vunpack.c.l.b16 %v3754
    %v3890 = vunpack.c.l.b16 %v3755
    %v3891 = vunpack.c.l.b16 %v3756
    %v3892 = vunpack.c.l.b16 %v3757
    %v3893 = vunpack.c.l.b16 %v3758
    %v3894 = vunpack.c.l.b16 %v3759
    %v3895 = vunpack.c.l.b16 %v3760
    %v3896 = vunpack.c.l.b16 %v3761
    %v3897 = vunpack.c.l.b16 %v3762
    %v3898 = vunpack.c.l.b16 %v3763
    %v3899 = vunpack.c.l.b16 %v3764
    %v3900 = vunpack.c.l.b16 %v3765
    %v3901 = vunpack.c.l.b16 %v3766
    %v3902 = vunpack.c.l.b16 %v3767
    %v3903 = vunpack.c.l.b16 %v3768
    %v3904 = vunpack.c.l.b16 %v3769
    %v3905 = vunpack.c.l.b16 %v3770
    %v3906 = vunpack.c.l.b16 %v3771
    %v3907 = vunpack.c.l.b16 %v3772
    %v3908 = vunpack.c.l.b16 %v3773
    %v3909 = vunpack.c.l.b16 %v3774
    %v3910 = vunpack.c.l.b16 %v3775
    %v3911 = vunpack.c.l.b16 %v3776
    %v3912 = vunpack.c.l.b16 %v3777
    %v3913 = vunpack.c.l.b16 %v3778
    %v3914 = vunpack.c.l.b16 %v3779
    %v3915 = vunpack.c.l.b16 %v3780
    %v3916 = vpack.c.b16 %v3853, %v3852
    %v3917 = vpack.c.b16 %v3855, %v3854
    %v3918 = vpack.c.b16 %v3857, %v3856
    %v3919 = vpack.c.b16 %v3859, %v3858
    %v3920 = vpack.c.b16 %v3861, %v3860
    %v3921 = vpack.c.b16 %v3863, %v3862
    %v3922 = vpack.c.b16 %v3865, %v3864
    %v3923 = vpack.c.b16 %v3867, %v3866
    %v3924 = vpack.c.b16 %v3869, %v3868
    %v3925 = vpack.c.b16 %v3871, %v3870
    %v3926 = vpack.c.b16 %v3873, %v3872
    %v3927 = vpack.c.b16 %v3875, %v3874
    %v3928 = vpack.c.b16 %v3877, %v3876
    %v3929 = vpack.c.b16 %v3879, %v3878
    %v3930 = vpack.c.b16 %v3881, %v3880
    %v3931 = vpack.c.b16 %v3883, %v3882
    %v3932 = vpack.c.b16 %v3885, %v3884
    %v3933 = vpack.c.b16 %v3887, %v3886
    %v3934 = vpack.c.b16 %v3889, %v3888
    %v3935 = vpack.c.b16 %v3891, %v3890
    %v3936 = vpack.c.b16 %v3893, %v3892
    %v3937 = vpack.c.b16 %v3895, %v3894
    %v3938 = vpack.c.b16 %v3897, %v3896
    %v3939 = vpack.c.b16 %v3899, %v3898
    %v3940 = vpack.c.b16 %v3901, %v3900
    %v3941 = vpack.c.b16 %v3903, %v3902
    %v3942 = vpack.c.b16 %v3905, %v3904
    %v3943 = vpack.c.b16 %v3907, %v3906
    %v3944 = vpack.c.b16 %v3909, %v3908
    %v3945 = vpack.c.b16 %v3911, %v3910
    %v3946 = vpack.c.b16 %v3913, %v3912
    %v3947 = vpack.c.b16 %v3915, %v3914
    %3980 = vmatprep.subr.bf16.mxu0 0
    %3981 = vmatpush1.bf16.msra.mxu0 %v3923
    %3982 = vmatprep.subr.bf16.mxu0 0
    %3983 = vmatpush1.bf16.msra.mxu0 %v3922
    %3984 = vmatprep.subr.bf16.mxu0 0
    %3985 = vmatpush1.bf16.msra.mxu0 %v3921
    %3986 = vmatprep.subr.bf16.mxu0 0
    %3987 = vmatpush1.bf16.msra.mxu0 %v3920
    %3988 = vmatprep.subr.bf16.mxu0 0
    %3989 = vmatpush1.bf16.msra.mxu0 %v3919
    %3990 = vmatprep.subr.bf16.mxu0 0
    %3991 = vmatpush1.bf16.msra.mxu0 %v3918
    %3992 = vmatprep.subr.bf16.mxu0 0
    %3993 = vmatpush1.bf16.msra.mxu0 %v3917
    %3994 = vmatprep.subr.bf16.mxu0 0
    %3995 = vmatpush1.bf16.msra.mxu0 %v3916
    %3996 = vmatprep.subr.bf16.mxu0 0
    %3997 = vmatpush2.bf16.msra.mxu0 %v3931
    %3998 = vmatprep.subr.bf16.mxu0 0
    %3999 = vmatpush2.bf16.msra.mxu0 %v3930
    %4000 = vmatprep.subr.bf16.mxu0 0
    %4001 = vmatpush2.bf16.msra.mxu0 %v3929
    %4002 = vmatprep.subr.bf16.mxu0 0
    %4003 = vmatpush2.bf16.msra.mxu0 %v3928
    %4004 = vmatprep.subr.bf16.mxu0 0
    %4005 = vmatpush2.bf16.msra.mxu0 %v3927
    %4006 = vmatprep.subr.bf16.mxu0 0
    %4007 = vmatpush2.bf16.msra.mxu0 %v3926
    %4008 = vmatprep.subr.bf16.mxu0 0
    %4009 = vmatpush2.bf16.msra.mxu0 %v3925
    %4010 = vmatprep.subr.bf16.mxu0 0
    %4011 = vmatpush2.bf16.msra.mxu0 %v3924
    %4012 = vmatprep.mubr.bf16.mxu0 %v3714
    %4013 = vmatmul.mubr.bf16.gmra.mxu0 %v3713
    %v4014 = vpop.f32.mrf.mxu0
    %v4015 = vadd.f32 %v3786, %v4014
    %v4016 = vpop.f32.mrf.mxu0
    %v4017 = vpop.f32.mrf.mxu0
    %v4018 = vpop.f32.mrf.mxu0
    %4019 = vdwg.mxu0
    %4020 = vmatprep.subr.bf16.mxu0 0
    %4021 = vmatpush1.bf16.msra.mxu0 %v3939
    %4022 = vmatprep.subr.bf16.mxu0 0
    %4023 = vmatpush1.bf16.msra.mxu0 %v3938
    %4024 = vmatprep.subr.bf16.mxu0 0
    %4025 = vmatpush1.bf16.msra.mxu0 %v3937
    %4026 = vmatprep.subr.bf16.mxu0 0
    %4027 = vmatpush1.bf16.msra.mxu0 %v3936
    %4028 = vmatprep.subr.bf16.mxu0 0
    %4029 = vmatpush1.bf16.msra.mxu0 %v3935
    %4030 = vmatprep.subr.bf16.mxu0 0
    %4031 = vmatpush1.bf16.msra.mxu0 %v3934
    %4032 = vmatprep.subr.bf16.mxu0 0
    %4033 = vmatpush1.bf16.msra.mxu0 %v3933
    %4034 = vmatprep.subr.bf16.mxu0 0
    %4035 = vmatpush1.bf16.msra.mxu0 %v3932
    %4036 = vmatprep.subr.bf16.mxu0 0
    %4037 = vmatpush2.bf16.msra.mxu0 %v3947
    %4038 = vmatprep.subr.bf16.mxu0 0
    %4039 = vmatpush2.bf16.msra.mxu0 %v3946
    %4040 = vmatprep.subr.bf16.mxu0 0
    %4041 = vmatpush2.bf16.msra.mxu0 %v3945
    %4042 = vmatprep.subr.bf16.mxu0 0
    %4043 = vmatpush2.bf16.msra.mxu0 %v3944
    %4044 = vmatprep.subr.bf16.mxu0 0
    %4045 = vmatpush2.bf16.msra.mxu0 %v3943
    %4046 = vmatprep.subr.bf16.mxu0 0
    %4047 = vmatpush2.bf16.msra.mxu0 %v3942
    %4048 = vmatprep.subr.bf16.mxu0 0
    %4049 = vmatpush2.bf16.msra.mxu0 %v3941
    %4050 = vmatprep.subr.bf16.mxu0 0
    %4051 = vmatpush2.bf16.msra.mxu0 %v3940
    %4052 = vmatprep.mubr.bf16.mxu0 %v3716
    %4053 = vmatmul.mubr.bf16.gmra.mxu0 %v3715
    %v4054 = vpop.f32.mrf.mxu0
    %v4055 = vadd.f32 %v4015, %v4054
    %v4056 = vpop.f32.mrf.mxu0
    %v4057 = vpop.f32.mrf.mxu0
    %v4058 = vpop.f32.mrf.mxu0
    %4059 = vdwg.mxu0
    %v4060 = vmax.f32 %v4055, 0.0
    %v4061 = vpack.c.bf16 %v4060, %v4060
    %v4062 = vld [vmem:[#allocation7] sm:$0xf]
    %v4063 = vld [vmem:[#allocation7 + $0x4] sm:$0xf]
    %v4064 = vld [vmem:[#allocation7 + $0x8] sm:$0xf]
    %v4065 = vld [vmem:[#allocation7 + $0xc] sm:$0xf]
    %v4066 = vld [vmem:[#allocation7 + $0x10] sm:$0xf]
    %v4067 = vld [vmem:[#allocation7 + $0x14] sm:$0xf]
    %v4068 = vld [vmem:[#allocation7 + $0x18] sm:$0xf]
    %v4069 = vld [vmem:[#allocation7 + $0x1c] sm:$0xf]
    %v4070 = vld [vmem:[#allocation7 + $0x20] sm:$0xf]
    %v4071 = vld [vmem:[#allocation7 + $0x24] sm:$0xf]
    %v4072 = vld [vmem:[#allocation7 + $0x28] sm:$0xf]
    %v4073 = vld [vmem:[#allocation7 + $0x2c] sm:$0xf]
    %v4074 = vld [vmem:[#allocation7 + $0x30] sm:$0xf]
    %v4075 = vld [vmem:[#allocation7 + $0x34] sm:$0xf]
    %v4076 = vld [vmem:[#allocation7 + $0x38] sm:$0xf]
    %v4077 = vld [vmem:[#allocation7 + $0x3c] sm:$0xf]
    %v4078 = vld [vmem:[%s10] sm:$0x1]
    %v4080 = vlaneseq
    %v4081 = vshrl.u32 %v4080, 7
    %v4082 = vsub.s32 0, %v4081
    %v4083 = vrot.slane %v4078, %v4082
    %v4101 = vunpack.c.l.b16 %v4062
    %v4102 = vunpack.c.l.b16 %v4063
    %v4103 = vunpack.c.l.b16 %v4064
    %v4104 = vunpack.c.l.b16 %v4065
    %v4105 = vunpack.c.l.b16 %v4066
    %v4106 = vunpack.c.l.b16 %v4067
    %v4107 = vunpack.c.l.b16 %v4068
    %v4108 = vunpack.c.l.b16 %v4069
    %v4109 = vunpack.c.l.b16 %v4070
    %v4110 = vunpack.c.l.b16 %v4071
    %v4111 = vunpack.c.l.b16 %v4072
    %v4112 = vunpack.c.l.b16 %v4073
    %v4113 = vunpack.c.l.b16 %v4074
    %v4114 = vunpack.c.l.b16 %v4075
    %v4115 = vunpack.c.l.b16 %v4076
    %v4116 = vunpack.c.l.b16 %v4077
    %v4117 = vpack.c.b16 %v4102, %v4101
    %v4118 = vpack.c.b16 %v4104, %v4103
    %v4119 = vpack.c.b16 %v4106, %v4105
    %v4120 = vpack.c.b16 %v4108, %v4107
    %v4121 = vpack.c.b16 %v4110, %v4109
    %v4122 = vpack.c.b16 %v4112, %v4111
    %v4123 = vpack.c.b16 %v4114, %v4113
    %v4124 = vpack.c.b16 %v4116, %v4115
    %4133 = vmatprep.subr.bf16.mxu0 0
    %4134 = vmatpush1.bf16.msra.mxu0 %v4124
    %4135 = vmatprep.subr.bf16.mxu0 0
    %4136 = vmatpush1.bf16.msra.mxu0 %v4123
    %4137 = vmatprep.subr.bf16.mxu0 0
    %4138 = vmatpush1.bf16.msra.mxu0 %v4122
    %4139 = vmatprep.subr.bf16.mxu0 0
    %4140 = vmatpush1.bf16.msra.mxu0 %v4121
    %4141 = vmatprep.subr.bf16.mxu0 0
    %4142 = vmatpush1.bf16.msra.mxu0 %v4120
    %4143 = vmatprep.subr.bf16.mxu0 0
    %4144 = vmatpush1.bf16.msra.mxu0 %v4119
    %4145 = vmatprep.subr.bf16.mxu0 0
    %4146 = vmatpush1.bf16.msra.mxu0 %v4118
    %4147 = vmatprep.subr.bf16.mxu0 0
    %4148 = vmatpush1.bf16.msra.mxu0 %v4117
    %4149 = vmatprep.subr.bf16.mxu0 0
    %4150 = vmatpush2.bf16.msra.mxu0 0
    %4151 = vmatprep.subr.bf16.mxu0 0
    %4152 = vmatpush2.bf16.msra.mxu0 0
    %4153 = vmatprep.subr.bf16.mxu0 0
    %4154 = vmatpush2.bf16.msra.mxu0 0
    %4155 = vmatprep.subr.bf16.mxu0 0
    %4156 = vmatpush2.bf16.msra.mxu0 0
    %4157 = vmatprep.subr.bf16.mxu0 0
    %4158 = vmatpush2.bf16.msra.mxu0 0
    %4159 = vmatprep.subr.bf16.mxu0 0
    %4160 = vmatpush2.bf16.msra.mxu0 0
    %4161 = vmatprep.subr.bf16.mxu0 0
    %4162 = vmatpush2.bf16.msra.mxu0 0
    %4163 = vmatprep.subr.bf16.mxu0 0
    %4164 = vmatpush2.bf16.msra.mxu0 0
    %4165 = vmatprep.mubr.bf16.mxu0 0
    %4166 = vmatmul.mubr.bf16.gmra.mxu0 %v4061
    %v4167 = vpop.f32.mrf.mxu0
    %v4168 = vadd.f32 %v4083, %v4167
    %v4169 = vpop.f32.mrf.mxu0
    %v4170 = vpop.f32.mrf.mxu0
    %v4171 = vpop.f32.mrf.mxu0
    %4172 = vdwg.mxu0
    %v4173 = vmax.f32 %v4168, 0.0
    %v4174 = vld [vmem:[%s11] sm:$0x1]
    %v4176 = vlaneseq
    %v4177 = vshrl.u32 %v4176, 7
    %v4178 = vsub.s32 0, %v4177
    %v4179 = vrot.slane %v4174, %v4178
    %v4181 = vmul.f32 %v4173, %v4179
    %4182 = vadd.xlane.f32.xlu0 %v4181
    %v4183 = vpop.xlane.xlu0 %4182
    %v4184 = vxor.u32 %v4183, 2147483648
    %v4185 = vmul.f32 %v4184, 1.442695
    %v4186 = vpow.pop %v4185
    %v4187 = vadd.f32 %v4186, 1.0
    %v4188 = vrcp.pop %v4187
    %v4189 = vmul.f32 1.0, %v4188
    %4190 = vst [vmem:[%s12] sm:$0xff] %v4189
    // Predicated region
    $region66: #{matchnet_forward.1} parent=1 // pred_check
      _
    $region67: #{matchnet_forward.1} parent=1 // pred_check_branch
      %4192 = sbr.rel (0) target = $region69
    $region68: #{matchnet_forward.1} parent=1 // pred_region
      _
    $region69: #{matchnet_forward.1} parent=1 // pred_fallthru
      _
    // Predicated region
    $region70: #{matchnet_forward.1} parent=1 // pred_check
      _
    $region71: #{matchnet_forward.1} parent=1 // pred_check_branch
      %4194 = sbr.rel (0) target = $region73
    $region72: #{matchnet_forward.1} parent=1 // pred_region
      _
    $region73: #{matchnet_forward.1} parent=1 // pred_fallthru
      _
    %4195 = vsyncpa [#allocation3], 1
    %4196 = vsyncpa [#allocation5], 1
    %4197 = vsyncpa [#allocation8], 1

</llo_original>
